<compile_context>
chip_gen: v6e
topology: v6e:2x2x1
jax: 0.10.0
libtpu: 0.0.40
codegen_flags: <defaults>
</compile_context>

<pallas_src>
import functools

import jax
import jax.numpy as jnp
from jax import lax
from jax.experimental import pallas as pl
from jax.experimental.pallas import tpu as pltpu


def _gates_kernel(xh_ref, c_ref, w_ref, b_ref, wci_ref, wcf_ref, wco_ref,
                  ch_ref, cc_ref, *, kh, kw, H, W, Ch):
    """Fused ConvLSTM gate computation for one batch element (grid over batch).

    xh_ref : (1, H+2ph, W+2pw, Cin+Ch) f32   zero-padded [x | h]  (NHWC)
    c_ref  : (1, H, W, Ch)             f32   cell state
    w_ref  : (kh*kw, Cin+Ch, 4*Ch)     bf16  fused gate weights (i, f, g, o)
    b_ref  : (1, 4*Ch)                 f32   fused input-conv biases
    wci/wcf/wco_ref : (H, W, Ch)       f32   peephole weights
    ch_ref, cc_ref  : (1, H, W, Ch)    f32   outputs
    """
    xh = xh_ref[0]                       # (Hp, Wp, Cin+Ch)
    cinch = xh.shape[-1]
    HW = H * W
    w = w_ref[...]                       # (kh*kw, Cin+Ch, 4*Ch) bf16

    # "same" cross-correlation, stride 1: one fused MXU matmul per tap.
    acc = None
    for dh in range(kh):
        for dw in range(kw):
            patch = xh[dh:dh + H, dw:dw + W, :].reshape(HW, cinch)
            d = jnp.dot(patch.astype(jnp.bfloat16), w[dh * kw + dw],
                        preferred_element_type=jnp.float32)
            acc = d if acc is None else acc + d
    acc = acc + b_ref[...]               # single fused bias add (h-convs have no bias)

    c = c_ref[0].reshape(HW, Ch)
    wci = wci_ref[...].reshape(HW, Ch)
    wcf = wcf_ref[...].reshape(HW, Ch)
    wco = wco_ref[...].reshape(HW, Ch)

    # Gate order in the fused output columns: i, f, g(=c), o.
    zi = acc[:, 0 * Ch:1 * Ch]
    zf = acc[:, 1 * Ch:2 * Ch]
    zg = acc[:, 2 * Ch:3 * Ch]
    zo = acc[:, 3 * Ch:4 * Ch]

    ci = jax.nn.sigmoid(zi + c * wci)
    cf = jax.nn.sigmoid(zf + c * wcf)
    cc = cf * c + ci * jnp.tanh(zg)
    co = jax.nn.sigmoid(zo + cc * wco)
    ch = co * jnp.tanh(cc)

    ch_ref[0] = ch.reshape(H, W, Ch)
    cc_ref[0] = cc.reshape(H, W, Ch)


def _pool_bn_kernel(p00_ref, p01_ref, p10_ref, p11_ref, gamma_ref, beta_ref,
                    out_ref, *, eps):
    """MaxPool2d(2,2) (pairwise maxima of four shifted views) + BatchNorm2d (train).

    p**_ref   : (N, Ho, Wo, Ch)  the four members of each 2x2 window
    gamma/beta: (1, Ch)
    out_ref   : (N, Ho, Wo, Ch)
    """
    pooled = jnp.maximum(jnp.maximum(p00_ref[...], p01_ref[...]),
                         jnp.maximum(p10_ref[...], p11_ref[...]))
    N, Ho, Wo, Ch = pooled.shape
    flat = pooled.reshape(N * Ho * Wo, Ch)

    # Training-mode BatchNorm: biased batch statistics, single fused pass.
    mean = jnp.mean(flat, axis=0, keepdims=True)
    meansq = jnp.mean(flat * flat, axis=0, keepdims=True)
    var = meansq - mean * mean
    xhat = (flat - mean) * lax.rsqrt(var + eps)
    out = gamma_ref[...] * xhat + beta_ref[...]
    out_ref[...] = out.reshape(N, Ho, Wo, Ch)


def conv_lstm_cell_forward(x, h, c, params, *, kh=3, kw=3, kph=2, kpw=2, sh=2, sw=2):
    """x, h, c are NCHW (PyTorch convention). Returns (ch_pool, ch, cc) in NCHW."""
    N, Cin, H, W = x.shape
    Ch = h.shape[1]
    ph, pw = (kh - 1) // 2, (kw - 1) // 2
    Hp, Wp = H + 2 * ph, W + 2 * pw
    cinch = Cin + Ch

    # Boundary glue (kept to honour the PyTorch NCHW interface; an NHWC end-to-end
    # model would skip these transposes / pads entirely).
    to_nhwc = lambda t: jnp.transpose(t, (0, 2, 3, 1)).astype(jnp.float32)
    to_nchw = lambda t: jnp.transpose(t, (0, 3, 1, 2))
    x_nhwc, h_nhwc, c_nhwc = to_nhwc(x), to_nhwc(h), to_nhwc(c)

    # Fused, zero-padded conv input: channels = [x | h].
    xh = jnp.concatenate([x_nhwc, h_nhwc], axis=-1)
    xhp = jnp.pad(xh, ((0, 0), (ph, ph), (pw, pw), (0, 0)))

    # Fused weights (kh*kw, Cin+Ch, 4*Ch), gate order i,f,g,o along the output dim.
    # (In a real model these would be packed once at parameter-load time.)
    wx = jnp.transpose(params["Wx"], (1, 2, 0, 3)).reshape(kh * kw, Cin, 4 * Ch)
    wh = jnp.transpose(params["Wh"], (1, 2, 0, 3)).reshape(kh * kw, Ch, 4 * Ch)
    w_fused = jnp.concatenate([wx, wh], axis=1).astype(jnp.bfloat16)
    b_fused = params["bx"].reshape(1, 4 * Ch).astype(jnp.float32)

    ch_nhwc, cc_nhwc = pl.pallas_call(
        functools.partial(_gates_kernel, kh=kh, kw=kw, H=H, W=W, Ch=Ch),
        grid=(N,),
        in_specs=[
            pl.BlockSpec((1, Hp, Wp, cinch), lambda n: (n, 0, 0, 0)),       # xh pad
            pl.BlockSpec((1, H, W, Ch), lambda n: (n, 0, 0, 0)),            # c
            pl.BlockSpec((kh * kw, cinch, 4 * Ch), lambda n: (0, 0, 0)),    # W fused
            pl.BlockSpec((1, 4 * Ch), lambda n: (0, 0)),                    # bias
            pl.BlockSpec((H, W, Ch), lambda n: (0, 0, 0)),                  # Wci
            pl.BlockSpec((H, W, Ch), lambda n: (0, 0, 0)),                  # Wcf
            pl.BlockSpec((H, W, Ch), lambda n: (0, 0, 0)),                  # Wco
        ],
        out_specs=(pl.BlockSpec((1, H, W, Ch), lambda n: (n, 0, 0, 0)),
                   pl.BlockSpec((1, H, W, Ch), lambda n: (n, 0, 0, 0))),
        out_shape=(jax.ShapeDtypeStruct((N, H, W, Ch), jnp.float32),
                   jax.ShapeDtypeStruct((N, H, W, Ch), jnp.float32)),
        compiler_params=pltpu.CompilerParams(dimension_semantics=("parallel",)),
    )(xhp, c_nhwc, w_fused, b_fused, params["Wci"], params["Wcf"], params["Wco"])

    # MaxPool2d(kernel=(2,2), stride=(2,2), padding=(0,0)): extract the four window
    # members as strided slices (tiny XLA glue), then max + BatchNorm in Pallas.
    assert kph == sh and kpw == sw and kph == 2 and kpw == 2
    assert H % sh == 0 and W % sw == 0
    Ho, Wo = H // sh, W // sw
    p00 = ch_nhwc[:, 0::sh, 0::sw, :]
    p01 = ch_nhwc[:, 0::sh, 1::sw, :]
    p10 = ch_nhwc[:, 1::sh, 0::sw, :]
    p11 = ch_nhwc[:, 1::sh, 1::sw, :]

    vmem = lambda: pl.BlockSpec(memory_space=pltpu.MemorySpace.VMEM)
    ch_pool_nhwc = pl.pallas_call(
        functools.partial(_pool_bn_kernel, eps=1e-5),
        out_shape=jax.ShapeDtypeStruct((N, Ho, Wo, Ch), jnp.float32),
        in_specs=[vmem() for _ in range(6)],
        out_specs=vmem(),
    )(p00, p01, p10, p11,
      params["gamma"].reshape(1, Ch).astype(jnp.float32),
      params["beta"].reshape(1, Ch).astype(jnp.float32))

    return to_nchw(ch_pool_nhwc), to_nchw(ch_nhwc), to_nchw(cc_nhwc)


def reference_forward(x, h, c, p, kh, kw, kph, kpw, sh, sw, eps=1e-5,
                      conv_dtype=jnp.float32):
    """Pure-JAX reference (no Pallas). conv_dtype controls the matmul-operand
    precision so the kernel's bf16-MXU path can be checked tightly."""
    N, Cin, H, W = x.shape
    Ch = h.shape[1]
    ph, pw = (kh - 1) // 2, (kw - 1) // 2
    t_in = lambda a: jnp.transpose(a, (0, 2, 3, 1)).astype(jnp.float32)
    t_out = lambda a: jnp.transpose(a, (0, 3, 1, 2))
    xn, hn, cn = t_in(x), t_in(h), t_in(c)

    def conv(inp, w):
        whwio = w.reshape(kh, kw, inp.shape[-1], Ch).astype(conv_dtype)
        return lax.conv_general_dilated(
            inp.astype(conv_dtype), whwio, (1, 1), [(ph, ph), (pw, pw)],
            dimension_numbers=("NHWC", "HWIO", "NHWC"),
            preferred_element_type=jnp.float32)

    Wx, Wh, bx = p["Wx"], p["Wh"], p["bx"]
    xi = conv(xn, Wx[0]) + bx[0]
    xf = conv(xn, Wx[1]) + bx[1]
    xg = conv(xn, Wx[2]) + bx[2]
    xo = conv(xn, Wx[3]) + bx[3]
    hi, hf, hg, ho = (conv(hn, Wh[i]) for i in range(4))

    ci = jax.nn.sigmoid(xi + hi + cn * p["Wci"][None])
    cf = jax.nn.sigmoid(xf + hf + cn * p["Wcf"][None])
    cc = cf * cn + ci * jnp.tanh(xg + hg)
    co = jax.nn.sigmoid(xo + ho + cc * p["Wco"][None])
    ch = co * jnp.tanh(cc)

    pooled = lax.reduce_window(ch, -jnp.inf, lax.max,
                               (1, kph, kpw, 1), (1, sh, sw, 1),
                               [(0, 0), (0, 0), (0, 0), (0, 0)])
    mean = jnp.mean(pooled, axis=(0, 1, 2), keepdims=True)
    var = jnp.mean((pooled - mean) ** 2, axis=(0, 1, 2), keepdims=True)
    chp = (p["gamma"].reshape(1, 1, 1, Ch) * (pooled - mean) * lax.rsqrt(var + eps)
           + p["beta"].reshape(1, 1, 1, Ch))
    return t_out(chp), t_out(ch), t_out(cc)


if __name__ == "__main__":
    # Small shapes consistent with the module's forward.
    N, Cin, Ch, H, W = 2, 4, 32, 16, 16
    KH, KW = 3, 3                 # kernel_size
    KPH, KPW = 2, 2               # kernel_size_pool -> padding_pool = (0, 0)
    SPH, SPW = 2, 2               # kernel_stride_pool

    key = jax.random.PRNGKey(0)
    ks = jax.random.split(key, 12)

    # NOTE: the PyTorch module initialises Wci/Wcf/Wco to zeros in init_hidden();
    # small random values are used so the peephole terms are actually exercised.
    # TODO(synk): nn.Dropout is constructed in __init__ but never used in forward;
    # BatchNorm running-stat updates (training side effects) are not carried.
    params = {
        "Wx": jax.random.normal(ks[0], (4, KH * KW, Cin, Ch), jnp.float32) * 0.15,
        "Wh": jax.random.normal(ks[1], (4, KH * KW, Ch, Ch), jnp.float32) * 0.05,
        "bx": jax.random.normal(ks[2], (4, Ch), jnp.float32) * 0.10,
        "Wci": jax.random.normal(ks[3], (H, W, Ch), jnp.float32) * 0.10,
        "Wcf": jax.random.normal(ks[4], (H, W, Ch), jnp.float32) * 0.10,
        "Wco": jax.random.normal(ks[5], (H, W, Ch), jnp.float32) * 0.10,
        "gamma": 1.0 + 0.1 * jax.random.normal(ks[6], (Ch,), jnp.float32),
        "beta": 0.1 * jax.random.normal(ks[7], (Ch,), jnp.float32),
    }

    x = jax.random.normal(ks[8], (N, Cin, H, W), jnp.float32)
    h = 0.5 * jax.random.normal(ks[9], (N, Ch, H, W), jnp.float32)
    c = 0.5 * jax.random.normal(ks[10], (N, Ch, H, W), jnp.float32)

    fwd = jax.jit(functools.partial(conv_lstm_cell_forward,
                                    kh=KH, kw=KW, kph=KPH, kpw=KPW, sh=SPH, sw=SPW))
    ch_pool, ch_out, cc_out = jax.block_until_ready(fwd(x, h, c, params))

    assert ch_pool.shape == (N, Ch, H // SPH, W // SPW)
    assert ch_out.shape == (N, Ch, H, W) and cc_out.shape == (N, Ch, H, W)

    # Tight check vs. a precision-matched reference (bf16 matmul operands, f32
    # accumulation) -- catches any layout / indexing bug; residual difference is
    # only f32 summation-order noise.
    ref_bf = reference_forward(x, h, c, params, KH, KW, KPH, KPW, SPH, SPW,
                               conv_dtype=jnp.bfloat16)
    for got, ref in zip((ch_pool, ch_out, cc_out), ref_bf):
        assert got.shape == ref.shape
        assert float(jnp.max(jnp.abs(got - ref))) < 1e-3

    # Loose sanity check vs. the all-f32 reference (bf16 MXU operands introduce
    # ~1e-2 absolute error on the pre-activations).
    ref_f32 = reference_forward(x, h, c, params, KH, KW, KPH, KPW, SPH, SPW,
                                conv_dtype=jnp.float32)
    for got, ref in zip((ch_out, cc_out), (ref_f32[1], ref_f32[2])):
        assert float(jnp.max(jnp.abs(got - ref))) < 5e-2

    print("KERNEL_OK")
</pallas_src>

<mosaic_0001>
module attributes {stable_mosaic.version = 11 : i64} {
  func.func @_gates_kernel(%arg0: i32, %arg1: memref<1x18x18x36xf32, #tpu.memory_space<vmem>>, %arg2: memref<1x16x16x32xf32, #tpu.memory_space<vmem>>, %arg3: memref<9x36x128xbf16, #tpu.memory_space<vmem>>, %arg4: memref<1x128xf32, #tpu.memory_space<vmem>>, %arg5: memref<16x16x32xf32, #tpu.memory_space<vmem>>, %arg6: memref<16x16x32xf32, #tpu.memory_space<vmem>>, %arg7: memref<16x16x32xf32, #tpu.memory_space<vmem>>, %arg8: memref<1x16x16x32xf32, #tpu.memory_space<vmem>>, %arg9: memref<1x16x16x32xf32, #tpu.memory_space<vmem>>) attributes {dimension_semantics = [#tpu.dimension_semantics<parallel>], iteration_bounds = array<i64: 2>, scalar_prefetch = 0 : i64, scratch_operands = 0 : i64, tpu.core_type = #tpu.core_type<tc>, window_params = [{transform_indices = @transform_0, window_bounds = array<i64: 1, 18, 18, 36>}, {transform_indices = @transform_1, window_bounds = array<i64: 1, 16, 16, 32>}, {pipeline_mode = #tpu.pipeline_mode<synchronous>, transform_indices = @transform_2, window_bounds = array<i64: 9, 36, 128>}, {pipeline_mode = #tpu.pipeline_mode<synchronous>, transform_indices = @transform_3, window_bounds = array<i64: 1, 128>}, {pipeline_mode = #tpu.pipeline_mode<synchronous>, transform_indices = @transform_4, window_bounds = array<i64: 16, 16, 32>}, {pipeline_mode = #tpu.pipeline_mode<synchronous>, transform_indices = @transform_5, window_bounds = array<i64: 16, 16, 32>}, {pipeline_mode = #tpu.pipeline_mode<synchronous>, transform_indices = @transform_6, window_bounds = array<i64: 16, 16, 32>}, {transform_indices = @transform_7, window_bounds = array<i64: 1, 16, 16, 32>}, {transform_indices = @transform_8, window_bounds = array<i64: 1, 16, 16, 32>}]} {
    %c0 = arith.constant 0 : index
    %c0_0 = arith.constant 0 : index
    %c0_1 = arith.constant 0 : index
    %c0_2 = arith.constant 0 : index
    %0 = vector.load %arg1[%c0, %c0_0, %c0_1, %c0_2] : memref<1x18x18x36xf32, #tpu.memory_space<vmem>>, vector<1x18x18x36xf32>
    %1 = vector.shape_cast %0 : vector<1x18x18x36xf32> to vector<18x18x36xf32>
    %c0_3 = arith.constant 0 : index
    %c0_4 = arith.constant 0 : index
    %c0_5 = arith.constant 0 : index
    %2 = vector.load %arg3[%c0_3, %c0_4, %c0_5] : memref<9x36x128xbf16, #tpu.memory_space<vmem>>, vector<9x36x128xbf16>
    %3 = vector.extract_strided_slice %1 {offsets = [0, 0, 0], sizes = [16, 16, 36], strides = [1, 1, 1]} : vector<18x18x36xf32> to vector<16x16x36xf32>
    %4 = vector.shape_cast %3 : vector<16x16x36xf32> to vector<256x36xf32>
    %5 = arith.truncf %4 : vector<256x36xf32> to vector<256x36xbf16>
    %6 = vector.extract_strided_slice %2 {offsets = [0, 0, 0], sizes = [1, 36, 128], strides = [1, 1, 1]} : vector<9x36x128xbf16> to vector<1x36x128xbf16>
    %7 = vector.shape_cast %6 : vector<1x36x128xbf16> to vector<36x128xbf16>
    %cst = arith.constant dense<0.000000e+00> : vector<256x128xf32>
    %8 = tpu.matmul %5, %7, %cst {dimension_numbers = #tpu.dot_dimension_numbers<[1], [0], [0], [1], [0, 0, 1, 1], [], []>} : vector<256x36xbf16>, vector<36x128xbf16>, vector<256x128xf32> -> vector<256x128xf32>
    %9 = vector.extract_strided_slice %1 {offsets = [0, 1, 0], sizes = [16, 16, 36], strides = [1, 1, 1]} : vector<18x18x36xf32> to vector<16x16x36xf32>
    %10 = vector.shape_cast %9 : vector<16x16x36xf32> to vector<256x36xf32>
    %11 = arith.truncf %10 : vector<256x36xf32> to vector<256x36xbf16>
    %12 = vector.extract_strided_slice %2 {offsets = [1, 0, 0], sizes = [1, 36, 128], strides = [1, 1, 1]} : vector<9x36x128xbf16> to vector<1x36x128xbf16>
    %13 = vector.shape_cast %12 : vector<1x36x128xbf16> to vector<36x128xbf16>
    %cst_6 = arith.constant dense<0.000000e+00> : vector<256x128xf32>
    %14 = tpu.matmul %11, %13, %cst_6 {dimension_numbers = #tpu.dot_dimension_numbers<[1], [0], [0], [1], [0, 0, 1, 1], [], []>} : vector<256x36xbf16>, vector<36x128xbf16>, vector<256x128xf32> -> vector<256x128xf32>
    %15 = arith.addf %8, %14 : vector<256x128xf32>
    %16 = vector.extract_strided_slice %1 {offsets = [0, 2, 0], sizes = [16, 16, 36], strides = [1, 1, 1]} : vector<18x18x36xf32> to vector<16x16x36xf32>
    %17 = vector.shape_cast %16 : vector<16x16x36xf32> to vector<256x36xf32>
    %18 = arith.truncf %17 : vector<256x36xf32> to vector<256x36xbf16>
    %19 = vector.extract_strided_slice %2 {offsets = [2, 0, 0], sizes = [1, 36, 128], strides = [1, 1, 1]} : vector<9x36x128xbf16> to vector<1x36x128xbf16>
    %20 = vector.shape_cast %19 : vector<1x36x128xbf16> to vector<36x128xbf16>
    %cst_7 = arith.constant dense<0.000000e+00> : vector<256x128xf32>
    %21 = tpu.matmul %18, %20, %cst_7 {dimension_numbers = #tpu.dot_dimension_numbers<[1], [0], [0], [1], [0, 0, 1, 1], [], []>} : vector<256x36xbf16>, vector<36x128xbf16>, vector<256x128xf32> -> vector<256x128xf32>
    %22 = arith.addf %15, %21 : vector<256x128xf32>
    %23 = vector.extract_strided_slice %1 {offsets = [1, 0, 0], sizes = [16, 16, 36], strides = [1, 1, 1]} : vector<18x18x36xf32> to vector<16x16x36xf32>
    %24 = vector.shape_cast %23 : vector<16x16x36xf32> to vector<256x36xf32>
    %25 = arith.truncf %24 : vector<256x36xf32> to vector<256x36xbf16>
    %26 = vector.extract_strided_slice %2 {offsets = [3, 0, 0], sizes = [1, 36, 128], strides = [1, 1, 1]} : vector<9x36x128xbf16> to vector<1x36x128xbf16>
    %27 = vector.shape_cast %26 : vector<1x36x128xbf16> to vector<36x128xbf16>
    %cst_8 = arith.constant dense<0.000000e+00> : vector<256x128xf32>
    %28 = tpu.matmul %25, %27, %cst_8 {dimension_numbers = #tpu.dot_dimension_numbers<[1], [0], [0], [1], [0, 0, 1, 1], [], []>} : vector<256x36xbf16>, vector<36x128xbf16>, vector<256x128xf32> -> vector<256x128xf32>
    %29 = arith.addf %22, %28 : vector<256x128xf32>
    %30 = vector.extract_strided_slice %1 {offsets = [1, 1, 0], sizes = [16, 16, 36], strides = [1, 1, 1]} : vector<18x18x36xf32> to vector<16x16x36xf32>
    %31 = vector.shape_cast %30 : vector<16x16x36xf32> to vector<256x36xf32>
    %32 = arith.truncf %31 : vector<256x36xf32> to vector<256x36xbf16>
    %33 = vector.extract_strided_slice %2 {offsets = [4, 0, 0], sizes = [1, 36, 128], strides = [1, 1, 1]} : vector<9x36x128xbf16> to vector<1x36x128xbf16>
    %34 = vector.shape_cast %33 : vector<1x36x128xbf16> to vector<36x128xbf16>
    %cst_9 = arith.constant dense<0.000000e+00> : vector<256x128xf32>
    %35 = tpu.matmul %32, %34, %cst_9 {dimension_numbers = #tpu.dot_dimension_numbers<[1], [0], [0], [1], [0, 0, 1, 1], [], []>} : vector<256x36xbf16>, vector<36x128xbf16>, vector<256x128xf32> -> vector<256x128xf32>
    %36 = arith.addf %29, %35 : vector<256x128xf32>
    %37 = vector.extract_strided_slice %1 {offsets = [1, 2, 0], sizes = [16, 16, 36], strides = [1, 1, 1]} : vector<18x18x36xf32> to vector<16x16x36xf32>
    %38 = vector.shape_cast %37 : vector<16x16x36xf32> to vector<256x36xf32>
    %39 = arith.truncf %38 : vector<256x36xf32> to vector<256x36xbf16>
    %40 = vector.extract_strided_slice %2 {offsets = [5, 0, 0], sizes = [1, 36, 128], strides = [1, 1, 1]} : vector<9x36x128xbf16> to vector<1x36x128xbf16>
    %41 = vector.shape_cast %40 : vector<1x36x128xbf16> to vector<36x128xbf16>
    %cst_10 = arith.constant dense<0.000000e+00> : vector<256x128xf32>
    %42 = tpu.matmul %39, %41, %cst_10 {dimension_numbers = #tpu.dot_dimension_numbers<[1], [0], [0], [1], [0, 0, 1, 1], [], []>} : vector<256x36xbf16>, vector<36x128xbf16>, vector<256x128xf32> -> vector<256x128xf32>
    %43 = arith.addf %36, %42 : vector<256x128xf32>
    %44 = vector.extract_strided_slice %1 {offsets = [2, 0, 0], sizes = [16, 16, 36], strides = [1, 1, 1]} : vector<18x18x36xf32> to vector<16x16x36xf32>
    %45 = vector.shape_cast %44 : vector<16x16x36xf32> to vector<256x36xf32>
    %46 = arith.truncf %45 : vector<256x36xf32> to vector<256x36xbf16>
    %47 = vector.extract_strided_slice %2 {offsets = [6, 0, 0], sizes = [1, 36, 128], strides = [1, 1, 1]} : vector<9x36x128xbf16> to vector<1x36x128xbf16>
    %48 = vector.shape_cast %47 : vector<1x36x128xbf16> to vector<36x128xbf16>
    %cst_11 = arith.constant dense<0.000000e+00> : vector<256x128xf32>
    %49 = tpu.matmul %46, %48, %cst_11 {dimension_numbers = #tpu.dot_dimension_numbers<[1], [0], [0], [1], [0, 0, 1, 1], [], []>} : vector<256x36xbf16>, vector<36x128xbf16>, vector<256x128xf32> -> vector<256x128xf32>
    %50 = arith.addf %43, %49 : vector<256x128xf32>
    %51 = vector.extract_strided_slice %1 {offsets = [2, 1, 0], sizes = [16, 16, 36], strides = [1, 1, 1]} : vector<18x18x36xf32> to vector<16x16x36xf32>
    %52 = vector.shape_cast %51 : vector<16x16x36xf32> to vector<256x36xf32>
    %53 = arith.truncf %52 : vector<256x36xf32> to vector<256x36xbf16>
    %54 = vector.extract_strided_slice %2 {offsets = [7, 0, 0], sizes = [1, 36, 128], strides = [1, 1, 1]} : vector<9x36x128xbf16> to vector<1x36x128xbf16>
    %55 = vector.shape_cast %54 : vector<1x36x128xbf16> to vector<36x128xbf16>
    %cst_12 = arith.constant dense<0.000000e+00> : vector<256x128xf32>
    %56 = tpu.matmul %53, %55, %cst_12 {dimension_numbers = #tpu.dot_dimension_numbers<[1], [0], [0], [1], [0, 0, 1, 1], [], []>} : vector<256x36xbf16>, vector<36x128xbf16>, vector<256x128xf32> -> vector<256x128xf32>
    %57 = arith.addf %50, %56 : vector<256x128xf32>
    %58 = vector.extract_strided_slice %1 {offsets = [2, 2, 0], sizes = [16, 16, 36], strides = [1, 1, 1]} : vector<18x18x36xf32> to vector<16x16x36xf32>
    %59 = vector.shape_cast %58 : vector<16x16x36xf32> to vector<256x36xf32>
    %60 = arith.truncf %59 : vector<256x36xf32> to vector<256x36xbf16>
    %61 = vector.extract_strided_slice %2 {offsets = [8, 0, 0], sizes = [1, 36, 128], strides = [1, 1, 1]} : vector<9x36x128xbf16> to vector<1x36x128xbf16>
    %62 = vector.shape_cast %61 : vector<1x36x128xbf16> to vector<36x128xbf16>
    %cst_13 = arith.constant dense<0.000000e+00> : vector<256x128xf32>
    %63 = tpu.matmul %60, %62, %cst_13 {dimension_numbers = #tpu.dot_dimension_numbers<[1], [0], [0], [1], [0, 0, 1, 1], [], []>} : vector<256x36xbf16>, vector<36x128xbf16>, vector<256x128xf32> -> vector<256x128xf32>
    %64 = arith.addf %57, %63 : vector<256x128xf32>
    %c0_14 = arith.constant 0 : index
    %c0_15 = arith.constant 0 : index
    %65 = vector.load %arg4[%c0_14, %c0_15] : memref<1x128xf32, #tpu.memory_space<vmem>>, vector<1x128xf32>
    %66 = vector.broadcast %65 : vector<1x128xf32> to vector<256x128xf32>
    %67 = arith.addf %64, %66 : vector<256x128xf32>
    %c0_16 = arith.constant 0 : index
    %c0_17 = arith.constant 0 : index
    %c0_18 = arith.constant 0 : index
    %c0_19 = arith.constant 0 : index
    %68 = vector.load %arg2[%c0_16, %c0_17, %c0_18, %c0_19] : memref<1x16x16x32xf32, #tpu.memory_space<vmem>>, vector<1x16x16x32xf32>
    %69 = vector.shape_cast %68 : vector<1x16x16x32xf32> to vector<16x16x32xf32>
    %70 = vector.shape_cast %69 : vector<16x16x32xf32> to vector<256x32xf32>
    %c0_20 = arith.constant 0 : index
    %c0_21 = arith.constant 0 : index
    %c0_22 = arith.constant 0 : index
    %71 = vector.load %arg5[%c0_20, %c0_21, %c0_22] : memref<16x16x32xf32, #tpu.memory_space<vmem>>, vector<16x16x32xf32>
    %72 = vector.shape_cast %71 : vector<16x16x32xf32> to vector<256x32xf32>
    %c0_23 = arith.constant 0 : index
    %c0_24 = arith.constant 0 : index
    %c0_25 = arith.constant 0 : index
    %73 = vector.load %arg6[%c0_23, %c0_24, %c0_25] : memref<16x16x32xf32, #tpu.memory_space<vmem>>, vector<16x16x32xf32>
    %74 = vector.shape_cast %73 : vector<16x16x32xf32> to vector<256x32xf32>
    %c0_26 = arith.constant 0 : index
    %c0_27 = arith.constant 0 : index
    %c0_28 = arith.constant 0 : index
    %75 = vector.load %arg7[%c0_26, %c0_27, %c0_28] : memref<16x16x32xf32, #tpu.memory_space<vmem>>, vector<16x16x32xf32>
    %76 = vector.shape_cast %75 : vector<16x16x32xf32> to vector<256x32xf32>
    %77 = vector.extract_strided_slice %67 {offsets = [0, 0], sizes = [256, 32], strides = [1, 1]} : vector<256x128xf32> to vector<256x32xf32>
    %78 = vector.extract_strided_slice %67 {offsets = [0, 32], sizes = [256, 32], strides = [1, 1]} : vector<256x128xf32> to vector<256x32xf32>
    %79 = vector.extract_strided_slice %67 {offsets = [0, 64], sizes = [256, 32], strides = [1, 1]} : vector<256x128xf32> to vector<256x32xf32>
    %80 = vector.extract_strided_slice %67 {offsets = [0, 96], sizes = [256, 32], strides = [1, 1]} : vector<256x128xf32> to vector<256x32xf32>
    %81 = arith.mulf %70, %72 : vector<256x32xf32>
    %82 = arith.addf %77, %81 : vector<256x32xf32>
    %83 = arith.negf %82 : vector<256x32xf32>
    %84 = math.exp %83 : vector<256x32xf32>
    %cst_29 = arith.constant 1.000000e+00 : f32
    %85 = vector.broadcast %cst_29 : f32 to vector<256x32xf32>
    %86 = arith.addf %85, %84 : vector<256x32xf32>
    %87 = arith.divf %85, %86 : vector<256x32xf32>
    %88 = arith.mulf %70, %74 : vector<256x32xf32>
    %89 = arith.addf %78, %88 : vector<256x32xf32>
    %90 = arith.negf %89 : vector<256x32xf32>
    %91 = math.exp %90 : vector<256x32xf32>
    %cst_30 = arith.constant 1.000000e+00 : f32
    %92 = vector.broadcast %cst_30 : f32 to vector<256x32xf32>
    %93 = arith.addf %92, %91 : vector<256x32xf32>
    %94 = arith.divf %92, %93 : vector<256x32xf32>
    %95 = arith.mulf %94, %70 : vector<256x32xf32>
    %96 = math.tanh %79 : vector<256x32xf32>
    %97 = arith.mulf %87, %96 : vector<256x32xf32>
    %98 = arith.addf %95, %97 : vector<256x32xf32>
    %99 = arith.mulf %98, %76 : vector<256x32xf32>
    %100 = arith.addf %80, %99 : vector<256x32xf32>
    %101 = arith.negf %100 : vector<256x32xf32>
    %102 = math.exp %101 : vector<256x32xf32>
    %cst_31 = arith.constant 1.000000e+00 : f32
    %103 = vector.broadcast %cst_31 : f32 to vector<256x32xf32>
    %104 = arith.addf %103, %102 : vector<256x32xf32>
    %105 = arith.divf %103, %104 : vector<256x32xf32>
    %106 = math.tanh %98 : vector<256x32xf32>
    %107 = arith.mulf %105, %106 : vector<256x32xf32>
    %108 = vector.shape_cast %107 : vector<256x32xf32> to vector<16x16x32xf32>
    %c0_32 = arith.constant 0 : index
    %c0_33 = arith.constant 0 : index
    %c0_34 = arith.constant 0 : index
    %c0_35 = arith.constant 0 : index
    %109 = vector.load %arg8[%c0_32, %c0_33, %c0_34, %c0_35] : memref<1x16x16x32xf32, #tpu.memory_space<vmem>>, vector<1x16x16x32xf32>
    %110 = vector.shape_cast %109 : vector<1x16x16x32xf32> to vector<16x16x32xf32>
    %111 = vector.shape_cast %108 : vector<16x16x32xf32> to vector<1x16x16x32xf32>
    tpu.vector_store %arg8[%c0_32, %c0_33, %c0_34, %c0_35], %111 {strides = array<i32>} : memref<1x16x16x32xf32, #tpu.memory_space<vmem>>, vector<1x16x16x32xf32>,
    %112 = vector.shape_cast %98 : vector<256x32xf32> to vector<16x16x32xf32>
    %c0_36 = arith.constant 0 : index
    %c0_37 = arith.constant 0 : index
    %c0_38 = arith.constant 0 : index
    %c0_39 = arith.constant 0 : index
    %113 = vector.load %arg9[%c0_36, %c0_37, %c0_38, %c0_39] : memref<1x16x16x32xf32, #tpu.memory_space<vmem>>, vector<1x16x16x32xf32>
    %114 = vector.shape_cast %113 : vector<1x16x16x32xf32> to vector<16x16x32xf32>
    %115 = vector.shape_cast %112 : vector<16x16x32xf32> to vector<1x16x16x32xf32>
    tpu.vector_store %arg9[%c0_36, %c0_37, %c0_38, %c0_39], %115 {strides = array<i32>} : memref<1x16x16x32xf32, #tpu.memory_space<vmem>>, vector<1x16x16x32xf32>,
    return
  }
  func.func @transform_0(%arg0: i32) -> (i32, i32, i32, i32) {
    %c0_i32 = arith.constant 0 : i32
    %c0_i32_0 = arith.constant 0 : i32
    %c0_i32_1 = arith.constant 0 : i32
    %c0_i32_2 = arith.constant 0 : i32
    return %arg0, %c0_i32, %c0_i32_0, %c0_i32_1 : i32, i32, i32, i32
  }
  func.func @transform_1(%arg0: i32) -> (i32, i32, i32, i32) {
    %c0_i32 = arith.constant 0 : i32
    %c0_i32_0 = arith.constant 0 : i32
    %c0_i32_1 = arith.constant 0 : i32
    %c0_i32_2 = arith.constant 0 : i32
    return %arg0, %c0_i32, %c0_i32_0, %c0_i32_1 : i32, i32, i32, i32
  }
  func.func @transform_2(%arg0: i32) -> (i32, i32, i32) {
    %c0_i32 = arith.constant 0 : i32
    %c0_i32_0 = arith.constant 0 : i32
    %c0_i32_1 = arith.constant 0 : i32
    %c0_i32_2 = arith.constant 0 : i32
    return %c0_i32, %c0_i32_0, %c0_i32_1 : i32, i32, i32
  }
  func.func @transform_3(%arg0: i32) -> (i32, i32) {
    %c0_i32 = arith.constant 0 : i32
    %c0_i32_0 = arith.constant 0 : i32
    %c0_i32_1 = arith.constant 0 : i32
    return %c0_i32, %c0_i32_0 : i32, i32
  }
  func.func @transform_4(%arg0: i32) -> (i32, i32, i32) {
    %c0_i32 = arith.constant 0 : i32
    %c0_i32_0 = arith.constant 0 : i32
    %c0_i32_1 = arith.constant 0 : i32
    %c0_i32_2 = arith.constant 0 : i32
    return %c0_i32, %c0_i32_0, %c0_i32_1 : i32, i32, i32
  }
  func.func @transform_5(%arg0: i32) -> (i32, i32, i32) {
    %c0_i32 = arith.constant 0 : i32
    %c0_i32_0 = arith.constant 0 : i32
    %c0_i32_1 = arith.constant 0 : i32
    %c0_i32_2 = arith.constant 0 : i32
    return %c0_i32, %c0_i32_0, %c0_i32_1 : i32, i32, i32
  }
  func.func @transform_6(%arg0: i32) -> (i32, i32, i32) {
    %c0_i32 = arith.constant 0 : i32
    %c0_i32_0 = arith.constant 0 : i32
    %c0_i32_1 = arith.constant 0 : i32
    %c0_i32_2 = arith.constant 0 : i32
    return %c0_i32, %c0_i32_0, %c0_i32_1 : i32, i32, i32
  }
  func.func @transform_7(%arg0: i32) -> (i32, i32, i32, i32) {
    %c0_i32 = arith.constant 0 : i32
    %c0_i32_0 = arith.constant 0 : i32
    %c0_i32_1 = arith.constant 0 : i32
    %c0_i32_2 = arith.constant 0 : i32
    return %arg0, %c0_i32, %c0_i32_0, %c0_i32_1 : i32, i32, i32, i32
  }
  func.func @transform_8(%arg0: i32) -> (i32, i32, i32, i32) {
    %c0_i32 = arith.constant 0 : i32
    %c0_i32_0 = arith.constant 0 : i32
    %c0_i32_1 = arith.constant 0 : i32
    %c0_i32_2 = arith.constant 0 : i32
    return %arg0, %c0_i32, %c0_i32_0, %c0_i32_1 : i32, i32, i32, i32
  }
}

module attributes {stable_mosaic.version = 11 : i64} {
  func.func @_pool_bn_kernel(%arg0: memref<2x8x8x32xf32, #tpu.memory_space<vmem>>, %arg1: memref<2x8x8x32xf32, #tpu.memory_space<vmem>>, %arg2: memref<2x8x8x32xf32, #tpu.memory_space<vmem>>, %arg3: memref<2x8x8x32xf32, #tpu.memory_space<vmem>>, %arg4: memref<1x32xf32, #tpu.memory_space<vmem>>, %arg5: memref<1x32xf32, #tpu.memory_space<vmem>>, %arg6: memref<2x8x8x32xf32, #tpu.memory_space<vmem>>) attributes {dimension_semantics = [], scalar_prefetch = 0 : i64, scratch_operands = 0 : i64, tpu.core_type = #tpu.core_type<tc>} {
    %c0 = arith.constant 0 : index
    %c0_0 = arith.constant 0 : index
    %c0_1 = arith.constant 0 : index
    %c0_2 = arith.constant 0 : index
    %0 = vector.load %arg0[%c0, %c0_0, %c0_1, %c0_2] : memref<2x8x8x32xf32, #tpu.memory_space<vmem>>, vector<2x8x8x32xf32>
    %c0_3 = arith.constant 0 : index
    %c0_4 = arith.constant 0 : index
    %c0_5 = arith.constant 0 : index
    %c0_6 = arith.constant 0 : index
    %1 = vector.load %arg1[%c0_3, %c0_4, %c0_5, %c0_6] : memref<2x8x8x32xf32, #tpu.memory_space<vmem>>, vector<2x8x8x32xf32>
    %2 = arith.maximumf %0, %1 : vector<2x8x8x32xf32>
    %c0_7 = arith.constant 0 : index
    %c0_8 = arith.constant 0 : index
    %c0_9 = arith.constant 0 : index
    %c0_10 = arith.constant 0 : index
    %3 = vector.load %arg2[%c0_7, %c0_8, %c0_9, %c0_10] : memref<2x8x8x32xf32, #tpu.memory_space<vmem>>, vector<2x8x8x32xf32>
    %c0_11 = arith.constant 0 : index
    %c0_12 = arith.constant 0 : index
    %c0_13 = arith.constant 0 : index
    %c0_14 = arith.constant 0 : index
    %4 = vector.load %arg3[%c0_11, %c0_12, %c0_13, %c0_14] : memref<2x8x8x32xf32, #tpu.memory_space<vmem>>, vector<2x8x8x32xf32>
    %5 = arith.maximumf %3, %4 : vector<2x8x8x32xf32>
    %6 = arith.maximumf %2, %5 : vector<2x8x8x32xf32>
    %7 = vector.shape_cast %6 : vector<2x8x8x32xf32> to vector<128x32xf32>
    %cst = arith.constant dense<0.000000e+00> : vector<32xf32>
    %8 = vector.multi_reduction <add>, %7, %cst [0] : vector<128x32xf32> to vector<32xf32>
    %9 = vector.shape_cast %8 : vector<32xf32> to vector<1x32xf32>
    %cst_15 = arith.constant 1.280000e+02 : f32
    %10 = vector.broadcast %cst_15 : f32 to vector<1x32xf32>
    %11 = arith.divf %9, %10 : vector<1x32xf32>
    %12 = arith.mulf %7, %7 : vector<128x32xf32>
    %cst_16 = arith.constant dense<0.000000e+00> : vector<32xf32>
    %13 = vector.multi_reduction <add>, %12, %cst_16 [0] : vector<128x32xf32> to vector<32xf32>
    %14 = vector.shape_cast %13 : vector<32xf32> to vector<1x32xf32>
    %cst_17 = arith.constant 1.280000e+02 : f32
    %15 = vector.broadcast %cst_17 : f32 to vector<1x32xf32>
    %16 = arith.divf %14, %15 : vector<1x32xf32>
    %17 = arith.mulf %11, %11 : vector<1x32xf32>
    %18 = arith.subf %16, %17 : vector<1x32xf32>
    %19 = vector.broadcast %11 : vector<1x32xf32> to vector<128x32xf32>
    %20 = arith.subf %7, %19 : vector<128x32xf32>
    %cst_18 = arith.constant 9.99999974E-6 : f32
    %21 = vector.broadcast %cst_18 : f32 to vector<1x32xf32>
    %22 = arith.addf %18, %21 : vector<1x32xf32>
    %23 = math.rsqrt %22 : vector<1x32xf32>
    %24 = vector.broadcast %23 : vector<1x32xf32> to vector<128x32xf32>
    %25 = arith.mulf %20, %24 : vector<128x32xf32>
    %c0_19 = arith.constant 0 : index
    %c0_20 = arith.constant 0 : index
    %26 = vector.load %arg4[%c0_19, %c0_20] : memref<1x32xf32, #tpu.memory_space<vmem>>, vector<1x32xf32>
    %27 = vector.broadcast %26 : vector<1x32xf32> to vector<128x32xf32>
    %28 = arith.mulf %27, %25 : vector<128x32xf32>
    %c0_21 = arith.constant 0 : index
    %c0_22 = arith.constant 0 : index
    %29 = vector.load %arg5[%c0_21, %c0_22] : memref<1x32xf32, #tpu.memory_space<vmem>>, vector<1x32xf32>
    %30 = vector.broadcast %29 : vector<1x32xf32> to vector<128x32xf32>
    %31 = arith.addf %28, %30 : vector<128x32xf32>
    %32 = vector.shape_cast %31 : vector<128x32xf32> to vector<2x8x8x32xf32>
    %c0_23 = arith.constant 0 : index
    %c0_24 = arith.constant 0 : index
    %c0_25 = arith.constant 0 : index
    %c0_26 = arith.constant 0 : index
    %33 = vector.load %arg6[%c0_23, %c0_24, %c0_25, %c0_26] : memref<2x8x8x32xf32, #tpu.memory_space<vmem>>, vector<2x8x8x32xf32>
    tpu.vector_store %arg6[%c0_23, %c0_24, %c0_25, %c0_26], %32 {strides = array<i32>} : memref<2x8x8x32xf32, #tpu.memory_space<vmem>>, vector<2x8x8x32xf32>,
    return
  }
}

</mosaic_0001>

<llo_original>
// kernel: conv_lstm_cell_forward.3
$region0: #{conv_lstm_cell_forward.3}
  #allocation0 [shape = 'u32[]', space=smem, size = 0x4, offset = 0x4, fixed_abs, tag = 'smem constant byte address 0x4 - core index']
  #allocation1 [shape = 'u32[144,128]{1,0:T(1,128)}', space=vmem, size = 0x12000, scoped, tag = 'internal scratch']
  %s0 = inlined_call_operand.vmem [shape: f32[2,8,8,32], index: 0, kind: input, shape index: {}]
  %s1 = inlined_call_operand.vmem [shape: f32[2,8,8,32], index: 1, kind: input, shape index: {}]
  %s2 = inlined_call_operand.vmem [shape: f32[2,8,8,32], index: 2, kind: input, shape index: {}]
  %s3 = inlined_call_operand.vmem [shape: f32[2,8,8,32], index: 3, kind: input, shape index: {}]
  %s4 = inlined_call_operand.vmem [shape: f32[1,32], index: 4, kind: input, shape index: {}]
  %s5 = inlined_call_operand.vmem [shape: f32[1,32], index: 5, kind: input, shape index: {}]
  %s6 = inlined_call_operand.hbm [shape: f32[2,8,8,32], index: 6, kind: output, shape index: {}]
  %s7 = sld [smem:[#allocation0]]
  $region34: #{conv_lstm_cell_forward.3} parent=0
    _
  %s9 = ssub.s32 1, %s7
  %s10 = scalar_select 0, %s9, %s7
  $region1: #{conv_lstm_cell_forward.3} parent=0
    #allocation2 [shape = 'u8[65536]{0}', space=vmem, size = 0x10000, scoped, tag = 'output window, operand 0, single buffered']
    #allocation3 [shape = 's32[1]{0}', space=sflag, size = 0x4, scoped, tag = 'scoped memory for conv_lstm_cell_forward.3']
    %11 = vsyncpa [#allocation3], 0
    // Predicated region
    $region2: #{conv_lstm_cell_forward.3} parent=1 // pred_check
      _
    $region3: #{conv_lstm_cell_forward.3} parent=1 // pred_check_branch
      %13 = sbr.rel (0) target = $region5
    $region4: #{conv_lstm_cell_forward.3} parent=1 // pred_region
      _
    $region5: #{conv_lstm_cell_forward.3} parent=1 // pred_fallthru
      _
    // Predicated region
    $region6: #{conv_lstm_cell_forward.3} parent=1 // pred_check
      _
    $region7: #{conv_lstm_cell_forward.3} parent=1 // pred_check_branch
      %15 = sbr.rel (0) target = $region9
    $region8: #{conv_lstm_cell_forward.3} parent=1 // pred_region
      _
    $region9: #{conv_lstm_cell_forward.3} parent=1 // pred_fallthru
      _
    // Predicated region
    $region10: #{conv_lstm_cell_forward.3} parent=1 // pred_check
      _
    $region11: #{conv_lstm_cell_forward.3} parent=1 // pred_check_branch
      %17 = sbr.rel (0) target = $region13
    $region12: #{conv_lstm_cell_forward.3} parent=1 // pred_region
      _
    $region13: #{conv_lstm_cell_forward.3} parent=1 // pred_fallthru
      _
    // Predicated region
    $region14: #{conv_lstm_cell_forward.3} parent=1 // pred_check
      _
    $region15: #{conv_lstm_cell_forward.3} parent=1 // pred_check_branch
      %19 = sbr.rel (0) target = $region17
    $region16: #{conv_lstm_cell_forward.3} parent=1 // pred_region
      _
    $region17: #{conv_lstm_cell_forward.3} parent=1 // pred_fallthru
      _
    // Predicated region
    $region18: #{conv_lstm_cell_forward.3} parent=1 // pred_check
      _
    $region19: #{conv_lstm_cell_forward.3} parent=1 // pred_check_branch
      %21 = sbr.rel (0) target = $region21
    $region20: #{conv_lstm_cell_forward.3} parent=1 // pred_region
      _
    $region21: #{conv_lstm_cell_forward.3} parent=1 // pred_fallthru
      _
    // Predicated region
    $region22: #{conv_lstm_cell_forward.3} parent=1 // pred_check
      _
    $region23: #{conv_lstm_cell_forward.3} parent=1 // pred_check_branch
      %23 = sbr.rel (0) target = $region25
    $region24: #{conv_lstm_cell_forward.3} parent=1 // pred_region
      _
    $region25: #{conv_lstm_cell_forward.3} parent=1 // pred_fallthru
      _
    %v24 = vld [vmem:[%s0] sm:$0xff]
    %v25 = vld [vmem:[%s0 + $0x8] sm:$0xff]
    %v26 = vld [vmem:[%s0 + $0x10] sm:$0xff]
    %v27 = vld [vmem:[%s0 + $0x18] sm:$0xff]
    %v28 = vld [vmem:[%s0 + $0x20] sm:$0xff]
    %v29 = vld [vmem:[%s0 + $0x28] sm:$0xff]
    %v30 = vld [vmem:[%s0 + $0x30] sm:$0xff]
    %v31 = vld [vmem:[%s0 + $0x38] sm:$0xff]
    %v32 = vld [vmem:[%s0 + $0x40] sm:$0xff]
    %v33 = vld [vmem:[%s0 + $0x48] sm:$0xff]
    %v34 = vld [vmem:[%s0 + $0x50] sm:$0xff]
    %v35 = vld [vmem:[%s0 + $0x58] sm:$0xff]
    %v36 = vld [vmem:[%s0 + $0x60] sm:$0xff]
    %v37 = vld [vmem:[%s0 + $0x68] sm:$0xff]
    %v38 = vld [vmem:[%s0 + $0x70] sm:$0xff]
    %v39 = vld [vmem:[%s0 + $0x78] sm:$0xff]
    %v40 = vld [vmem:[%s1] sm:$0xff]
    %v41 = vld [vmem:[%s1 + $0x8] sm:$0xff]
    %v42 = vld [vmem:[%s1 + $0x10] sm:$0xff]
    %v43 = vld [vmem:[%s1 + $0x18] sm:$0xff]
    %v44 = vld [vmem:[%s1 + $0x20] sm:$0xff]
    %v45 = vld [vmem:[%s1 + $0x28] sm:$0xff]
    %v46 = vld [vmem:[%s1 + $0x30] sm:$0xff]
    %v47 = vld [vmem:[%s1 + $0x38] sm:$0xff]
    %v48 = vld [vmem:[%s1 + $0x40] sm:$0xff]
    %v49 = vld [vmem:[%s1 + $0x48] sm:$0xff]
    %v50 = vld [vmem:[%s1 + $0x50] sm:$0xff]
    %v51 = vld [vmem:[%s1 + $0x58] sm:$0xff]
    %v52 = vld [vmem:[%s1 + $0x60] sm:$0xff]
    %v53 = vld [vmem:[%s1 + $0x68] sm:$0xff]
    %v54 = vld [vmem:[%s1 + $0x70] sm:$0xff]
    %v55 = vld [vmem:[%s1 + $0x78] sm:$0xff]
    %v56 = vmax.f32 %v24, %v40
    %v57 = vmax.f32 %v25, %v41
    %v58 = vmax.f32 %v26, %v42
    %v59 = vmax.f32 %v27, %v43
    %v60 = vmax.f32 %v28, %v44
    %v61 = vmax.f32 %v29, %v45
    %v62 = vmax.f32 %v30, %v46
    %v63 = vmax.f32 %v31, %v47
    %v64 = vmax.f32 %v32, %v48
    %v65 = vmax.f32 %v33, %v49
    %v66 = vmax.f32 %v34, %v50
    %v67 = vmax.f32 %v35, %v51
    %v68 = vmax.f32 %v36, %v52
    %v69 = vmax.f32 %v37, %v53
    %v70 = vmax.f32 %v38, %v54
    %v71 = vmax.f32 %v39, %v55
    %v72 = vld [vmem:[%s2] sm:$0xff]
    %v73 = vld [vmem:[%s2 + $0x8] sm:$0xff]
    %v74 = vld [vmem:[%s2 + $0x10] sm:$0xff]
    %v75 = vld [vmem:[%s2 + $0x18] sm:$0xff]
    %v76 = vld [vmem:[%s2 + $0x20] sm:$0xff]
    %v77 = vld [vmem:[%s2 + $0x28] sm:$0xff]
    %v78 = vld [vmem:[%s2 + $0x30] sm:$0xff]
    %v79 = vld [vmem:[%s2 + $0x38] sm:$0xff]
    %v80 = vld [vmem:[%s2 + $0x40] sm:$0xff]
    %v81 = vld [vmem:[%s2 + $0x48] sm:$0xff]
    %v82 = vld [vmem:[%s2 + $0x50] sm:$0xff]
    %v83 = vld [vmem:[%s2 + $0x58] sm:$0xff]
    %v84 = vld [vmem:[%s2 + $0x60] sm:$0xff]
    %v85 = vld [vmem:[%s2 + $0x68] sm:$0xff]
    %v86 = vld [vmem:[%s2 + $0x70] sm:$0xff]
    %v87 = vld [vmem:[%s2 + $0x78] sm:$0xff]
    %v88 = vld [vmem:[%s3] sm:$0xff]
    %v89 = vld [vmem:[%s3 + $0x8] sm:$0xff]
    %v90 = vld [vmem:[%s3 + $0x10] sm:$0xff]
    %v91 = vld [vmem:[%s3 + $0x18] sm:$0xff]
    %v92 = vld [vmem:[%s3 + $0x20] sm:$0xff]
    %v93 = vld [vmem:[%s3 + $0x28] sm:$0xff]
    %v94 = vld [vmem:[%s3 + $0x30] sm:$0xff]
    %v95 = vld [vmem:[%s3 + $0x38] sm:$0xff]
    %v96 = vld [vmem:[%s3 + $0x40] sm:$0xff]
    %v97 = vld [vmem:[%s3 + $0x48] sm:$0xff]
    %v98 = vld [vmem:[%s3 + $0x50] sm:$0xff]
    %v99 = vld [vmem:[%s3 + $0x58] sm:$0xff]
    %v100 = vld [vmem:[%s3 + $0x60] sm:$0xff]
    %v101 = vld [vmem:[%s3 + $0x68] sm:$0xff]
    %v102 = vld [vmem:[%s3 + $0x70] sm:$0xff]
    %v103 = vld [vmem:[%s3 + $0x78] sm:$0xff]
    %v104 = vmax.f32 %v72, %v88
    %v105 = vmax.f32 %v73, %v89
    %v106 = vmax.f32 %v74, %v90
    %v107 = vmax.f32 %v75, %v91
    %v108 = vmax.f32 %v76, %v92
    %v109 = vmax.f32 %v77, %v93
    %v110 = vmax.f32 %v78, %v94
    %v111 = vmax.f32 %v79, %v95
    %v112 = vmax.f32 %v80, %v96
    %v113 = vmax.f32 %v81, %v97
    %v114 = vmax.f32 %v82, %v98
    %v115 = vmax.f32 %v83, %v99
    %v116 = vmax.f32 %v84, %v100
    %v117 = vmax.f32 %v85, %v101
    %v118 = vmax.f32 %v86, %v102
    %v119 = vmax.f32 %v87, %v103
    %v120 = vmax.f32 %v56, %v104
    %v121 = vmax.f32 %v57, %v105
    %v122 = vmax.f32 %v58, %v106
    %v123 = vmax.f32 %v59, %v107
    %v124 = vmax.f32 %v60, %v108
    %v125 = vmax.f32 %v61, %v109
    %v126 = vmax.f32 %v62, %v110
    %v127 = vmax.f32 %v63, %v111
    %v128 = vmax.f32 %v64, %v112
    %v129 = vmax.f32 %v65, %v113
    %v130 = vmax.f32 %v66, %v114
    %v131 = vmax.f32 %v67, %v115
    %v132 = vmax.f32 %v68, %v116
    %v133 = vmax.f32 %v69, %v117
    %v134 = vmax.f32 %v70, %v118
    %v135 = vmax.f32 %v71, %v119
    %vm136 = vcmask 261120
    %v137 = vsel %vm136, %v120, 0.0
    %v138 = vsel %vm136, %v121, 0.0
    %v139 = vadd.f32 %v137, %v138
    %v140 = vsel %vm136, %v122, 0.0
    %v141 = vadd.f32 %v139, %v140
    %v142 = vsel %vm136, %v123, 0.0
    %v143 = vadd.f32 %v141, %v142
    %v144 = vsel %vm136, %v124, 0.0
    %v145 = vadd.f32 %v143, %v144
    %v146 = vsel %vm136, %v125, 0.0
    %v147 = vadd.f32 %v145, %v146
    %v148 = vsel %vm136, %v126, 0.0
    %v149 = vadd.f32 %v147, %v148
    %v150 = vsel %vm136, %v127, 0.0
    %v151 = vadd.f32 %v149, %v150
    %v152 = vsel %vm136, %v128, 0.0
    %v153 = vadd.f32 %v151, %v152
    %v154 = vsel %vm136, %v129, 0.0
    %v155 = vadd.f32 %v153, %v154
    %v156 = vsel %vm136, %v130, 0.0
    %v157 = vadd.f32 %v155, %v156
    %v158 = vsel %vm136, %v131, 0.0
    %v159 = vadd.f32 %v157, %v158
    %v160 = vsel %vm136, %v132, 0.0
    %v161 = vadd.f32 %v159, %v160
    %v162 = vsel %vm136, %v133, 0.0
    %v163 = vadd.f32 %v161, %v162
    %v164 = vsel %vm136, %v134, 0.0
    %v165 = vadd.f32 %v163, %v164
    %v166 = vsel %vm136, %v135, 0.0
    %v167 = vadd.f32 %v165, %v166
    %v168 = vrot.slane %v167, 4
    %v169 = vadd.f32 %v167, %v168
    %v170 = vrot.slane %v169, 2
    %v171 = vadd.f32 %v169, %v170
    %v172 = vrot.slane %v171, 1
    %v173 = vadd.f32 %v171, %v172
    %v174 = vrcp.pop 128.0
    %v175 = vmul.f32 %v173, %v174
    %v176 = vmul.f32 %v120, %v120
    %v177 = vmul.f32 %v121, %v121
    %v178 = vmul.f32 %v122, %v122
    %v179 = vmul.f32 %v123, %v123
    %v180 = vmul.f32 %v124, %v124
    %v181 = vmul.f32 %v125, %v125
    %v182 = vmul.f32 %v126, %v126
    %v183 = vmul.f32 %v127, %v127
    %v184 = vmul.f32 %v128, %v128
    %v185 = vmul.f32 %v129, %v129
    %v186 = vmul.f32 %v130, %v130
    %v187 = vmul.f32 %v131, %v131
    %v188 = vmul.f32 %v132, %v132
    %v189 = vmul.f32 %v133, %v133
    %v190 = vmul.f32 %v134, %v134
    %v191 = vmul.f32 %v135, %v135
    %v192 = vsel %vm136, %v176, 0.0
    %v193 = vsel %vm136, %v177, 0.0
    %v194 = vadd.f32 %v192, %v193
    %v195 = vsel %vm136, %v178, 0.0
    %v196 = vadd.f32 %v194, %v195
    %v197 = vsel %vm136, %v179, 0.0
    %v198 = vadd.f32 %v196, %v197
    %v199 = vsel %vm136, %v180, 0.0
    %v200 = vadd.f32 %v198, %v199
    %v201 = vsel %vm136, %v181, 0.0
    %v202 = vadd.f32 %v200, %v201
    %v203 = vsel %vm136, %v182, 0.0
    %v204 = vadd.f32 %v202, %v203
    %v205 = vsel %vm136, %v183, 0.0
    %v206 = vadd.f32 %v204, %v205
    %v207 = vsel %vm136, %v184, 0.0
    %v208 = vadd.f32 %v206, %v207
    %v209 = vsel %vm136, %v185, 0.0
    %v210 = vadd.f32 %v208, %v209
    %v211 = vsel %vm136, %v186, 0.0
    %v212 = vadd.f32 %v210, %v211
    %v213 = vsel %vm136, %v187, 0.0
    %v214 = vadd.f32 %v212, %v213
    %v215 = vsel %vm136, %v188, 0.0
    %v216 = vadd.f32 %v214, %v215
    %v217 = vsel %vm136, %v189, 0.0
    %v218 = vadd.f32 %v216, %v217
    %v219 = vsel %vm136, %v190, 0.0
    %v220 = vadd.f32 %v218, %v219
    %v221 = vsel %vm136, %v191, 0.0
    %v222 = vadd.f32 %v220, %v221
    %v223 = vrot.slane %v222, 4
    %v224 = vadd.f32 %v222, %v223
    %v225 = vrot.slane %v224, 2
    %v226 = vadd.f32 %v224, %v225
    %v227 = vrot.slane %v226, 1
    %v228 = vadd.f32 %v226, %v227
    %v229 = vmul.f32 %v228, %v174
    %v230 = vmul.f32 %v175, %v175
    %v231 = vsub.f32 %v229, %v230
    %v232 = vsub.f32 %v120, %v175
    %v233 = vsub.f32 %v121, %v175
    %v234 = vsub.f32 %v122, %v175
    %v235 = vsub.f32 %v123, %v175
    %v236 = vsub.f32 %v124, %v175
    %v237 = vsub.f32 %v125, %v175
    %v238 = vsub.f32 %v126, %v175
    %v239 = vsub.f32 %v127, %v175
    %v240 = vsub.f32 %v128, %v175
    %v241 = vsub.f32 %v129, %v175
    %v242 = vsub.f32 %v130, %v175
    %v243 = vsub.f32 %v131, %v175
    %v244 = vsub.f32 %v132, %v175
    %v245 = vsub.f32 %v133, %v175
    %v246 = vsub.f32 %v134, %v175
    %v247 = vsub.f32 %v135, %v175
    %v248 = vadd.f32 %v231, 1e-05
    %v249 = vrsqrt.pop %v248
    %v250 = vmul.f32 %v232, %v249
    %v251 = vmul.f32 %v233, %v249
    %v252 = vmul.f32 %v234, %v249
    %v253 = vmul.f32 %v235, %v249
    %v254 = vmul.f32 %v236, %v249
    %v255 = vmul.f32 %v237, %v249
    %v256 = vmul.f32 %v238, %v249
    %v257 = vmul.f32 %v239, %v249
    %v258 = vmul.f32 %v240, %v249
    %v259 = vmul.f32 %v241, %v249
    %v260 = vmul.f32 %v242, %v249
    %v261 = vmul.f32 %v243, %v249
    %v262 = vmul.f32 %v244, %v249
    %v263 = vmul.f32 %v245, %v249
    %v264 = vmul.f32 %v246, %v249
    %v265 = vmul.f32 %v247, %v249
    %v266 = vld [vmem:[%s4] sm:$0x1]
    %v268 = vlaneseq
    %v269 = vshrl.u32 %v268, 7
    %v270 = vsub.s32 0, %v269
    %v271 = vrot.slane %v266, %v270
    %v273 = vmul.f32 %v271, %v250
    %v274 = vmul.f32 %v271, %v251
    %v275 = vmul.f32 %v271, %v252
    %v276 = vmul.f32 %v271, %v253
    %v277 = vmul.f32 %v271, %v254
    %v278 = vmul.f32 %v271, %v255
    %v279 = vmul.f32 %v271, %v256
    %v280 = vmul.f32 %v271, %v257
    %v281 = vmul.f32 %v271, %v258
    %v282 = vmul.f32 %v271, %v259
    %v283 = vmul.f32 %v271, %v260
    %v284 = vmul.f32 %v271, %v261
    %v285 = vmul.f32 %v271, %v262
    %v286 = vmul.f32 %v271, %v263
    %v287 = vmul.f32 %v271, %v264
    %v288 = vmul.f32 %v271, %v265
    %v289 = vld [vmem:[%s5] sm:$0x1]
    %v291 = vlaneseq
    %v292 = vshrl.u32 %v291, 7
    %v293 = vsub.s32 0, %v292
    %v294 = vrot.slane %v289, %v293
    %v296 = vadd.f32 %v273, %v294
    %v297 = vadd.f32 %v274, %v294
    %v298 = vadd.f32 %v275, %v294
    %v299 = vadd.f32 %v276, %v294
    %v300 = vadd.f32 %v277, %v294
    %v301 = vadd.f32 %v278, %v294
    %v302 = vadd.f32 %v279, %v294
    %v303 = vadd.f32 %v280, %v294
    %v304 = vadd.f32 %v281, %v294
    %v305 = vadd.f32 %v282, %v294
    %v306 = vadd.f32 %v283, %v294
    %v307 = vadd.f32 %v284, %v294
    %v308 = vadd.f32 %v285, %v294
    %v309 = vadd.f32 %v286, %v294
    %v310 = vadd.f32 %v287, %v294
    %v311 = vadd.f32 %v288, %v294
    %312 = vst.msk [vmem:[#allocation2] sm:$0xff] %vm136, %v296
    %313 = vst.msk [vmem:[#allocation2 + $0x8] sm:$0xff] %vm136, %v297
    %314 = vst.msk [vmem:[#allocation2 + $0x10] sm:$0xff] %vm136, %v298
    %315 = vst.msk [vmem:[#allocation2 + $0x18] sm:$0xff] %vm136, %v299
    %316 = vst.msk [vmem:[#allocation2 + $0x20] sm:$0xff] %vm136, %v300
    %317 = vst.msk [vmem:[#allocation2 + $0x28] sm:$0xff] %vm136, %v301
    %318 = vst.msk [vmem:[#allocation2 + $0x30] sm:$0xff] %vm136, %v302
    %319 = vst.msk [vmem:[#allocation2 + $0x38] sm:$0xff] %vm136, %v303
    %320 = vst.msk [vmem:[#allocation2 + $0x40] sm:$0xff] %vm136, %v304
    %321 = vst.msk [vmem:[#allocation2 + $0x48] sm:$0xff] %vm136, %v305
    %322 = vst.msk [vmem:[#allocation2 + $0x50] sm:$0xff] %vm136, %v306
    %323 = vst.msk [vmem:[#allocation2 + $0x58] sm:$0xff] %vm136, %v307
    %324 = vst.msk [vmem:[#allocation2 + $0x60] sm:$0xff] %vm136, %v308
    %325 = vst.msk [vmem:[#allocation2 + $0x68] sm:$0xff] %vm136, %v309
    %326 = vst.msk [vmem:[#allocation2 + $0x70] sm:$0xff] %vm136, %v310
    %327 = vst.msk [vmem:[#allocation2 + $0x78] sm:$0xff] %vm136, %v311
    // Predicated region
    $region26: #{conv_lstm_cell_forward.3} parent=1 // pred_check
      _
    $region27: #{conv_lstm_cell_forward.3} parent=1 // pred_check_branch
      %329 = sbr.rel (0) target = $region29
    $region28: #{conv_lstm_cell_forward.3} parent=1 // pred_region
      %s331 = ssub.s32 2048, 2048
      %332 = vsyncadd [#allocation3], %s331
      %s333 = sshll.u32 [#allocation2], 4
      %s334 = int_to_ptr.vmem [resolvable:$true] %s333
      %339 = dma.vmem_to_hbm [thread:$0]  %s334, 2048, %s6, [#allocation3], 128, 128, 8
    $region29: #{conv_lstm_cell_forward.3} parent=1 // pred_fallthru
      _
    // Predicated region
    $region30: #{conv_lstm_cell_forward.3} parent=1 // pred_check
      _
    $region31: #{conv_lstm_cell_forward.3} parent=1 // pred_check_branch
      %341 = sbr.rel (0) target = $region33
    $region32: #{conv_lstm_cell_forward.3} parent=1 // pred_region
      %342 = dma.done [#allocation3], 2048
    $region33: #{conv_lstm_cell_forward.3} parent=1 // pred_fallthru
      _
    %343 = vsyncpa [#allocation3], 1

// kernel: conv_lstm_cell_forward.2
$region0: #{conv_lstm_cell_forward.2}
  #allocation0 [shape = 'u32[]', space=smem, size = 0x4, offset = 0x4, fixed_abs, tag = 'smem constant byte address 0x4 - core index']
  #allocation1 [shape = 'u32[144,128]{1,0:T(1,128)}', space=vmem, size = 0x12000, scoped, tag = 'internal scratch']
  %s0 = inlined_call_operand.vmem [shape: f32[2,18,18,36], index: 0, kind: input, shape index: {}]
  %s1 = inlined_call_operand.vmem [shape: f32[2,16,16,32], index: 1, kind: input, shape index: {}]
  %s2 = inlined_call_operand.vmem [shape: bf16[9,36,128], index: 2, kind: input, shape index: {}]
  %s3 = inlined_call_operand.vmem [shape: f32[1,128], index: 3, kind: input, shape index: {}]
  %s4 = inlined_call_operand.vmem [shape: f32[16,16,32], index: 4, kind: input, shape index: {}]
  %s5 = inlined_call_operand.vmem [shape: f32[16,16,32], index: 5, kind: input, shape index: {}]
  %s6 = inlined_call_operand.vmem [shape: f32[16,16,32], index: 6, kind: input, shape index: {}]
  %s7 = inlined_call_operand.vmem [shape: f32[2,16,16,32], index: 7, kind: output, shape index: {0}]
  %s8 = inlined_call_operand.hbm [shape: f32[2,16,16,32], index: 8, kind: output, shape index: {1}]
  %9 = xla_tuple %s7, %s8
  %s10 = sld [smem:[#allocation0]]
  $region69: #{conv_lstm_cell_forward.2} parent=0
    _
  %s12 = ssub.s32 1, %s10
  %s13 = scalar_select 0, %s12, %s10
  $region1: #{conv_lstm_cell_forward.2} parent=0
    #allocation2 [shape = 'u8[262144]{0}', space=vmem, size = 0x40000, scoped, tag = 'output window, operand 1']
    #allocation3 [shape = 's32[2]{0}', space=sflag, size = 0x8, scoped, tag = 'scoped memory for conv_lstm_cell_forward.2']
    %14 = vsyncpa [#allocation3], 0
    %s15 = scalar_lea.sflag [#allocation3], 1
    %16 = vsyncpa %s15, 0
    loop: start=0, step=1, limit=4
    $region2: #{conv_lstm_cell_forward.2} parent=1 // loop_pre_header
      _
    $region3: #{conv_lstm_cell_forward.2} parent=1 // loop_header
      %s18 = sphi 0, %s22
      %p19 = scmp.ge.s32.totalorder %s18, 4
      %s28 = sphi 0, %s30
      %s31 = sphi 0, %s28
      %s32 = sphi 0, %s31
      %s48 = sphi 0, %s32
      %s54 = sphi 0, %s56
      %s57 = sphi 0, %s54
      %s58 = sphi 0, %s57
      %s74 = sphi 0, %s58
      %s78 = sphi 0, %s78
      %s80 = sphi 0, %s78
      %s81 = sphi 0, %s80
      %s95 = sphi 0, %s81
      %s99 = sphi 0, %s99
      %s101 = sphi 0, %s99
      %s102 = sphi 0, %s101
      %s116 = sphi 0, %s102
      %s120 = sphi 0, %s120
      %s122 = sphi 0, %s120
      %s123 = sphi 0, %s122
      %s137 = sphi 0, %s123
      %s141 = sphi 0, %s141
      %s143 = sphi 0, %s141
      %s144 = sphi 0, %s143
      %s158 = sphi 0, %s144
      %s162 = sphi 0, %s162
      %s164 = sphi 0, %s162
      %s165 = sphi 0, %s164
      %s179 = sphi 0, %s165
      %s185 = sphi 0, %s187
      %s188 = sphi 0, %s185
      %s189 = sphi 0, %s188
      %s205 = sphi 0, %s189
      %s211 = sphi 0, %s213
      %s214 = sphi 0, %s211
      %s215 = sphi 0, %s214
      %s231 = sphi 0, %s215
    $region4: #{conv_lstm_cell_forward.2} parent=1 // loop_header_branch
      %21 = sbr.rel (%p19) target = $region8
    $region5: #{conv_lstm_cell_forward.2} parent=1 // loop_body
      %s23 = ssub.s32 %s18, 1
      %s24 = ssub.s32 %s18, 2
      %s25 = sadd.s32 %s18, 1
      %s26 = ssub.s32 %s18, %s25
      %p27 = scmp.eq.s32.totalorder %s26, 0
      %s29 = sadd.s32 %s28, 1
      %s30 = scalar_select %p27, %s28, %s29
      %p33 = pneg %p27
      %p34 = scmp.eq.s32.totalorder %s18, 1
      %p35 = por %p33, %p34
      %p36 = scmp.ne.s32.totalorder %s28, %s31
      %p37 = scmp.eq.s32.totalorder %s18, 0
      %p38 = por %p36, %p37
      %p39 = scmp.ne.s32.totalorder %s28, %s31
      %p40 = scmp.eq.s32.totalorder %s23, 1
      %p41 = por %p39, %p40
      %p42 = scmp.ne.s32.totalorder %s31, %s32
      %p43 = scmp.eq.s32.totalorder %s23, 0
      %p44 = por %p42, %p43
      %p45 = scmp.ne.s32.totalorder %s31, %s32
      %p46 = scmp.eq.s32.totalorder %s24, 1
      %p47 = por %p45, %p46
      %p49 = scmp.ne.s32.totalorder %s32, %s48
      %p50 = scmp.eq.s32.totalorder %s24, 0
      %p51 = por %p49, %p50
      %s52 = ssub.s32 %s18, %s25
      %p53 = scmp.eq.s32.totalorder %s52, 0
      %s55 = sadd.s32 %s54, 1
      %s56 = scalar_select %p53, %s54, %s55
      %p59 = pneg %p53
      %p60 = scmp.eq.s32.totalorder %s18, 1
      %p61 = por %p59, %p60
      %p62 = scmp.ne.s32.totalorder %s54, %s57
      %p63 = scmp.eq.s32.totalorder %s18, 0
      %p64 = por %p62, %p63
      %p65 = scmp.ne.s32.totalorder %s54, %s57
      %p66 = scmp.eq.s32.totalorder %s23, 1
      %p67 = por %p65, %p66
      %p68 = scmp.ne.s32.totalorder %s57, %s58
      %p69 = scmp.eq.s32.totalorder %s23, 0
      %p70 = por %p68, %p69
      %p71 = scmp.ne.s32.totalorder %s57, %s58
      %p72 = scmp.eq.s32.totalorder %s24, 1
      %p73 = por %p71, %p72
      %p75 = scmp.ne.s32.totalorder %s58, %s74
      %p76 = scmp.eq.s32.totalorder %s24, 0
      %p77 = por %p75, %p76
      %s79 = sadd.s32 %s78, 1
      %p82 = scmp.eq.s32.totalorder %s18, 1
      %p83 = scmp.ne.s32.totalorder %s78, %s80
      %p84 = scmp.eq.s32.totalorder %s18, 0
      %p85 = por %p83, %p84
      %p86 = scmp.ne.s32.totalorder %s78, %s80
      %p87 = scmp.eq.s32.totalorder %s23, 1
      %p88 = por %p86, %p87
      %p89 = scmp.ne.s32.totalorder %s80, %s81
      %p90 = scmp.eq.s32.totalorder %s23, 0
      %p91 = por %p89, %p90
      %p92 = scmp.ne.s32.totalorder %s80, %s81
      %p93 = scmp.eq.s32.totalorder %s24, 1
      %p94 = por %p92, %p93
      %p96 = scmp.ne.s32.totalorder %s81, %s95
      %p97 = scmp.eq.s32.totalorder %s24, 0
      %p98 = por %p96, %p97
      %s100 = sadd.s32 %s99, 1
      %p103 = scmp.eq.s32.totalorder %s18, 1
      %p104 = scmp.ne.s32.totalorder %s99, %s101
      %p105 = scmp.eq.s32.totalorder %s18, 0
      %p106 = por %p104, %p105
      %p107 = scmp.ne.s32.totalorder %s99, %s101
      %p108 = scmp.eq.s32.totalorder %s23, 1
      %p109 = por %p107, %p108
      %p110 = scmp.ne.s32.totalorder %s101, %s102
      %p111 = scmp.eq.s32.totalorder %s23, 0
      %p112 = por %p110, %p111
      %p113 = scmp.ne.s32.totalorder %s101, %s102
      %p114 = scmp.eq.s32.totalorder %s24, 1
      %p115 = por %p113, %p114
      %p117 = scmp.ne.s32.totalorder %s102, %s116
      %p118 = scmp.eq.s32.totalorder %s24, 0
      %p119 = por %p117, %p118
      %s121 = sadd.s32 %s120, 1
      %p124 = scmp.eq.s32.totalorder %s18, 1
      %p125 = scmp.ne.s32.totalorder %s120, %s122
      %p126 = scmp.eq.s32.totalorder %s18, 0
      %p127 = por %p125, %p126
      %p128 = scmp.ne.s32.totalorder %s120, %s122
      %p129 = scmp.eq.s32.totalorder %s23, 1
      %p130 = por %p128, %p129
      %p131 = scmp.ne.s32.totalorder %s122, %s123
      %p132 = scmp.eq.s32.totalorder %s23, 0
      %p133 = por %p131, %p132
      %p134 = scmp.ne.s32.totalorder %s122, %s123
      %p135 = scmp.eq.s32.totalorder %s24, 1
      %p136 = por %p134, %p135
      %p138 = scmp.ne.s32.totalorder %s123, %s137
      %p139 = scmp.eq.s32.totalorder %s24, 0
      %p140 = por %p138, %p139
      %s142 = sadd.s32 %s141, 1
      %p145 = scmp.eq.s32.totalorder %s18, 1
      %p146 = scmp.ne.s32.totalorder %s141, %s143
      %p147 = scmp.eq.s32.totalorder %s18, 0
      %p148 = por %p146, %p147
      %p149 = scmp.ne.s32.totalorder %s141, %s143
      %p150 = scmp.eq.s32.totalorder %s23, 1
      %p151 = por %p149, %p150
      %p152 = scmp.ne.s32.totalorder %s143, %s144
      %p153 = scmp.eq.s32.totalorder %s23, 0
      %p154 = por %p152, %p153
      %p155 = scmp.ne.s32.totalorder %s143, %s144
      %p156 = scmp.eq.s32.totalorder %s24, 1
      %p157 = por %p155, %p156
      %p159 = scmp.ne.s32.totalorder %s144, %s158
      %p160 = scmp.eq.s32.totalorder %s24, 0
      %p161 = por %p159, %p160
      %s163 = sadd.s32 %s162, 1
      %p166 = scmp.eq.s32.totalorder %s18, 1
      %p167 = scmp.ne.s32.totalorder %s162, %s164
      %p168 = scmp.eq.s32.totalorder %s18, 0
      %p169 = por %p167, %p168
      %p170 = scmp.ne.s32.totalorder %s162, %s164
      %p171 = scmp.eq.s32.totalorder %s23, 1
      %p172 = por %p170, %p171
      %p173 = scmp.ne.s32.totalorder %s164, %s165
      %p174 = scmp.eq.s32.totalorder %s23, 0
      %p175 = por %p173, %p174
      %p176 = scmp.ne.s32.totalorder %s164, %s165
      %p177 = scmp.eq.s32.totalorder %s24, 1
      %p178 = por %p176, %p177
      %p180 = scmp.ne.s32.totalorder %s165, %s179
      %p181 = scmp.eq.s32.totalorder %s24, 0
      %p182 = por %p180, %p181
      %s183 = ssub.s32 %s18, %s25
      %p184 = scmp.eq.s32.totalorder %s183, 0
      %s186 = sadd.s32 %s185, 1
      %s187 = scalar_select %p184, %s185, %s186
      %p190 = pneg %p184
      %p191 = scmp.eq.s32.totalorder %s18, 1
      %p192 = por %p190, %p191
      %p193 = scmp.ne.s32.totalorder %s185, %s188
      %p194 = scmp.eq.s32.totalorder %s18, 0
      %p195 = por %p193, %p194
      %p196 = scmp.ne.s32.totalorder %s185, %s188
      %p197 = scmp.eq.s32.totalorder %s23, 1
      %p198 = por %p196, %p197
      %p199 = scmp.ne.s32.totalorder %s188, %s189
      %p200 = scmp.eq.s32.totalorder %s23, 0
      %p201 = por %p199, %p200
      %p202 = scmp.ne.s32.totalorder %s188, %s189
      %p203 = scmp.eq.s32.totalorder %s24, 1
      %p204 = por %p202, %p203
      %p206 = scmp.ne.s32.totalorder %s189, %s205
      %p207 = scmp.eq.s32.totalorder %s24, 0
      %p208 = por %p206, %p207
      %s209 = ssub.s32 %s18, %s25
      %p210 = scmp.eq.s32.totalorder %s209, 0
      %s212 = sadd.s32 %s211, 1
      %s213 = scalar_select %p210, %s211, %s212
      %p216 = pneg %p210
      %p217 = scmp.eq.s32.totalorder %s18, 1
      %p218 = por %p216, %p217
      %p219 = scmp.ne.s32.totalorder %s211, %s214
      %p220 = scmp.eq.s32.totalorder %s18, 0
      %p221 = por %p219, %p220
      %p222 = scmp.ne.s32.totalorder %s211, %s214
      %p223 = scmp.eq.s32.totalorder %s23, 1
      %p224 = por %p222, %p223
      %p225 = scmp.ne.s32.totalorder %s214, %s215
      %p226 = scmp.eq.s32.totalorder %s23, 0
      %p227 = por %p225, %p226
      %p228 = scmp.ne.s32.totalorder %s214, %s215
      %p229 = scmp.eq.s32.totalorder %s24, 1
      %p230 = por %p228, %p229
      %p232 = scmp.ne.s32.totalorder %s215, %s231
      %p233 = scmp.eq.s32.totalorder %s24, 0
      %p234 = por %p232, %p233
      %p235 = scmp.le.s32.totalorder 1, %s18
      %p236 = scmp.lt.s32.totalorder %s18, 3
      %p237 = pnand %p235, %p236
      %p238 = pneg %p237
      // Predicated region
      $region9: #{conv_lstm_cell_forward.2} parent=5 // pred_check
        _
      $region10: #{conv_lstm_cell_forward.2} parent=5 // pred_check_branch
        %240 = sbr.rel (%p237) target = $region12
      $region11: #{conv_lstm_cell_forward.2} parent=5 // pred_region
        %s241 = ssub.s32 %s18, 1
        // Predicated region
        $region13: #{conv_lstm_cell_forward.2} parent=11 // pred_check
          %p242 = pneg %p91
        $region14: #{conv_lstm_cell_forward.2} parent=11 // pred_check_branch
          %244 = sbr.rel (%p242) target = $region16
        $region15: #{conv_lstm_cell_forward.2} parent=11 // pred_region
          _
        $region16: #{conv_lstm_cell_forward.2} parent=11 // pred_fallthru
          _
        // Predicated region
        $region17: #{conv_lstm_cell_forward.2} parent=11 // pred_check
          %p245 = pneg %p112
        $region18: #{conv_lstm_cell_forward.2} parent=11 // pred_check_branch
          %247 = sbr.rel (%p245) target = $region20
        $region19: #{conv_lstm_cell_forward.2} parent=11 // pred_region
          _
        $region20: #{conv_lstm_cell_forward.2} parent=11 // pred_fallthru
          _
        // Predicated region
        $region21: #{conv_lstm_cell_forward.2} parent=11 // pred_check
          %p248 = pneg %p133
        $region22: #{conv_lstm_cell_forward.2} parent=11 // pred_check_branch
          %250 = sbr.rel (%p248) target = $region24
        $region23: #{conv_lstm_cell_forward.2} parent=11 // pred_region
          _
        $region24: #{conv_lstm_cell_forward.2} parent=11 // pred_fallthru
          _
        // Predicated region
        $region25: #{conv_lstm_cell_forward.2} parent=11 // pred_check
          %p251 = pneg %p154
        $region26: #{conv_lstm_cell_forward.2} parent=11 // pred_check_branch
          %253 = sbr.rel (%p251) target = $region28
        $region27: #{conv_lstm_cell_forward.2} parent=11 // pred_region
          _
        $region28: #{conv_lstm_cell_forward.2} parent=11 // pred_fallthru
          _
        // Predicated region
        $region29: #{conv_lstm_cell_forward.2} parent=11 // pred_check
          %p254 = pneg %p175
        $region30: #{conv_lstm_cell_forward.2} parent=11 // pred_check_branch
          %256 = sbr.rel (%p254) target = $region32
        $region31: #{conv_lstm_cell_forward.2} parent=11 // pred_region
          _
        $region32: #{conv_lstm_cell_forward.2} parent=11 // pred_fallthru
          _
      $region12: #{conv_lstm_cell_forward.2} parent=5 // pred_fallthru
        _
      %p257 = scmp.lt.s32.totalorder %s18, 2
      // Predicated region
      $region33: #{conv_lstm_cell_forward.2} parent=5 // pred_check
        %p258 = pneg %p257
      $region34: #{conv_lstm_cell_forward.2} parent=5 // pred_check_branch
        %260 = sbr.rel (%p258) target = $region36
      $region35: #{conv_lstm_cell_forward.2} parent=5 // pred_region
        // Predicated region
        $region37: #{conv_lstm_cell_forward.2} parent=35 // pred_check
          %p261 = pneg %p38
        $region38: #{conv_lstm_cell_forward.2} parent=35 // pred_check_branch
          %263 = sbr.rel (%p261) target = $region40
        $region39: #{conv_lstm_cell_forward.2} parent=35 // pred_region
          %p264 = scmp.lt.s32.totalorder %s18, 1
          %s265 = scalar_select %p264, %s18, 1
          %s266 = smul.addr %s265, 54
          %s267 = smul.addr %s266, 8
          %s268 = scalar_lea.vmem %s0, %s267
        $region40: #{conv_lstm_cell_forward.2} parent=35 // pred_fallthru
          _
        // Predicated region
        $region41: #{conv_lstm_cell_forward.2} parent=35 // pred_check
          %p269 = pneg %p64
        $region42: #{conv_lstm_cell_forward.2} parent=35 // pred_check_branch
          %271 = sbr.rel (%p269) target = $region44
        $region43: #{conv_lstm_cell_forward.2} parent=35 // pred_region
          %p272 = scmp.lt.s32.totalorder %s18, 1
          %s273 = scalar_select %p272, %s18, 1
          %s274 = smul.addr %s273, 32
          %s275 = smul.addr %s274, 8
          %s276 = scalar_lea.vmem %s1, %s275
        $region44: #{conv_lstm_cell_forward.2} parent=35 // pred_fallthru
          _
      $region36: #{conv_lstm_cell_forward.2} parent=5 // pred_fallthru
        _
      %p277 = scmp.le.s32.totalorder 1, %s18
      %p278 = scmp.lt.s32.totalorder %s18, 3
      %p279 = pnand %p277, %p278
      %p280 = pneg %p279
      // Predicated region
      $region45: #{conv_lstm_cell_forward.2} parent=5 // pred_check
        _
      $region46: #{conv_lstm_cell_forward.2} parent=5 // pred_check_branch
        %282 = sbr.rel (%p279) target = $region48
      $region47: #{conv_lstm_cell_forward.2} parent=5 // pred_region
        %s283 = ssub.s32 %s18, 1
        %p284 = scmp.lt.s32.totalorder %s23, 1
        %s285 = scalar_select %p284, %s23, 1
        %s286 = smul.addr %s285, 54
        %s287 = smul.addr %s286, 8
        %s288 = scalar_lea.vmem %s0, %s287
        %p289 = pneg %p44
        %p290 = pneg %p41
        %p291 = scmp.lt.s32.totalorder %s23, 1
        %s292 = scalar_select %p291, %s23, 1
        %s293 = smul.addr %s292, 32
        %s294 = smul.addr %s293, 8
        %s295 = scalar_lea.vmem %s1, %s294
        %p296 = pneg %p70
        %p297 = pneg %p67
        %p298 = pneg %p91
        %p299 = pneg %p88
        %p300 = pneg %p112
        %p301 = pneg %p109
        %p302 = pneg %p133
        %p303 = pneg %p130
        %p304 = pneg %p154
        %p305 = pneg %p151
        %p306 = pneg %p175
        %p307 = pneg %p172
        %p308 = pneg %p201
        %p309 = pneg %p198
        %p310 = scmp.lt.s32.totalorder %s23, 1
        %s311 = scalar_select %p310, %s23, 1
        %s312 = smul.addr %s311, 32
        %s313 = smul.addr %s312, 8
        %s314 = scalar_lea.vmem %s7, %s313
        %p315 = pneg %p227
        %p316 = pneg %p224
        %s317 = sand.u32 %s214, 1
        %s318 = scalar_lea.sflag [#allocation3], %s317
        %s319 = sand.u32 %s214, 1
        %s320 = smul.addr %s319, 256
        %s321 = scalar_lea.vmem [#allocation2], %s320
        %p322 = scmp.lt.s32.totalorder %s23, 1
        %s323 = scalar_select %p322, %s23, 1
        %s324 = smul.addr %s323, 54
        %s325 = smul.addr %s324, 8
        %s326 = scalar_lea.vmem %s0, %s325
        %p327 = scmp.lt.s32.totalorder %s23, 1
        %s328 = scalar_select %p327, %s23, 1
        %s329 = smul.addr %s328, 32
        %s330 = smul.addr %s329, 8
        %s331 = scalar_lea.vmem %s1, %s330
        %p332 = scmp.lt.s32.totalorder %s23, 1
        %s333 = scalar_select %p332, %s23, 1
        %s334 = smul.addr %s333, 32
        %s335 = smul.addr %s334, 8
        %s336 = scalar_lea.vmem %s7, %s335
        %v338 = vld [vmem:[%s326] sm:$0xff]
        %v339 = vld [vmem:[%s326 + $0x8] sm:$0xff]
        %v340 = vld [vmem:[%s326 + $0x10] sm:$0x3]
        %v341 = vld [vmem:[%s326 + $0x18] sm:$0xff]
        %v342 = vld [vmem:[%s326 + $0x20] sm:$0xff]
        %v343 = vld [vmem:[%s326 + $0x28] sm:$0x3]
        %v344 = vld [vmem:[%s326 + $0x30] sm:$0xff]
        %v345 = vld [vmem:[%s326 + $0x38] sm:$0xff]
        %v346 = vld [vmem:[%s326 + $0x40] sm:$0x3]
        %v347 = vld [vmem:[%s326 + $0x48] sm:$0xff]
        %v348 = vld [vmem:[%s326 + $0x50] sm:$0xff]
        %v349 = vld [vmem:[%s326 + $0x58] sm:$0x3]
        %v350 = vld [vmem:[%s326 + $0x60] sm:$0xff]
        %v351 = vld [vmem:[%s326 + $0x68] sm:$0xff]
        %v352 = vld [vmem:[%s326 + $0x70] sm:$0x3]
        %v353 = vld [vmem:[%s326 + $0x78] sm:$0xff]
        %v354 = vld [vmem:[%s326 + $0x80] sm:$0xff]
        %v355 = vld [vmem:[%s326 + $0x88] sm:$0x3]
        %v356 = vld [vmem:[%s326 + $0x90] sm:$0xff]
        %v357 = vld [vmem:[%s326 + $0x98] sm:$0xff]
        %v358 = vld [vmem:[%s326 + $0xa0] sm:$0x3]
        %v359 = vld [vmem:[%s326 + $0xa8] sm:$0xff]
        %v360 = vld [vmem:[%s326 + $0xb0] sm:$0xff]
        %v361 = vld [vmem:[%s326 + $0xb8] sm:$0x3]
        %v362 = vld [vmem:[%s326 + $0xc0] sm:$0xff]
        %v363 = vld [vmem:[%s326 + $0xc8] sm:$0xff]
        %v364 = vld [vmem:[%s326 + $0xd0] sm:$0x3]
        %v365 = vld [vmem:[%s326 + $0xd8] sm:$0xff]
        %v366 = vld [vmem:[%s326 + $0xe0] sm:$0xff]
        %v367 = vld [vmem:[%s326 + $0xe8] sm:$0x3]
        %v368 = vld [vmem:[%s326 + $0xf0] sm:$0xff]
        %v369 = vld [vmem:[%s326 + $0xf8] sm:$0xff]
        %v370 = vld [vmem:[%s326 + $0x100] sm:$0x3]
        %v371 = vld [vmem:[%s326 + $0x108] sm:$0xff]
        %v372 = vld [vmem:[%s326 + $0x110] sm:$0xff]
        %v373 = vld [vmem:[%s326 + $0x118] sm:$0x3]
        %v374 = vld [vmem:[%s326 + $0x120] sm:$0xff]
        %v375 = vld [vmem:[%s326 + $0x128] sm:$0xff]
        %v376 = vld [vmem:[%s326 + $0x130] sm:$0x3]
        %v377 = vld [vmem:[%s326 + $0x138] sm:$0xff]
        %v378 = vld [vmem:[%s326 + $0x140] sm:$0xff]
        %v379 = vld [vmem:[%s326 + $0x148] sm:$0x3]
        %v380 = vld [vmem:[%s326 + $0x150] sm:$0xff]
        %v381 = vld [vmem:[%s326 + $0x158] sm:$0xff]
        %v382 = vld [vmem:[%s326 + $0x160] sm:$0x3]
        %v383 = vld [vmem:[%s326 + $0x168] sm:$0xff]
        %v384 = vld [vmem:[%s326 + $0x170] sm:$0xff]
        %v385 = vld [vmem:[%s326 + $0x178] sm:$0x3]
        %v386 = vld [vmem:[%s326 + $0x180] sm:$0xff]
        %v387 = vld [vmem:[%s326 + $0x188] sm:$0xff]
        %v388 = vld [vmem:[%s326 + $0x190] sm:$0x3]
        %v389 = vld [vmem:[%s326 + $0x198] sm:$0xff]
        %v390 = vld [vmem:[%s326 + $0x1a0] sm:$0xff]
        %v391 = vld [vmem:[%s326 + $0x1a8] sm:$0x3]
        %v392 = vld [vmem:[%s2] sm:$0xf]
        %v393 = vld [vmem:[%s2 + $0x4] sm:$0xf]
        %v394 = vld [vmem:[%s2 + $0x8] sm:$0xf]
        %v395 = vld [vmem:[%s2 + $0xc] sm:$0xf]
        %v396 = vld [vmem:[%s2 + $0x10] sm:$0x3]
        %v397 = vld [vmem:[%s2 + $0x14] sm:$0xf]
        %v398 = vld [vmem:[%s2 + $0x18] sm:$0xf]
        %v399 = vld [vmem:[%s2 + $0x1c] sm:$0xf]
        %v400 = vld [vmem:[%s2 + $0x20] sm:$0xf]
        %v401 = vld [vmem:[%s2 + $0x24] sm:$0x3]
        %v402 = vld [vmem:[%s2 + $0x28] sm:$0xf]
        %v403 = vld [vmem:[%s2 + $0x2c] sm:$0xf]
        %v404 = vld [vmem:[%s2 + $0x30] sm:$0xf]
        %v405 = vld [vmem:[%s2 + $0x34] sm:$0xf]
        %v406 = vld [vmem:[%s2 + $0x38] sm:$0x3]
        %v407 = vld [vmem:[%s2 + $0x3c] sm:$0xf]
        %v408 = vld [vmem:[%s2 + $0x40] sm:$0xf]
        %v409 = vld [vmem:[%s2 + $0x44] sm:$0xf]
        %v410 = vld [vmem:[%s2 + $0x48] sm:$0xf]
        %v411 = vld [vmem:[%s2 + $0x4c] sm:$0x3]
        %v412 = vld [vmem:[%s2 + $0x50] sm:$0xf]
        %v413 = vld [vmem:[%s2 + $0x54] sm:$0xf]
        %v414 = vld [vmem:[%s2 + $0x58] sm:$0xf]
        %v415 = vld [vmem:[%s2 + $0x5c] sm:$0xf]
        %v416 = vld [vmem:[%s2 + $0x60] sm:$0x3]
        %v417 = vld [vmem:[%s2 + $0x64] sm:$0xf]
        %v418 = vld [vmem:[%s2 + $0x68] sm:$0xf]
        %v419 = vld [vmem:[%s2 + $0x6c] sm:$0xf]
        %v420 = vld [vmem:[%s2 + $0x70] sm:$0xf]
        %v421 = vld [vmem:[%s2 + $0x74] sm:$0x3]
        %v422 = vld [vmem:[%s2 + $0x78] sm:$0xf]
        %v423 = vld [vmem:[%s2 + $0x7c] sm:$0xf]
        %v424 = vld [vmem:[%s2 + $0x80] sm:$0xf]
        %v425 = vld [vmem:[%s2 + $0x84] sm:$0xf]
        %v426 = vld [vmem:[%s2 + $0x88] sm:$0x3]
        %v427 = vld [vmem:[%s2 + $0x8c] sm:$0xf]
        %v428 = vld [vmem:[%s2 + $0x90] sm:$0xf]
        %v429 = vld [vmem:[%s2 + $0x94] sm:$0xf]
        %v430 = vld [vmem:[%s2 + $0x98] sm:$0xf]
        %v431 = vld [vmem:[%s2 + $0x9c] sm:$0x3]
        %v432 = vld [vmem:[%s2 + $0xa0] sm:$0xf]
        %v433 = vld [vmem:[%s2 + $0xa4] sm:$0xf]
        %v434 = vld [vmem:[%s2 + $0xa8] sm:$0xf]
        %v435 = vld [vmem:[%s2 + $0xac] sm:$0xf]
        %v436 = vld [vmem:[%s2 + $0xb0] sm:$0x3]
        %v437 = vpack.c.bf16 %v339, %v338
        %v438 = vpack.c.bf16 %v342, %v341
        %v439 = vpack.c.bf16 %v345, %v344
        %v440 = vpack.c.bf16 %v348, %v347
        %v441 = vpack.c.bf16 %v351, %v350
        %v442 = vpack.c.bf16 %v354, %v353
        %v443 = vpack.c.bf16 %v357, %v356
        %v444 = vpack.c.bf16 %v360, %v359
        %v445 = vpack.c.bf16 %v363, %v362
        %v446 = vpack.c.bf16 %v366, %v365
        %v447 = vpack.c.bf16 %v369, %v368
        %v448 = vpack.c.bf16 %v372, %v371
        %v449 = vpack.c.bf16 %v375, %v374
        %v450 = vpack.c.bf16 %v378, %v377
        %v451 = vpack.c.bf16 %v381, %v380
        %v452 = vpack.c.bf16 %v384, %v383
        %vm501 = vcmask 1046528
        %v502 = vrot.slane %v338, 1
        %v503 = vrot.slane %v339, 1
        %v504 = vsel %vm501, %v502, %v503
        %v505 = vrot.slane %v340, 1
        %v506 = vsel %vm501, %v503, %v505
        %v507 = vrot.slane %v341, 1
        %v508 = vrot.slane %v342, 1
        %v509 = vsel %vm501, %v507, %v508
        %v510 = vrot.slane %v343, 1
        %v511 = vsel %vm501, %v508, %v510
        %v512 = vrot.slane %v344, 1
        %v513 = vrot.slane %v345, 1
        %v514 = vsel %vm501, %v512, %v513
        %v515 = vrot.slane %v346, 1
        %v516 = vsel %vm501, %v513, %v515
        %v517 = vrot.slane %v347, 1
        %v518 = vrot.slane %v348, 1
        %v519 = vsel %vm501, %v517, %v518
        %v520 = vrot.slane %v349, 1
        %v521 = vsel %vm501, %v518, %v520
        %v522 = vrot.slane %v350, 1
        %v523 = vrot.slane %v351, 1
        %v524 = vsel %vm501, %v522, %v523
        %v525 = vrot.slane %v352, 1
        %v526 = vsel %vm501, %v523, %v525
        %v527 = vrot.slane %v353, 1
        %v528 = vrot.slane %v354, 1
        %v529 = vsel %vm501, %v527, %v528
        %v530 = vrot.slane %v355, 1
        %v531 = vsel %vm501, %v528, %v530
        %v532 = vrot.slane %v356, 1
        %v533 = vrot.slane %v357, 1
        %v534 = vsel %vm501, %v532, %v533
        %v535 = vrot.slane %v358, 1
        %v536 = vsel %vm501, %v533, %v535
        %v537 = vrot.slane %v359, 1
        %v538 = vrot.slane %v360, 1
        %v539 = vsel %vm501, %v537, %v538
        %v540 = vrot.slane %v361, 1
        %v541 = vsel %vm501, %v538, %v540
        %v542 = vrot.slane %v362, 1
        %v543 = vrot.slane %v363, 1
        %v544 = vsel %vm501, %v542, %v543
        %v545 = vrot.slane %v364, 1
        %v546 = vsel %vm501, %v543, %v545
        %v547 = vrot.slane %v365, 1
        %v548 = vrot.slane %v366, 1
        %v549 = vsel %vm501, %v547, %v548
        %v550 = vrot.slane %v367, 1
        %v551 = vsel %vm501, %v548, %v550
        %v552 = vrot.slane %v368, 1
        %v553 = vrot.slane %v369, 1
        %v554 = vsel %vm501, %v552, %v553
        %v555 = vrot.slane %v370, 1
        %v556 = vsel %vm501, %v553, %v555
        %v557 = vrot.slane %v371, 1
        %v558 = vrot.slane %v372, 1
        %v559 = vsel %vm501, %v557, %v558
        %v560 = vrot.slane %v373, 1
        %v561 = vsel %vm501, %v558, %v560
        %v562 = vrot.slane %v374, 1
        %v563 = vrot.slane %v375, 1
        %v564 = vsel %vm501, %v562, %v563
        %v565 = vrot.slane %v376, 1
        %v566 = vsel %vm501, %v563, %v565
        %v567 = vrot.slane %v377, 1
        %v568 = vrot.slane %v378, 1
        %v569 = vsel %vm501, %v567, %v568
        %v570 = vrot.slane %v379, 1
        %v571 = vsel %vm501, %v568, %v570
        %v572 = vrot.slane %v380, 1
        %v573 = vrot.slane %v381, 1
        %v574 = vsel %vm501, %v572, %v573
        %v575 = vrot.slane %v382, 1
        %v576 = vsel %vm501, %v573, %v575
        %v577 = vrot.slane %v383, 1
        %v578 = vrot.slane %v384, 1
        %v579 = vsel %vm501, %v577, %v578
        %v580 = vrot.slane %v385, 1
        %v581 = vsel %vm501, %v578, %v580
        %v614 = vpack.c.bf16 %v506, %v504
        %v615 = vpack.c.bf16 %v511, %v509
        %v616 = vpack.c.bf16 %v516, %v514
        %v617 = vpack.c.bf16 %v521, %v519
        %v618 = vpack.c.bf16 %v526, %v524
        %v619 = vpack.c.bf16 %v531, %v529
        %v620 = vpack.c.bf16 %v536, %v534
        %v621 = vpack.c.bf16 %v541, %v539
        %v622 = vpack.c.bf16 %v546, %v544
        %v623 = vpack.c.bf16 %v551, %v549
        %v624 = vpack.c.bf16 %v556, %v554
        %v625 = vpack.c.bf16 %v561, %v559
        %v626 = vpack.c.bf16 %v566, %v564
        %v627 = vpack.c.bf16 %v571, %v569
        %v628 = vpack.c.bf16 %v576, %v574
        %v629 = vpack.c.bf16 %v581, %v579
        %v635 = vunpack.c.l.b16 %v397
        %v636 = vunpack.c.l.b16 %v398
        %v637 = vunpack.c.l.b16 %v399
        %v638 = vunpack.c.l.b16 %v400
        %v639 = vunpack.c.l.b16 %v401
        %v640 = vpack.c.b16 %v636, %v635
        %v641 = vpack.c.b16 %v638, %v637
        %v642 = vpack.c.b16 %v639, %v639
        %vm645 = vcmask 293888
        %v647 = vsel %vm645, %v614, 0
        %v650 = vsel %vm645, %v615, 0
        %v653 = vsel %vm645, %v616, 0
        %v656 = vsel %vm645, %v617, 0
        %v659 = vsel %vm645, %v618, 0
        %v662 = vsel %vm645, %v619, 0
        %v665 = vsel %vm645, %v620, 0
        %v668 = vsel %vm645, %v621, 0
        %v671 = vsel %vm645, %v622, 0
        %v674 = vsel %vm645, %v623, 0
        %v677 = vsel %vm645, %v624, 0
        %v680 = vsel %vm645, %v625, 0
        %v683 = vsel %vm645, %v626, 0
        %v686 = vsel %vm645, %v627, 0
        %v689 = vsel %vm645, %v628, 0
        %v692 = vsel %vm645, %v629, 0
        %vm694 = vcmask 1041408
        %v696 = vsel %vm694, %v642, 0
        %698 = vmatprep.subr.bf16.mxu0 0
        %699 = vmatpush1.bf16.msra.mxu0 0
        %700 = vmatprep.subr.bf16.mxu0 0
        %701 = vmatpush1.bf16.msra.mxu0 0
        %702 = vmatprep.subr.bf16.mxu0 0
        %703 = vmatpush1.bf16.msra.mxu0 0
        %704 = vmatprep.subr.bf16.mxu0 0
        %705 = vmatpush1.bf16.msra.mxu0 0
        %706 = vmatprep.subr.bf16.mxu0 0
        %707 = vmatpush1.bf16.msra.mxu0 0
        %708 = vmatprep.subr.bf16.mxu0 0
        %709 = vmatpush1.bf16.msra.mxu0 %v696
        %710 = vmatprep.subr.bf16.mxu0 0
        %711 = vmatpush1.bf16.msra.mxu0 %v641
        %712 = vmatprep.subr.bf16.mxu0 0
        %713 = vmatpush1.bf16.msra.mxu0 %v640
        %714 = vmatprep.subr.bf16.mxu0 0
        %715 = vmatpush2.bf16.msra.mxu0 0
        %716 = vmatprep.subr.bf16.mxu0 0
        %717 = vmatpush2.bf16.msra.mxu0 0
        %718 = vmatprep.subr.bf16.mxu0 0
        %719 = vmatpush2.bf16.msra.mxu0 0
        %720 = vmatprep.subr.bf16.mxu0 0
        %721 = vmatpush2.bf16.msra.mxu0 0
        %722 = vmatprep.subr.bf16.mxu0 0
        %723 = vmatpush2.bf16.msra.mxu0 0
        %724 = vmatprep.subr.bf16.mxu0 0
        %725 = vmatpush2.bf16.msra.mxu0 0
        %726 = vmatprep.subr.bf16.mxu0 0
        %727 = vmatpush2.bf16.msra.mxu0 0
        %728 = vmatprep.subr.bf16.mxu0 0
        %729 = vmatpush2.bf16.msra.mxu0 0
        %730 = vmatprep.mubr.bf16.mxu0 0
        %731 = vmatmul.mubr.bf16.gmra.mxu0 %v647
        %v732 = vpop.f32.mrf.mxu0
        %v733 = vadd.f32 0.0, %v732
        %v734 = vpop.f32.mrf.mxu0
        %v735 = vpop.f32.mrf.mxu0
        %v736 = vadd.f32 0.0, %v735
        %v737 = vpop.f32.mrf.mxu0
        %738 = vmatprep.mubr.bf16.mxu0 0
        %739 = vmatmul.mubr.bf16.gmra.mxu0 %v650
        %v740 = vpop.f32.mrf.mxu0
        %v741 = vadd.f32 0.0, %v740
        %v742 = vpop.f32.mrf.mxu0
        %v743 = vpop.f32.mrf.mxu0
        %v744 = vadd.f32 0.0, %v743
        %v745 = vpop.f32.mrf.mxu0
        %746 = vmatprep.mubr.bf16.mxu0 0
        %747 = vmatmul.mubr.bf16.gmra.mxu0 %v653
        %v748 = vpop.f32.mrf.mxu0
        %v749 = vadd.f32 0.0, %v748
        %v750 = vpop.f32.mrf.mxu0
        %v751 = vpop.f32.mrf.mxu0
        %v752 = vadd.f32 0.0, %v751
        %v753 = vpop.f32.mrf.mxu0
        %754 = vmatprep.mubr.bf16.mxu0 0
        %755 = vmatmul.mubr.bf16.gmra.mxu0 %v656
        %v756 = vpop.f32.mrf.mxu0
        %v757 = vadd.f32 0.0, %v756
        %v758 = vpop.f32.mrf.mxu0
        %v759 = vpop.f32.mrf.mxu0
        %v760 = vadd.f32 0.0, %v759
        %v761 = vpop.f32.mrf.mxu0
        %762 = vmatprep.mubr.bf16.mxu0 0
        %763 = vmatmul.mubr.bf16.gmra.mxu0 %v659
        %v764 = vpop.f32.mrf.mxu0
        %v765 = vadd.f32 0.0, %v764
        %v766 = vpop.f32.mrf.mxu0
        %v767 = vpop.f32.mrf.mxu0
        %v768 = vadd.f32 0.0, %v767
        %v769 = vpop.f32.mrf.mxu0
        %770 = vmatprep.mubr.bf16.mxu0 0
        %771 = vmatmul.mubr.bf16.gmra.mxu0 %v662
        %v772 = vpop.f32.mrf.mxu0
        %v773 = vadd.f32 0.0, %v772
        %v774 = vpop.f32.mrf.mxu0
        %v775 = vpop.f32.mrf.mxu0
        %v776 = vadd.f32 0.0, %v775
        %v777 = vpop.f32.mrf.mxu0
        %778 = vmatprep.mubr.bf16.mxu0 0
        %779 = vmatmul.mubr.bf16.gmra.mxu0 %v665
        %v780 = vpop.f32.mrf.mxu0
        %v781 = vadd.f32 0.0, %v780
        %v782 = vpop.f32.mrf.mxu0
        %v783 = vpop.f32.mrf.mxu0
        %v784 = vadd.f32 0.0, %v783
        %v785 = vpop.f32.mrf.mxu0
        %786 = vmatprep.mubr.bf16.mxu0 0
        %787 = vmatmul.mubr.bf16.gmra.mxu0 %v668
        %v788 = vpop.f32.mrf.mxu0
        %v789 = vadd.f32 0.0, %v788
        %v790 = vpop.f32.mrf.mxu0
        %v791 = vpop.f32.mrf.mxu0
        %v792 = vadd.f32 0.0, %v791
        %v793 = vpop.f32.mrf.mxu0
        %794 = vmatprep.mubr.bf16.mxu0 0
        %795 = vmatmul.mubr.bf16.gmra.mxu0 %v671
        %v796 = vpop.f32.mrf.mxu0
        %v797 = vadd.f32 0.0, %v796
        %v798 = vpop.f32.mrf.mxu0
        %v799 = vpop.f32.mrf.mxu0
        %v800 = vadd.f32 0.0, %v799
        %v801 = vpop.f32.mrf.mxu0
        %802 = vmatprep.mubr.bf16.mxu0 0
        %803 = vmatmul.mubr.bf16.gmra.mxu0 %v674
        %v804 = vpop.f32.mrf.mxu0
        %v805 = vadd.f32 0.0, %v804
        %v806 = vpop.f32.mrf.mxu0
        %v807 = vpop.f32.mrf.mxu0
        %v808 = vadd.f32 0.0, %v807
        %v809 = vpop.f32.mrf.mxu0
        %810 = vmatprep.mubr.bf16.mxu0 0
        %811 = vmatmul.mubr.bf16.gmra.mxu0 %v677
        %v812 = vpop.f32.mrf.mxu0
        %v813 = vadd.f32 0.0, %v812
        %v814 = vpop.f32.mrf.mxu0
        %v815 = vpop.f32.mrf.mxu0
        %v816 = vadd.f32 0.0, %v815
        %v817 = vpop.f32.mrf.mxu0
        %818 = vmatprep.mubr.bf16.mxu0 0
        %819 = vmatmul.mubr.bf16.gmra.mxu0 %v680
        %v820 = vpop.f32.mrf.mxu0
        %v821 = vadd.f32 0.0, %v820
        %v822 = vpop.f32.mrf.mxu0
        %v823 = vpop.f32.mrf.mxu0
        %v824 = vadd.f32 0.0, %v823
        %v825 = vpop.f32.mrf.mxu0
        %826 = vmatprep.mubr.bf16.mxu0 0
        %827 = vmatmul.mubr.bf16.gmra.mxu0 %v683
        %v828 = vpop.f32.mrf.mxu0
        %v829 = vadd.f32 0.0, %v828
        %v830 = vpop.f32.mrf.mxu0
        %v831 = vpop.f32.mrf.mxu0
        %v832 = vadd.f32 0.0, %v831
        %v833 = vpop.f32.mrf.mxu0
        %834 = vmatprep.mubr.bf16.mxu0 0
        %835 = vmatmul.mubr.bf16.gmra.mxu0 %v686
        %v836 = vpop.f32.mrf.mxu0
        %v837 = vadd.f32 0.0, %v836
        %v838 = vpop.f32.mrf.mxu0
        %v839 = vpop.f32.mrf.mxu0
        %v840 = vadd.f32 0.0, %v839
        %v841 = vpop.f32.mrf.mxu0
        %842 = vmatprep.mubr.bf16.mxu0 0
        %843 = vmatmul.mubr.bf16.gmra.mxu0 %v689
        %v844 = vpop.f32.mrf.mxu0
        %v845 = vadd.f32 0.0, %v844
        %v846 = vpop.f32.mrf.mxu0
        %v847 = vpop.f32.mrf.mxu0
        %v848 = vadd.f32 0.0, %v847
        %v849 = vpop.f32.mrf.mxu0
        %850 = vmatprep.mubr.bf16.mxu0 0
        %851 = vmatmul.mubr.bf16.gmra.mxu0 %v692
        %v852 = vpop.f32.mrf.mxu0
        %v853 = vadd.f32 0.0, %v852
        %v854 = vpop.f32.mrf.mxu0
        %v855 = vpop.f32.mrf.mxu0
        %v856 = vadd.f32 0.0, %v855
        %v857 = vpop.f32.mrf.mxu0
        %858 = vdwg.mxu0
        %v864 = vunpack.c.l.b16 %v392
        %v865 = vunpack.c.l.b16 %v393
        %v866 = vunpack.c.l.b16 %v394
        %v867 = vunpack.c.l.b16 %v395
        %v868 = vunpack.c.l.b16 %v396
        %v869 = vpack.c.b16 %v865, %v864
        %v870 = vpack.c.b16 %v867, %v866
        %v871 = vpack.c.b16 %v868, %v868
        %v875 = vsel %vm645, %v437, 0
        %v878 = vsel %vm645, %v438, 0
        %v881 = vsel %vm645, %v439, 0
        %v884 = vsel %vm645, %v440, 0
        %v887 = vsel %vm645, %v441, 0
        %v890 = vsel %vm645, %v442, 0
        %v893 = vsel %vm645, %v443, 0
        %v896 = vsel %vm645, %v444, 0
        %v899 = vsel %vm645, %v445, 0
        %v902 = vsel %vm645, %v446, 0
        %v905 = vsel %vm645, %v447, 0
        %v908 = vsel %vm645, %v448, 0
        %v911 = vsel %vm645, %v449, 0
        %v914 = vsel %vm645, %v450, 0
        %v917 = vsel %vm645, %v451, 0
        %v920 = vsel %vm645, %v452, 0
        %v923 = vsel %vm694, %v871, 0
        %925 = vmatprep.subr.bf16.mxu0 0
        %926 = vmatpush1.bf16.msra.mxu0 0
        %927 = vmatprep.subr.bf16.mxu0 0
        %928 = vmatpush1.bf16.msra.mxu0 0
        %929 = vmatprep.subr.bf16.mxu0 0
        %930 = vmatpush1.bf16.msra.mxu0 0
        %931 = vmatprep.subr.bf16.mxu0 0
        %932 = vmatpush1.bf16.msra.mxu0 0
        %933 = vmatprep.subr.bf16.mxu0 0
        %934 = vmatpush1.bf16.msra.mxu0 0
        %935 = vmatprep.subr.bf16.mxu0 0
        %936 = vmatpush1.bf16.msra.mxu0 %v923
        %937 = vmatprep.subr.bf16.mxu0 0
        %938 = vmatpush1.bf16.msra.mxu0 %v870
        %939 = vmatprep.subr.bf16.mxu0 0
        %940 = vmatpush1.bf16.msra.mxu0 %v869
        %941 = vmatprep.subr.bf16.mxu0 0
        %942 = vmatpush2.bf16.msra.mxu0 0
        %943 = vmatprep.subr.bf16.mxu0 0
        %944 = vmatpush2.bf16.msra.mxu0 0
        %945 = vmatprep.subr.bf16.mxu0 0
        %946 = vmatpush2.bf16.msra.mxu0 0
        %947 = vmatprep.subr.bf16.mxu0 0
        %948 = vmatpush2.bf16.msra.mxu0 0
        %949 = vmatprep.subr.bf16.mxu0 0
        %950 = vmatpush2.bf16.msra.mxu0 0
        %951 = vmatprep.subr.bf16.mxu0 0
        %952 = vmatpush2.bf16.msra.mxu0 0
        %953 = vmatprep.subr.bf16.mxu0 0
        %954 = vmatpush2.bf16.msra.mxu0 0
        %955 = vmatprep.subr.bf16.mxu0 0
        %956 = vmatpush2.bf16.msra.mxu0 0
        %957 = vmatprep.mubr.bf16.mxu0 0
        %958 = vmatmul.mubr.bf16.gmra.mxu0 %v875
        %v959 = vpop.f32.mrf.mxu0
        %v960 = vadd.f32 %v733, %v959
        %v961 = vpop.f32.mrf.mxu0
        %v962 = vpop.f32.mrf.mxu0
        %v963 = vadd.f32 %v736, %v962
        %v964 = vpop.f32.mrf.mxu0
        %965 = vmatprep.mubr.bf16.mxu0 0
        %966 = vmatmul.mubr.bf16.gmra.mxu0 %v878
        %v967 = vpop.f32.mrf.mxu0
        %v968 = vadd.f32 %v741, %v967
        %v969 = vpop.f32.mrf.mxu0
        %v970 = vpop.f32.mrf.mxu0
        %v971 = vadd.f32 %v744, %v970
        %v972 = vpop.f32.mrf.mxu0
        %973 = vmatprep.mubr.bf16.mxu0 0
        %974 = vmatmul.mubr.bf16.gmra.mxu0 %v881
        %v975 = vpop.f32.mrf.mxu0
        %v976 = vadd.f32 %v749, %v975
        %v977 = vpop.f32.mrf.mxu0
        %v978 = vpop.f32.mrf.mxu0
        %v979 = vadd.f32 %v752, %v978
        %v980 = vpop.f32.mrf.mxu0
        %981 = vmatprep.mubr.bf16.mxu0 0
        %982 = vmatmul.mubr.bf16.gmra.mxu0 %v884
        %v983 = vpop.f32.mrf.mxu0
        %v984 = vadd.f32 %v757, %v983
        %v985 = vpop.f32.mrf.mxu0
        %v986 = vpop.f32.mrf.mxu0
        %v987 = vadd.f32 %v760, %v986
        %v988 = vpop.f32.mrf.mxu0
        %989 = vmatprep.mubr.bf16.mxu0 0
        %990 = vmatmul.mubr.bf16.gmra.mxu0 %v887
        %v991 = vpop.f32.mrf.mxu0
        %v992 = vadd.f32 %v765, %v991
        %v993 = vpop.f32.mrf.mxu0
        %v994 = vpop.f32.mrf.mxu0
        %v995 = vadd.f32 %v768, %v994
        %v996 = vpop.f32.mrf.mxu0
        %997 = vmatprep.mubr.bf16.mxu0 0
        %998 = vmatmul.mubr.bf16.gmra.mxu0 %v890
        %v999 = vpop.f32.mrf.mxu0
        %v1000 = vadd.f32 %v773, %v999
        %v1001 = vpop.f32.mrf.mxu0
        %v1002 = vpop.f32.mrf.mxu0
        %v1003 = vadd.f32 %v776, %v1002
        %v1004 = vpop.f32.mrf.mxu0
        %1005 = vmatprep.mubr.bf16.mxu0 0
        %1006 = vmatmul.mubr.bf16.gmra.mxu0 %v893
        %v1007 = vpop.f32.mrf.mxu0
        %v1008 = vadd.f32 %v781, %v1007
        %v1009 = vpop.f32.mrf.mxu0
        %v1010 = vpop.f32.mrf.mxu0
        %v1011 = vadd.f32 %v784, %v1010
        %v1012 = vpop.f32.mrf.mxu0
        %1013 = vmatprep.mubr.bf16.mxu0 0
        %1014 = vmatmul.mubr.bf16.gmra.mxu0 %v896
        %v1015 = vpop.f32.mrf.mxu0
        %v1016 = vadd.f32 %v789, %v1015
        %v1017 = vpop.f32.mrf.mxu0
        %v1018 = vpop.f32.mrf.mxu0
        %v1019 = vadd.f32 %v792, %v1018
        %v1020 = vpop.f32.mrf.mxu0
        %1021 = vmatprep.mubr.bf16.mxu0 0
        %1022 = vmatmul.mubr.bf16.gmra.mxu0 %v899
        %v1023 = vpop.f32.mrf.mxu0
        %v1024 = vadd.f32 %v797, %v1023
        %v1025 = vpop.f32.mrf.mxu0
        %v1026 = vpop.f32.mrf.mxu0
        %v1027 = vadd.f32 %v800, %v1026
        %v1028 = vpop.f32.mrf.mxu0
        %1029 = vmatprep.mubr.bf16.mxu0 0
        %1030 = vmatmul.mubr.bf16.gmra.mxu0 %v902
        %v1031 = vpop.f32.mrf.mxu0
        %v1032 = vadd.f32 %v805, %v1031
        %v1033 = vpop.f32.mrf.mxu0
        %v1034 = vpop.f32.mrf.mxu0
        %v1035 = vadd.f32 %v808, %v1034
        %v1036 = vpop.f32.mrf.mxu0
        %1037 = vmatprep.mubr.bf16.mxu0 0
        %1038 = vmatmul.mubr.bf16.gmra.mxu0 %v905
        %v1039 = vpop.f32.mrf.mxu0
        %v1040 = vadd.f32 %v813, %v1039
        %v1041 = vpop.f32.mrf.mxu0
        %v1042 = vpop.f32.mrf.mxu0
        %v1043 = vadd.f32 %v816, %v1042
        %v1044 = vpop.f32.mrf.mxu0
        %1045 = vmatprep.mubr.bf16.mxu0 0
        %1046 = vmatmul.mubr.bf16.gmra.mxu0 %v908
        %v1047 = vpop.f32.mrf.mxu0
        %v1048 = vadd.f32 %v821, %v1047
        %v1049 = vpop.f32.mrf.mxu0
        %v1050 = vpop.f32.mrf.mxu0
        %v1051 = vadd.f32 %v824, %v1050
        %v1052 = vpop.f32.mrf.mxu0
        %1053 = vmatprep.mubr.bf16.mxu0 0
        %1054 = vmatmul.mubr.bf16.gmra.mxu0 %v911
        %v1055 = vpop.f32.mrf.mxu0
        %v1056 = vadd.f32 %v829, %v1055
        %v1057 = vpop.f32.mrf.mxu0
        %v1058 = vpop.f32.mrf.mxu0
        %v1059 = vadd.f32 %v832, %v1058
        %v1060 = vpop.f32.mrf.mxu0
        %1061 = vmatprep.mubr.bf16.mxu0 0
        %1062 = vmatmul.mubr.bf16.gmra.mxu0 %v914
        %v1063 = vpop.f32.mrf.mxu0
        %v1064 = vadd.f32 %v837, %v1063
        %v1065 = vpop.f32.mrf.mxu0
        %v1066 = vpop.f32.mrf.mxu0
        %v1067 = vadd.f32 %v840, %v1066
        %v1068 = vpop.f32.mrf.mxu0
        %1069 = vmatprep.mubr.bf16.mxu0 0
        %1070 = vmatmul.mubr.bf16.gmra.mxu0 %v917
        %v1071 = vpop.f32.mrf.mxu0
        %v1072 = vadd.f32 %v845, %v1071
        %v1073 = vpop.f32.mrf.mxu0
        %v1074 = vpop.f32.mrf.mxu0
        %v1075 = vadd.f32 %v848, %v1074
        %v1076 = vpop.f32.mrf.mxu0
        %1077 = vmatprep.mubr.bf16.mxu0 0
        %1078 = vmatmul.mubr.bf16.gmra.mxu0 %v920
        %v1079 = vpop.f32.mrf.mxu0
        %v1080 = vadd.f32 %v853, %v1079
        %v1081 = vpop.f32.mrf.mxu0
        %v1082 = vpop.f32.mrf.mxu0
        %v1083 = vadd.f32 %v856, %v1082
        %v1084 = vpop.f32.mrf.mxu0
        %1085 = vdwg.mxu0
        %vm1086 = vcmask 1045504
        %v1087 = vrot.slane %v338, 2
        %v1088 = vrot.slane %v339, 2
        %v1089 = vsel %vm1086, %v1087, %v1088
        %v1090 = vrot.slane %v340, 2
        %v1091 = vsel %vm1086, %v1088, %v1090
        %v1092 = vrot.slane %v341, 2
        %v1093 = vrot.slane %v342, 2
        %v1094 = vsel %vm1086, %v1092, %v1093
        %v1095 = vrot.slane %v343, 2
        %v1096 = vsel %vm1086, %v1093, %v1095
        %v1097 = vrot.slane %v344, 2
        %v1098 = vrot.slane %v345, 2
        %v1099 = vsel %vm1086, %v1097, %v1098
        %v1100 = vrot.slane %v346, 2
        %v1101 = vsel %vm1086, %v1098, %v1100
        %v1102 = vrot.slane %v347, 2
        %v1103 = vrot.slane %v348, 2
        %v1104 = vsel %vm1086, %v1102, %v1103
        %v1105 = vrot.slane %v349, 2
        %v1106 = vsel %vm1086, %v1103, %v1105
        %v1107 = vrot.slane %v350, 2
        %v1108 = vrot.slane %v351, 2
        %v1109 = vsel %vm1086, %v1107, %v1108
        %v1110 = vrot.slane %v352, 2
        %v1111 = vsel %vm1086, %v1108, %v1110
        %v1112 = vrot.slane %v353, 2
        %v1113 = vrot.slane %v354, 2
        %v1114 = vsel %vm1086, %v1112, %v1113
        %v1115 = vrot.slane %v355, 2
        %v1116 = vsel %vm1086, %v1113, %v1115
        %v1117 = vrot.slane %v356, 2
        %v1118 = vrot.slane %v357, 2
        %v1119 = vsel %vm1086, %v1117, %v1118
        %v1120 = vrot.slane %v358, 2
        %v1121 = vsel %vm1086, %v1118, %v1120
        %v1122 = vrot.slane %v359, 2
        %v1123 = vrot.slane %v360, 2
        %v1124 = vsel %vm1086, %v1122, %v1123
        %v1125 = vrot.slane %v361, 2
        %v1126 = vsel %vm1086, %v1123, %v1125
        %v1127 = vrot.slane %v362, 2
        %v1128 = vrot.slane %v363, 2
        %v1129 = vsel %vm1086, %v1127, %v1128
        %v1130 = vrot.slane %v364, 2
        %v1131 = vsel %vm1086, %v1128, %v1130
        %v1132 = vrot.slane %v365, 2
        %v1133 = vrot.slane %v366, 2
        %v1134 = vsel %vm1086, %v1132, %v1133
        %v1135 = vrot.slane %v367, 2
        %v1136 = vsel %vm1086, %v1133, %v1135
        %v1137 = vrot.slane %v368, 2
        %v1138 = vrot.slane %v369, 2
        %v1139 = vsel %vm1086, %v1137, %v1138
        %v1140 = vrot.slane %v370, 2
        %v1141 = vsel %vm1086, %v1138, %v1140
        %v1142 = vrot.slane %v371, 2
        %v1143 = vrot.slane %v372, 2
        %v1144 = vsel %vm1086, %v1142, %v1143
        %v1145 = vrot.slane %v373, 2
        %v1146 = vsel %vm1086, %v1143, %v1145
        %v1147 = vrot.slane %v374, 2
        %v1148 = vrot.slane %v375, 2
        %v1149 = vsel %vm1086, %v1147, %v1148
        %v1150 = vrot.slane %v376, 2
        %v1151 = vsel %vm1086, %v1148, %v1150
        %v1152 = vrot.slane %v377, 2
        %v1153 = vrot.slane %v378, 2
        %v1154 = vsel %vm1086, %v1152, %v1153
        %v1155 = vrot.slane %v379, 2
        %v1156 = vsel %vm1086, %v1153, %v1155
        %v1157 = vrot.slane %v380, 2
        %v1158 = vrot.slane %v381, 2
        %v1159 = vsel %vm1086, %v1157, %v1158
        %v1160 = vrot.slane %v382, 2
        %v1161 = vsel %vm1086, %v1158, %v1160
        %v1162 = vrot.slane %v383, 2
        %v1163 = vrot.slane %v384, 2
        %v1164 = vsel %vm1086, %v1162, %v1163
        %v1165 = vrot.slane %v385, 2
        %v1166 = vsel %vm1086, %v1163, %v1165
        %v1199 = vpack.c.bf16 %v1091, %v1089
        %v1200 = vpack.c.bf16 %v1096, %v1094
        %v1201 = vpack.c.bf16 %v1101, %v1099
        %v1202 = vpack.c.bf16 %v1106, %v1104
        %v1203 = vpack.c.bf16 %v1111, %v1109
        %v1204 = vpack.c.bf16 %v1116, %v1114
        %v1205 = vpack.c.bf16 %v1121, %v1119
        %v1206 = vpack.c.bf16 %v1126, %v1124
        %v1207 = vpack.c.bf16 %v1131, %v1129
        %v1208 = vpack.c.bf16 %v1136, %v1134
        %v1209 = vpack.c.bf16 %v1141, %v1139
        %v1210 = vpack.c.bf16 %v1146, %v1144
        %v1211 = vpack.c.bf16 %v1151, %v1149
        %v1212 = vpack.c.bf16 %v1156, %v1154
        %v1213 = vpack.c.bf16 %v1161, %v1159
        %v1214 = vpack.c.bf16 %v1166, %v1164
        %v1220 = vunpack.c.l.b16 %v402
        %v1221 = vunpack.c.l.b16 %v403
        %v1222 = vunpack.c.l.b16 %v404
        %v1223 = vunpack.c.l.b16 %v405
        %v1224 = vunpack.c.l.b16 %v406
        %v1225 = vpack.c.b16 %v1221, %v1220
        %v1226 = vpack.c.b16 %v1223, %v1222
        %v1227 = vpack.c.b16 %v1224, %v1224
        %v1231 = vsel %vm645, %v1199, 0
        %v1234 = vsel %vm645, %v1200, 0
        %v1237 = vsel %vm645, %v1201, 0
        %v1240 = vsel %vm645, %v1202, 0
        %v1243 = vsel %vm645, %v1203, 0
        %v1246 = vsel %vm645, %v1204, 0
        %v1249 = vsel %vm645, %v1205, 0
        %v1252 = vsel %vm645, %v1206, 0
        %v1255 = vsel %vm645, %v1207, 0
        %v1258 = vsel %vm645, %v1208, 0
        %v1261 = vsel %vm645, %v1209, 0
        %v1264 = vsel %vm645, %v1210, 0
        %v1267 = vsel %vm645, %v1211, 0
        %v1270 = vsel %vm645, %v1212, 0
        %v1273 = vsel %vm645, %v1213, 0
        %v1276 = vsel %vm645, %v1214, 0
        %v1279 = vsel %vm694, %v1227, 0
        %1281 = vmatprep.subr.bf16.mxu0 0
        %1282 = vmatpush1.bf16.msra.mxu0 0
        %1283 = vmatprep.subr.bf16.mxu0 0
        %1284 = vmatpush1.bf16.msra.mxu0 0
        %1285 = vmatprep.subr.bf16.mxu0 0
        %1286 = vmatpush1.bf16.msra.mxu0 0
        %1287 = vmatprep.subr.bf16.mxu0 0
        %1288 = vmatpush1.bf16.msra.mxu0 0
        %1289 = vmatprep.subr.bf16.mxu0 0
        %1290 = vmatpush1.bf16.msra.mxu0 0
        %1291 = vmatprep.subr.bf16.mxu0 0
        %1292 = vmatpush1.bf16.msra.mxu0 %v1279
        %1293 = vmatprep.subr.bf16.mxu0 0
        %1294 = vmatpush1.bf16.msra.mxu0 %v1226
        %1295 = vmatprep.subr.bf16.mxu0 0
        %1296 = vmatpush1.bf16.msra.mxu0 %v1225
        %1297 = vmatprep.subr.bf16.mxu0 0
        %1298 = vmatpush2.bf16.msra.mxu0 0
        %1299 = vmatprep.subr.bf16.mxu0 0
        %1300 = vmatpush2.bf16.msra.mxu0 0
        %1301 = vmatprep.subr.bf16.mxu0 0
        %1302 = vmatpush2.bf16.msra.mxu0 0
        %1303 = vmatprep.subr.bf16.mxu0 0
        %1304 = vmatpush2.bf16.msra.mxu0 0
        %1305 = vmatprep.subr.bf16.mxu0 0
        %1306 = vmatpush2.bf16.msra.mxu0 0
        %1307 = vmatprep.subr.bf16.mxu0 0
        %1308 = vmatpush2.bf16.msra.mxu0 0
        %1309 = vmatprep.subr.bf16.mxu0 0
        %1310 = vmatpush2.bf16.msra.mxu0 0
        %1311 = vmatprep.subr.bf16.mxu0 0
        %1312 = vmatpush2.bf16.msra.mxu0 0
        %1313 = vmatprep.mubr.bf16.mxu0 0
        %1314 = vmatmul.mubr.bf16.gmra.mxu0 %v1231
        %v1315 = vpop.f32.mrf.mxu0
        %v1316 = vadd.f32 0.0, %v1315
        %v1317 = vpop.f32.mrf.mxu0
        %v1318 = vpop.f32.mrf.mxu0
        %v1319 = vadd.f32 0.0, %v1318
        %v1320 = vpop.f32.mrf.mxu0
        %1321 = vmatprep.mubr.bf16.mxu0 0
        %1322 = vmatmul.mubr.bf16.gmra.mxu0 %v1234
        %v1323 = vpop.f32.mrf.mxu0
        %v1324 = vadd.f32 0.0, %v1323
        %v1325 = vpop.f32.mrf.mxu0
        %v1326 = vpop.f32.mrf.mxu0
        %v1327 = vadd.f32 0.0, %v1326
        %v1328 = vpop.f32.mrf.mxu0
        %1329 = vmatprep.mubr.bf16.mxu0 0
        %1330 = vmatmul.mubr.bf16.gmra.mxu0 %v1237
        %v1331 = vpop.f32.mrf.mxu0
        %v1332 = vadd.f32 0.0, %v1331
        %v1333 = vpop.f32.mrf.mxu0
        %v1334 = vpop.f32.mrf.mxu0
        %v1335 = vadd.f32 0.0, %v1334
        %v1336 = vpop.f32.mrf.mxu0
        %1337 = vmatprep.mubr.bf16.mxu0 0
        %1338 = vmatmul.mubr.bf16.gmra.mxu0 %v1240
        %v1339 = vpop.f32.mrf.mxu0
        %v1340 = vadd.f32 0.0, %v1339
        %v1341 = vpop.f32.mrf.mxu0
        %v1342 = vpop.f32.mrf.mxu0
        %v1343 = vadd.f32 0.0, %v1342
        %v1344 = vpop.f32.mrf.mxu0
        %1345 = vmatprep.mubr.bf16.mxu0 0
        %1346 = vmatmul.mubr.bf16.gmra.mxu0 %v1243
        %v1347 = vpop.f32.mrf.mxu0
        %v1348 = vadd.f32 0.0, %v1347
        %v1349 = vpop.f32.mrf.mxu0
        %v1350 = vpop.f32.mrf.mxu0
        %v1351 = vadd.f32 0.0, %v1350
        %v1352 = vpop.f32.mrf.mxu0
        %1353 = vmatprep.mubr.bf16.mxu0 0
        %1354 = vmatmul.mubr.bf16.gmra.mxu0 %v1246
        %v1355 = vpop.f32.mrf.mxu0
        %v1356 = vadd.f32 0.0, %v1355
        %v1357 = vpop.f32.mrf.mxu0
        %v1358 = vpop.f32.mrf.mxu0
        %v1359 = vadd.f32 0.0, %v1358
        %v1360 = vpop.f32.mrf.mxu0
        %1361 = vmatprep.mubr.bf16.mxu0 0
        %1362 = vmatmul.mubr.bf16.gmra.mxu0 %v1249
        %v1363 = vpop.f32.mrf.mxu0
        %v1364 = vadd.f32 0.0, %v1363
        %v1365 = vpop.f32.mrf.mxu0
        %v1366 = vpop.f32.mrf.mxu0
        %v1367 = vadd.f32 0.0, %v1366
        %v1368 = vpop.f32.mrf.mxu0
        %1369 = vmatprep.mubr.bf16.mxu0 0
        %1370 = vmatmul.mubr.bf16.gmra.mxu0 %v1252
        %v1371 = vpop.f32.mrf.mxu0
        %v1372 = vadd.f32 0.0, %v1371
        %v1373 = vpop.f32.mrf.mxu0
        %v1374 = vpop.f32.mrf.mxu0
        %v1375 = vadd.f32 0.0, %v1374
        %v1376 = vpop.f32.mrf.mxu0
        %1377 = vmatprep.mubr.bf16.mxu0 0
        %1378 = vmatmul.mubr.bf16.gmra.mxu0 %v1255
        %v1379 = vpop.f32.mrf.mxu0
        %v1380 = vadd.f32 0.0, %v1379
        %v1381 = vpop.f32.mrf.mxu0
        %v1382 = vpop.f32.mrf.mxu0
        %v1383 = vadd.f32 0.0, %v1382
        %v1384 = vpop.f32.mrf.mxu0
        %1385 = vmatprep.mubr.bf16.mxu0 0
        %1386 = vmatmul.mubr.bf16.gmra.mxu0 %v1258
        %v1387 = vpop.f32.mrf.mxu0
        %v1388 = vadd.f32 0.0, %v1387
        %v1389 = vpop.f32.mrf.mxu0
        %v1390 = vpop.f32.mrf.mxu0
        %v1391 = vadd.f32 0.0, %v1390
        %v1392 = vpop.f32.mrf.mxu0
        %1393 = vmatprep.mubr.bf16.mxu0 0
        %1394 = vmatmul.mubr.bf16.gmra.mxu0 %v1261
        %v1395 = vpop.f32.mrf.mxu0
        %v1396 = vadd.f32 0.0, %v1395
        %v1397 = vpop.f32.mrf.mxu0
        %v1398 = vpop.f32.mrf.mxu0
        %v1399 = vadd.f32 0.0, %v1398
        %v1400 = vpop.f32.mrf.mxu0
        %1401 = vmatprep.mubr.bf16.mxu0 0
        %1402 = vmatmul.mubr.bf16.gmra.mxu0 %v1264
        %v1403 = vpop.f32.mrf.mxu0
        %v1404 = vadd.f32 0.0, %v1403
        %v1405 = vpop.f32.mrf.mxu0
        %v1406 = vpop.f32.mrf.mxu0
        %v1407 = vadd.f32 0.0, %v1406
        %v1408 = vpop.f32.mrf.mxu0
        %1409 = vmatprep.mubr.bf16.mxu0 0
        %1410 = vmatmul.mubr.bf16.gmra.mxu0 %v1267
        %v1411 = vpop.f32.mrf.mxu0
        %v1412 = vadd.f32 0.0, %v1411
        %v1413 = vpop.f32.mrf.mxu0
        %v1414 = vpop.f32.mrf.mxu0
        %v1415 = vadd.f32 0.0, %v1414
        %v1416 = vpop.f32.mrf.mxu0
        %1417 = vmatprep.mubr.bf16.mxu0 0
        %1418 = vmatmul.mubr.bf16.gmra.mxu0 %v1270
        %v1419 = vpop.f32.mrf.mxu0
        %v1420 = vadd.f32 0.0, %v1419
        %v1421 = vpop.f32.mrf.mxu0
        %v1422 = vpop.f32.mrf.mxu0
        %v1423 = vadd.f32 0.0, %v1422
        %v1424 = vpop.f32.mrf.mxu0
        %1425 = vmatprep.mubr.bf16.mxu0 0
        %1426 = vmatmul.mubr.bf16.gmra.mxu0 %v1273
        %v1427 = vpop.f32.mrf.mxu0
        %v1428 = vadd.f32 0.0, %v1427
        %v1429 = vpop.f32.mrf.mxu0
        %v1430 = vpop.f32.mrf.mxu0
        %v1431 = vadd.f32 0.0, %v1430
        %v1432 = vpop.f32.mrf.mxu0
        %1433 = vmatprep.mubr.bf16.mxu0 0
        %1434 = vmatmul.mubr.bf16.gmra.mxu0 %v1276
        %v1435 = vpop.f32.mrf.mxu0
        %v1436 = vadd.f32 0.0, %v1435
        %v1437 = vpop.f32.mrf.mxu0
        %v1438 = vpop.f32.mrf.mxu0
        %v1439 = vadd.f32 0.0, %v1438
        %v1440 = vpop.f32.mrf.mxu0
        %1441 = vdwg.mxu0
        %v1442 = vadd.f32 %v960, %v1316
        %v1443 = vadd.f32 %v963, %v1319
        %v1444 = vadd.f32 %v968, %v1324
        %v1445 = vadd.f32 %v971, %v1327
        %v1446 = vadd.f32 %v976, %v1332
        %v1447 = vadd.f32 %v979, %v1335
        %v1448 = vadd.f32 %v984, %v1340
        %v1449 = vadd.f32 %v987, %v1343
        %v1450 = vadd.f32 %v992, %v1348
        %v1451 = vadd.f32 %v995, %v1351
        %v1452 = vadd.f32 %v1000, %v1356
        %v1453 = vadd.f32 %v1003, %v1359
        %v1454 = vadd.f32 %v1008, %v1364
        %v1455 = vadd.f32 %v1011, %v1367
        %v1456 = vadd.f32 %v1016, %v1372
        %v1457 = vadd.f32 %v1019, %v1375
        %v1458 = vadd.f32 %v1024, %v1380
        %v1459 = vadd.f32 %v1027, %v1383
        %v1460 = vadd.f32 %v1032, %v1388
        %v1461 = vadd.f32 %v1035, %v1391
        %v1462 = vadd.f32 %v1040, %v1396
        %v1463 = vadd.f32 %v1043, %v1399
        %v1464 = vadd.f32 %v1048, %v1404
        %v1465 = vadd.f32 %v1051, %v1407
        %v1466 = vadd.f32 %v1056, %v1412
        %v1467 = vadd.f32 %v1059, %v1415
        %v1468 = vadd.f32 %v1064, %v1420
        %v1469 = vadd.f32 %v1067, %v1423
        %v1470 = vadd.f32 %v1072, %v1428
        %v1471 = vadd.f32 %v1075, %v1431
        %v1472 = vadd.f32 %v1080, %v1436
        %v1473 = vadd.f32 %v1083, %v1439
        %v1474 = vpack.c.bf16 %v387, %v386
        %v1480 = vunpack.c.l.b16 %v407
        %v1481 = vunpack.c.l.b16 %v408
        %v1482 = vunpack.c.l.b16 %v409
        %v1483 = vunpack.c.l.b16 %v410
        %v1484 = vunpack.c.l.b16 %v411
        %v1485 = vpack.c.b16 %v1481, %v1480
        %v1486 = vpack.c.b16 %v1483, %v1482
        %v1487 = vpack.c.b16 %v1484, %v1484
        %v1491 = vsel %vm645, %v1474, 0
        %v1494 = vsel %vm694, %v1487, 0
        %1496 = vmatprep.subr.bf16.mxu0 0
        %1497 = vmatpush1.bf16.msra.mxu0 0
        %1498 = vmatprep.subr.bf16.mxu0 0
        %1499 = vmatpush1.bf16.msra.mxu0 0
        %1500 = vmatprep.subr.bf16.mxu0 0
        %1501 = vmatpush1.bf16.msra.mxu0 0
        %1502 = vmatprep.subr.bf16.mxu0 0
        %1503 = vmatpush1.bf16.msra.mxu0 0
        %1504 = vmatprep.subr.bf16.mxu0 0
        %1505 = vmatpush1.bf16.msra.mxu0 0
        %1506 = vmatprep.subr.bf16.mxu0 0
        %1507 = vmatpush1.bf16.msra.mxu0 %v1494
        %1508 = vmatprep.subr.bf16.mxu0 0
        %1509 = vmatpush1.bf16.msra.mxu0 %v1486
        %1510 = vmatprep.subr.bf16.mxu0 0
        %1511 = vmatpush1.bf16.msra.mxu0 %v1485
        %1512 = vmatprep.subr.bf16.mxu0 0
        %1513 = vmatpush2.bf16.msra.mxu0 0
        %1514 = vmatprep.subr.bf16.mxu0 0
        %1515 = vmatpush2.bf16.msra.mxu0 0
        %1516 = vmatprep.subr.bf16.mxu0 0
        %1517 = vmatpush2.bf16.msra.mxu0 0
        %1518 = vmatprep.subr.bf16.mxu0 0
        %1519 = vmatpush2.bf16.msra.mxu0 0
        %1520 = vmatprep.subr.bf16.mxu0 0
        %1521 = vmatpush2.bf16.msra.mxu0 0
        %1522 = vmatprep.subr.bf16.mxu0 0
        %1523 = vmatpush2.bf16.msra.mxu0 0
        %1524 = vmatprep.subr.bf16.mxu0 0
        %1525 = vmatpush2.bf16.msra.mxu0 0
        %1526 = vmatprep.subr.bf16.mxu0 0
        %1527 = vmatpush2.bf16.msra.mxu0 0
        %1528 = vmatprep.mubr.bf16.mxu0 0
        %1529 = vmatmul.mubr.bf16.gmra.mxu0 %v878
        %v1530 = vpop.f32.mrf.mxu0
        %v1531 = vadd.f32 0.0, %v1530
        %v1532 = vpop.f32.mrf.mxu0
        %v1533 = vpop.f32.mrf.mxu0
        %v1534 = vadd.f32 0.0, %v1533
        %v1535 = vpop.f32.mrf.mxu0
        %1536 = vmatprep.mubr.bf16.mxu0 0
        %1537 = vmatmul.mubr.bf16.gmra.mxu0 %v881
        %v1538 = vpop.f32.mrf.mxu0
        %v1539 = vadd.f32 0.0, %v1538
        %v1540 = vpop.f32.mrf.mxu0
        %v1541 = vpop.f32.mrf.mxu0
        %v1542 = vadd.f32 0.0, %v1541
        %v1543 = vpop.f32.mrf.mxu0
        %1544 = vmatprep.mubr.bf16.mxu0 0
        %1545 = vmatmul.mubr.bf16.gmra.mxu0 %v884
        %v1546 = vpop.f32.mrf.mxu0
        %v1547 = vadd.f32 0.0, %v1546
        %v1548 = vpop.f32.mrf.mxu0
        %v1549 = vpop.f32.mrf.mxu0
        %v1550 = vadd.f32 0.0, %v1549
        %v1551 = vpop.f32.mrf.mxu0
        %1552 = vmatprep.mubr.bf16.mxu0 0
        %1553 = vmatmul.mubr.bf16.gmra.mxu0 %v887
        %v1554 = vpop.f32.mrf.mxu0
        %v1555 = vadd.f32 0.0, %v1554
        %v1556 = vpop.f32.mrf.mxu0
        %v1557 = vpop.f32.mrf.mxu0
        %v1558 = vadd.f32 0.0, %v1557
        %v1559 = vpop.f32.mrf.mxu0
        %1560 = vmatprep.mubr.bf16.mxu0 0
        %1561 = vmatmul.mubr.bf16.gmra.mxu0 %v890
        %v1562 = vpop.f32.mrf.mxu0
        %v1563 = vadd.f32 0.0, %v1562
        %v1564 = vpop.f32.mrf.mxu0
        %v1565 = vpop.f32.mrf.mxu0
        %v1566 = vadd.f32 0.0, %v1565
        %v1567 = vpop.f32.mrf.mxu0
        %1568 = vmatprep.mubr.bf16.mxu0 0
        %1569 = vmatmul.mubr.bf16.gmra.mxu0 %v893
        %v1570 = vpop.f32.mrf.mxu0
        %v1571 = vadd.f32 0.0, %v1570
        %v1572 = vpop.f32.mrf.mxu0
        %v1573 = vpop.f32.mrf.mxu0
        %v1574 = vadd.f32 0.0, %v1573
        %v1575 = vpop.f32.mrf.mxu0
        %1576 = vmatprep.mubr.bf16.mxu0 0
        %1577 = vmatmul.mubr.bf16.gmra.mxu0 %v896
        %v1578 = vpop.f32.mrf.mxu0
        %v1579 = vadd.f32 0.0, %v1578
        %v1580 = vpop.f32.mrf.mxu0
        %v1581 = vpop.f32.mrf.mxu0
        %v1582 = vadd.f32 0.0, %v1581
        %v1583 = vpop.f32.mrf.mxu0
        %1584 = vmatprep.mubr.bf16.mxu0 0
        %1585 = vmatmul.mubr.bf16.gmra.mxu0 %v899
        %v1586 = vpop.f32.mrf.mxu0
        %v1587 = vadd.f32 0.0, %v1586
        %v1588 = vpop.f32.mrf.mxu0
        %v1589 = vpop.f32.mrf.mxu0
        %v1590 = vadd.f32 0.0, %v1589
        %v1591 = vpop.f32.mrf.mxu0
        %1592 = vmatprep.mubr.bf16.mxu0 0
        %1593 = vmatmul.mubr.bf16.gmra.mxu0 %v902
        %v1594 = vpop.f32.mrf.mxu0
        %v1595 = vadd.f32 0.0, %v1594
        %v1596 = vpop.f32.mrf.mxu0
        %v1597 = vpop.f32.mrf.mxu0
        %v1598 = vadd.f32 0.0, %v1597
        %v1599 = vpop.f32.mrf.mxu0
        %1600 = vmatprep.mubr.bf16.mxu0 0
        %1601 = vmatmul.mubr.bf16.gmra.mxu0 %v905
        %v1602 = vpop.f32.mrf.mxu0
        %v1603 = vadd.f32 0.0, %v1602
        %v1604 = vpop.f32.mrf.mxu0
        %v1605 = vpop.f32.mrf.mxu0
        %v1606 = vadd.f32 0.0, %v1605
        %v1607 = vpop.f32.mrf.mxu0
        %1608 = vmatprep.mubr.bf16.mxu0 0
        %1609 = vmatmul.mubr.bf16.gmra.mxu0 %v908
        %v1610 = vpop.f32.mrf.mxu0
        %v1611 = vadd.f32 0.0, %v1610
        %v1612 = vpop.f32.mrf.mxu0
        %v1613 = vpop.f32.mrf.mxu0
        %v1614 = vadd.f32 0.0, %v1613
        %v1615 = vpop.f32.mrf.mxu0
        %1616 = vmatprep.mubr.bf16.mxu0 0
        %1617 = vmatmul.mubr.bf16.gmra.mxu0 %v911
        %v1618 = vpop.f32.mrf.mxu0
        %v1619 = vadd.f32 0.0, %v1618
        %v1620 = vpop.f32.mrf.mxu0
        %v1621 = vpop.f32.mrf.mxu0
        %v1622 = vadd.f32 0.0, %v1621
        %v1623 = vpop.f32.mrf.mxu0
        %1624 = vmatprep.mubr.bf16.mxu0 0
        %1625 = vmatmul.mubr.bf16.gmra.mxu0 %v914
        %v1626 = vpop.f32.mrf.mxu0
        %v1627 = vadd.f32 0.0, %v1626
        %v1628 = vpop.f32.mrf.mxu0
        %v1629 = vpop.f32.mrf.mxu0
        %v1630 = vadd.f32 0.0, %v1629
        %v1631 = vpop.f32.mrf.mxu0
        %1632 = vmatprep.mubr.bf16.mxu0 0
        %1633 = vmatmul.mubr.bf16.gmra.mxu0 %v917
        %v1634 = vpop.f32.mrf.mxu0
        %v1635 = vadd.f32 0.0, %v1634
        %v1636 = vpop.f32.mrf.mxu0
        %v1637 = vpop.f32.mrf.mxu0
        %v1638 = vadd.f32 0.0, %v1637
        %v1639 = vpop.f32.mrf.mxu0
        %1640 = vmatprep.mubr.bf16.mxu0 0
        %1641 = vmatmul.mubr.bf16.gmra.mxu0 %v920
        %v1642 = vpop.f32.mrf.mxu0
        %v1643 = vadd.f32 0.0, %v1642
        %v1644 = vpop.f32.mrf.mxu0
        %v1645 = vpop.f32.mrf.mxu0
        %v1646 = vadd.f32 0.0, %v1645
        %v1647 = vpop.f32.mrf.mxu0
        %1648 = vmatprep.mubr.bf16.mxu0 0
        %1649 = vmatmul.mubr.bf16.gmra.mxu0 %v1491
        %v1650 = vpop.f32.mrf.mxu0
        %v1651 = vadd.f32 0.0, %v1650
        %v1652 = vpop.f32.mrf.mxu0
        %v1653 = vpop.f32.mrf.mxu0
        %v1654 = vadd.f32 0.0, %v1653
        %v1655 = vpop.f32.mrf.mxu0
        %1656 = vdwg.mxu0
        %v1657 = vadd.f32 %v1442, %v1531
        %v1658 = vadd.f32 %v1443, %v1534
        %v1659 = vadd.f32 %v1444, %v1539
        %v1660 = vadd.f32 %v1445, %v1542
        %v1661 = vadd.f32 %v1446, %v1547
        %v1662 = vadd.f32 %v1447, %v1550
        %v1663 = vadd.f32 %v1448, %v1555
        %v1664 = vadd.f32 %v1449, %v1558
        %v1665 = vadd.f32 %v1450, %v1563
        %v1666 = vadd.f32 %v1451, %v1566
        %v1667 = vadd.f32 %v1452, %v1571
        %v1668 = vadd.f32 %v1453, %v1574
        %v1669 = vadd.f32 %v1454, %v1579
        %v1670 = vadd.f32 %v1455, %v1582
        %v1671 = vadd.f32 %v1456, %v1587
        %v1672 = vadd.f32 %v1457, %v1590
        %v1673 = vadd.f32 %v1458, %v1595
        %v1674 = vadd.f32 %v1459, %v1598
        %v1675 = vadd.f32 %v1460, %v1603
        %v1676 = vadd.f32 %v1461, %v1606
        %v1677 = vadd.f32 %v1462, %v1611
        %v1678 = vadd.f32 %v1463, %v1614
        %v1679 = vadd.f32 %v1464, %v1619
        %v1680 = vadd.f32 %v1465, %v1622
        %v1681 = vadd.f32 %v1466, %v1627
        %v1682 = vadd.f32 %v1467, %v1630
        %v1683 = vadd.f32 %v1468, %v1635
        %v1684 = vadd.f32 %v1469, %v1638
        %v1685 = vadd.f32 %v1470, %v1643
        %v1686 = vadd.f32 %v1471, %v1646
        %v1687 = vadd.f32 %v1472, %v1651
        %v1688 = vadd.f32 %v1473, %v1654
        %v1692 = vrot.slane %v386, 1
        %v1693 = vrot.slane %v387, 1
        %v1694 = vsel %vm501, %v1692, %v1693
        %v1695 = vrot.slane %v388, 1
        %v1696 = vsel %vm501, %v1693, %v1695
        %v1699 = vpack.c.bf16 %v1696, %v1694
        %v1705 = vunpack.c.l.b16 %v412
        %v1706 = vunpack.c.l.b16 %v413
        %v1707 = vunpack.c.l.b16 %v414
        %v1708 = vunpack.c.l.b16 %v415
        %v1709 = vunpack.c.l.b16 %v416
        %v1710 = vpack.c.b16 %v1706, %v1705
        %v1711 = vpack.c.b16 %v1708, %v1707
        %v1712 = vpack.c.b16 %v1709, %v1709
        %v1716 = vsel %vm645, %v1699, 0
        %v1719 = vsel %vm694, %v1712, 0
        %1721 = vmatprep.subr.bf16.mxu0 0
        %1722 = vmatpush1.bf16.msra.mxu0 0
        %1723 = vmatprep.subr.bf16.mxu0 0
        %1724 = vmatpush1.bf16.msra.mxu0 0
        %1725 = vmatprep.subr.bf16.mxu0 0
        %1726 = vmatpush1.bf16.msra.mxu0 0
        %1727 = vmatprep.subr.bf16.mxu0 0
        %1728 = vmatpush1.bf16.msra.mxu0 0
        %1729 = vmatprep.subr.bf16.mxu0 0
        %1730 = vmatpush1.bf16.msra.mxu0 0
        %1731 = vmatprep.subr.bf16.mxu0 0
        %1732 = vmatpush1.bf16.msra.mxu0 %v1719
        %1733 = vmatprep.subr.bf16.mxu0 0
        %1734 = vmatpush1.bf16.msra.mxu0 %v1711
        %1735 = vmatprep.subr.bf16.mxu0 0
        %1736 = vmatpush1.bf16.msra.mxu0 %v1710
        %1737 = vmatprep.subr.bf16.mxu0 0
        %1738 = vmatpush2.bf16.msra.mxu0 0
        %1739 = vmatprep.subr.bf16.mxu0 0
        %1740 = vmatpush2.bf16.msra.mxu0 0
        %1741 = vmatprep.subr.bf16.mxu0 0
        %1742 = vmatpush2.bf16.msra.mxu0 0
        %1743 = vmatprep.subr.bf16.mxu0 0
        %1744 = vmatpush2.bf16.msra.mxu0 0
        %1745 = vmatprep.subr.bf16.mxu0 0
        %1746 = vmatpush2.bf16.msra.mxu0 0
        %1747 = vmatprep.subr.bf16.mxu0 0
        %1748 = vmatpush2.bf16.msra.mxu0 0
        %1749 = vmatprep.subr.bf16.mxu0 0
        %1750 = vmatpush2.bf16.msra.mxu0 0
        %1751 = vmatprep.subr.bf16.mxu0 0
        %1752 = vmatpush2.bf16.msra.mxu0 0
        %1753 = vmatprep.mubr.bf16.mxu0 0
        %1754 = vmatmul.mubr.bf16.gmra.mxu0 %v650
        %v1755 = vpop.f32.mrf.mxu0
        %v1756 = vadd.f32 0.0, %v1755
        %v1757 = vpop.f32.mrf.mxu0
        %v1758 = vpop.f32.mrf.mxu0
        %v1759 = vadd.f32 0.0, %v1758
        %v1760 = vpop.f32.mrf.mxu0
        %1761 = vmatprep.mubr.bf16.mxu0 0
        %1762 = vmatmul.mubr.bf16.gmra.mxu0 %v653
        %v1763 = vpop.f32.mrf.mxu0
        %v1764 = vadd.f32 0.0, %v1763
        %v1765 = vpop.f32.mrf.mxu0
        %v1766 = vpop.f32.mrf.mxu0
        %v1767 = vadd.f32 0.0, %v1766
        %v1768 = vpop.f32.mrf.mxu0
        %1769 = vmatprep.mubr.bf16.mxu0 0
        %1770 = vmatmul.mubr.bf16.gmra.mxu0 %v656
        %v1771 = vpop.f32.mrf.mxu0
        %v1772 = vadd.f32 0.0, %v1771
        %v1773 = vpop.f32.mrf.mxu0
        %v1774 = vpop.f32.mrf.mxu0
        %v1775 = vadd.f32 0.0, %v1774
        %v1776 = vpop.f32.mrf.mxu0
        %1777 = vmatprep.mubr.bf16.mxu0 0
        %1778 = vmatmul.mubr.bf16.gmra.mxu0 %v659
        %v1779 = vpop.f32.mrf.mxu0
        %v1780 = vadd.f32 0.0, %v1779
        %v1781 = vpop.f32.mrf.mxu0
        %v1782 = vpop.f32.mrf.mxu0
        %v1783 = vadd.f32 0.0, %v1782
        %v1784 = vpop.f32.mrf.mxu0
        %1785 = vmatprep.mubr.bf16.mxu0 0
        %1786 = vmatmul.mubr.bf16.gmra.mxu0 %v662
        %v1787 = vpop.f32.mrf.mxu0
        %v1788 = vadd.f32 0.0, %v1787
        %v1789 = vpop.f32.mrf.mxu0
        %v1790 = vpop.f32.mrf.mxu0
        %v1791 = vadd.f32 0.0, %v1790
        %v1792 = vpop.f32.mrf.mxu0
        %1793 = vmatprep.mubr.bf16.mxu0 0
        %1794 = vmatmul.mubr.bf16.gmra.mxu0 %v665
        %v1795 = vpop.f32.mrf.mxu0
        %v1796 = vadd.f32 0.0, %v1795
        %v1797 = vpop.f32.mrf.mxu0
        %v1798 = vpop.f32.mrf.mxu0
        %v1799 = vadd.f32 0.0, %v1798
        %v1800 = vpop.f32.mrf.mxu0
        %1801 = vmatprep.mubr.bf16.mxu0 0
        %1802 = vmatmul.mubr.bf16.gmra.mxu0 %v668
        %v1803 = vpop.f32.mrf.mxu0
        %v1804 = vadd.f32 0.0, %v1803
        %v1805 = vpop.f32.mrf.mxu0
        %v1806 = vpop.f32.mrf.mxu0
        %v1807 = vadd.f32 0.0, %v1806
        %v1808 = vpop.f32.mrf.mxu0
        %1809 = vmatprep.mubr.bf16.mxu0 0
        %1810 = vmatmul.mubr.bf16.gmra.mxu0 %v671
        %v1811 = vpop.f32.mrf.mxu0
        %v1812 = vadd.f32 0.0, %v1811
        %v1813 = vpop.f32.mrf.mxu0
        %v1814 = vpop.f32.mrf.mxu0
        %v1815 = vadd.f32 0.0, %v1814
        %v1816 = vpop.f32.mrf.mxu0
        %1817 = vmatprep.mubr.bf16.mxu0 0
        %1818 = vmatmul.mubr.bf16.gmra.mxu0 %v674
        %v1819 = vpop.f32.mrf.mxu0
        %v1820 = vadd.f32 0.0, %v1819
        %v1821 = vpop.f32.mrf.mxu0
        %v1822 = vpop.f32.mrf.mxu0
        %v1823 = vadd.f32 0.0, %v1822
        %v1824 = vpop.f32.mrf.mxu0
        %1825 = vmatprep.mubr.bf16.mxu0 0
        %1826 = vmatmul.mubr.bf16.gmra.mxu0 %v677
        %v1827 = vpop.f32.mrf.mxu0
        %v1828 = vadd.f32 0.0, %v1827
        %v1829 = vpop.f32.mrf.mxu0
        %v1830 = vpop.f32.mrf.mxu0
        %v1831 = vadd.f32 0.0, %v1830
        %v1832 = vpop.f32.mrf.mxu0
        %1833 = vmatprep.mubr.bf16.mxu0 0
        %1834 = vmatmul.mubr.bf16.gmra.mxu0 %v680
        %v1835 = vpop.f32.mrf.mxu0
        %v1836 = vadd.f32 0.0, %v1835
        %v1837 = vpop.f32.mrf.mxu0
        %v1838 = vpop.f32.mrf.mxu0
        %v1839 = vadd.f32 0.0, %v1838
        %v1840 = vpop.f32.mrf.mxu0
        %1841 = vmatprep.mubr.bf16.mxu0 0
        %1842 = vmatmul.mubr.bf16.gmra.mxu0 %v683
        %v1843 = vpop.f32.mrf.mxu0
        %v1844 = vadd.f32 0.0, %v1843
        %v1845 = vpop.f32.mrf.mxu0
        %v1846 = vpop.f32.mrf.mxu0
        %v1847 = vadd.f32 0.0, %v1846
        %v1848 = vpop.f32.mrf.mxu0
        %1849 = vmatprep.mubr.bf16.mxu0 0
        %1850 = vmatmul.mubr.bf16.gmra.mxu0 %v686
        %v1851 = vpop.f32.mrf.mxu0
        %v1852 = vadd.f32 0.0, %v1851
        %v1853 = vpop.f32.mrf.mxu0
        %v1854 = vpop.f32.mrf.mxu0
        %v1855 = vadd.f32 0.0, %v1854
        %v1856 = vpop.f32.mrf.mxu0
        %1857 = vmatprep.mubr.bf16.mxu0 0
        %1858 = vmatmul.mubr.bf16.gmra.mxu0 %v689
        %v1859 = vpop.f32.mrf.mxu0
        %v1860 = vadd.f32 0.0, %v1859
        %v1861 = vpop.f32.mrf.mxu0
        %v1862 = vpop.f32.mrf.mxu0
        %v1863 = vadd.f32 0.0, %v1862
        %v1864 = vpop.f32.mrf.mxu0
        %1865 = vmatprep.mubr.bf16.mxu0 0
        %1866 = vmatmul.mubr.bf16.gmra.mxu0 %v692
        %v1867 = vpop.f32.mrf.mxu0
        %v1868 = vadd.f32 0.0, %v1867
        %v1869 = vpop.f32.mrf.mxu0
        %v1870 = vpop.f32.mrf.mxu0
        %v1871 = vadd.f32 0.0, %v1870
        %v1872 = vpop.f32.mrf.mxu0
        %1873 = vmatprep.mubr.bf16.mxu0 0
        %1874 = vmatmul.mubr.bf16.gmra.mxu0 %v1716
        %v1875 = vpop.f32.mrf.mxu0
        %v1876 = vadd.f32 0.0, %v1875
        %v1877 = vpop.f32.mrf.mxu0
        %v1878 = vpop.f32.mrf.mxu0
        %v1879 = vadd.f32 0.0, %v1878
        %v1880 = vpop.f32.mrf.mxu0
        %1881 = vdwg.mxu0
        %v1882 = vadd.f32 %v1657, %v1756
        %v1883 = vadd.f32 %v1658, %v1759
        %v1884 = vadd.f32 %v1659, %v1764
        %v1885 = vadd.f32 %v1660, %v1767
        %v1886 = vadd.f32 %v1661, %v1772
        %v1887 = vadd.f32 %v1662, %v1775
        %v1888 = vadd.f32 %v1663, %v1780
        %v1889 = vadd.f32 %v1664, %v1783
        %v1890 = vadd.f32 %v1665, %v1788
        %v1891 = vadd.f32 %v1666, %v1791
        %v1892 = vadd.f32 %v1667, %v1796
        %v1893 = vadd.f32 %v1668, %v1799
        %v1894 = vadd.f32 %v1669, %v1804
        %v1895 = vadd.f32 %v1670, %v1807
        %v1896 = vadd.f32 %v1671, %v1812
        %v1897 = vadd.f32 %v1672, %v1815
        %v1898 = vadd.f32 %v1673, %v1820
        %v1899 = vadd.f32 %v1674, %v1823
        %v1900 = vadd.f32 %v1675, %v1828
        %v1901 = vadd.f32 %v1676, %v1831
        %v1902 = vadd.f32 %v1677, %v1836
        %v1903 = vadd.f32 %v1678, %v1839
        %v1904 = vadd.f32 %v1679, %v1844
        %v1905 = vadd.f32 %v1680, %v1847
        %v1906 = vadd.f32 %v1681, %v1852
        %v1907 = vadd.f32 %v1682, %v1855
        %v1908 = vadd.f32 %v1683, %v1860
        %v1909 = vadd.f32 %v1684, %v1863
        %v1910 = vadd.f32 %v1685, %v1868
        %v1911 = vadd.f32 %v1686, %v1871
        %v1912 = vadd.f32 %v1687, %v1876
        %v1913 = vadd.f32 %v1688, %v1879
        %v1914 = vrot.slane %v386, 2
        %v1915 = vrot.slane %v387, 2
        %v1916 = vsel %vm1086, %v1914, %v1915
        %v1917 = vrot.slane %v388, 2
        %v1918 = vsel %vm1086, %v1915, %v1917
        %v1921 = vpack.c.bf16 %v1918, %v1916
        %v1927 = vunpack.c.l.b16 %v417
        %v1928 = vunpack.c.l.b16 %v418
        %v1929 = vunpack.c.l.b16 %v419
        %v1930 = vunpack.c.l.b16 %v420
        %v1931 = vunpack.c.l.b16 %v421
        %v1932 = vpack.c.b16 %v1928, %v1927
        %v1933 = vpack.c.b16 %v1930, %v1929
        %v1934 = vpack.c.b16 %v1931, %v1931
        %v1938 = vsel %vm645, %v1921, 0
        %v1941 = vsel %vm694, %v1934, 0
        %1943 = vmatprep.subr.bf16.mxu0 0
        %1944 = vmatpush1.bf16.msra.mxu0 0
        %1945 = vmatprep.subr.bf16.mxu0 0
        %1946 = vmatpush1.bf16.msra.mxu0 0
        %1947 = vmatprep.subr.bf16.mxu0 0
        %1948 = vmatpush1.bf16.msra.mxu0 0
        %1949 = vmatprep.subr.bf16.mxu0 0
        %1950 = vmatpush1.bf16.msra.mxu0 0
        %1951 = vmatprep.subr.bf16.mxu0 0
        %1952 = vmatpush1.bf16.msra.mxu0 0
        %1953 = vmatprep.subr.bf16.mxu0 0
        %1954 = vmatpush1.bf16.msra.mxu0 %v1941
        %1955 = vmatprep.subr.bf16.mxu0 0
        %1956 = vmatpush1.bf16.msra.mxu0 %v1933
        %1957 = vmatprep.subr.bf16.mxu0 0
        %1958 = vmatpush1.bf16.msra.mxu0 %v1932
        %1959 = vmatprep.subr.bf16.mxu0 0
        %1960 = vmatpush2.bf16.msra.mxu0 0
        %1961 = vmatprep.subr.bf16.mxu0 0
        %1962 = vmatpush2.bf16.msra.mxu0 0
        %1963 = vmatprep.subr.bf16.mxu0 0
        %1964 = vmatpush2.bf16.msra.mxu0 0
        %1965 = vmatprep.subr.bf16.mxu0 0
        %1966 = vmatpush2.bf16.msra.mxu0 0
        %1967 = vmatprep.subr.bf16.mxu0 0
        %1968 = vmatpush2.bf16.msra.mxu0 0
        %1969 = vmatprep.subr.bf16.mxu0 0
        %1970 = vmatpush2.bf16.msra.mxu0 0
        %1971 = vmatprep.subr.bf16.mxu0 0
        %1972 = vmatpush2.bf16.msra.mxu0 0
        %1973 = vmatprep.subr.bf16.mxu0 0
        %1974 = vmatpush2.bf16.msra.mxu0 0
        %1975 = vmatprep.mubr.bf16.mxu0 0
        %1976 = vmatmul.mubr.bf16.gmra.mxu0 %v1234
        %v1977 = vpop.f32.mrf.mxu0
        %v1978 = vadd.f32 0.0, %v1977
        %v1979 = vpop.f32.mrf.mxu0
        %v1980 = vpop.f32.mrf.mxu0
        %v1981 = vadd.f32 0.0, %v1980
        %v1982 = vpop.f32.mrf.mxu0
        %1983 = vmatprep.mubr.bf16.mxu0 0
        %1984 = vmatmul.mubr.bf16.gmra.mxu0 %v1237
        %v1985 = vpop.f32.mrf.mxu0
        %v1986 = vadd.f32 0.0, %v1985
        %v1987 = vpop.f32.mrf.mxu0
        %v1988 = vpop.f32.mrf.mxu0
        %v1989 = vadd.f32 0.0, %v1988
        %v1990 = vpop.f32.mrf.mxu0
        %1991 = vmatprep.mubr.bf16.mxu0 0
        %1992 = vmatmul.mubr.bf16.gmra.mxu0 %v1240
        %v1993 = vpop.f32.mrf.mxu0
        %v1994 = vadd.f32 0.0, %v1993
        %v1995 = vpop.f32.mrf.mxu0
        %v1996 = vpop.f32.mrf.mxu0
        %v1997 = vadd.f32 0.0, %v1996
        %v1998 = vpop.f32.mrf.mxu0
        %1999 = vmatprep.mubr.bf16.mxu0 0
        %2000 = vmatmul.mubr.bf16.gmra.mxu0 %v1243
        %v2001 = vpop.f32.mrf.mxu0
        %v2002 = vadd.f32 0.0, %v2001
        %v2003 = vpop.f32.mrf.mxu0
        %v2004 = vpop.f32.mrf.mxu0
        %v2005 = vadd.f32 0.0, %v2004
        %v2006 = vpop.f32.mrf.mxu0
        %2007 = vmatprep.mubr.bf16.mxu0 0
        %2008 = vmatmul.mubr.bf16.gmra.mxu0 %v1246
        %v2009 = vpop.f32.mrf.mxu0
        %v2010 = vadd.f32 0.0, %v2009
        %v2011 = vpop.f32.mrf.mxu0
        %v2012 = vpop.f32.mrf.mxu0
        %v2013 = vadd.f32 0.0, %v2012
        %v2014 = vpop.f32.mrf.mxu0
        %2015 = vmatprep.mubr.bf16.mxu0 0
        %2016 = vmatmul.mubr.bf16.gmra.mxu0 %v1249
        %v2017 = vpop.f32.mrf.mxu0
        %v2018 = vadd.f32 0.0, %v2017
        %v2019 = vpop.f32.mrf.mxu0
        %v2020 = vpop.f32.mrf.mxu0
        %v2021 = vadd.f32 0.0, %v2020
        %v2022 = vpop.f32.mrf.mxu0
        %2023 = vmatprep.mubr.bf16.mxu0 0
        %2024 = vmatmul.mubr.bf16.gmra.mxu0 %v1252
        %v2025 = vpop.f32.mrf.mxu0
        %v2026 = vadd.f32 0.0, %v2025
        %v2027 = vpop.f32.mrf.mxu0
        %v2028 = vpop.f32.mrf.mxu0
        %v2029 = vadd.f32 0.0, %v2028
        %v2030 = vpop.f32.mrf.mxu0
        %2031 = vmatprep.mubr.bf16.mxu0 0
        %2032 = vmatmul.mubr.bf16.gmra.mxu0 %v1255
        %v2033 = vpop.f32.mrf.mxu0
        %v2034 = vadd.f32 0.0, %v2033
        %v2035 = vpop.f32.mrf.mxu0
        %v2036 = vpop.f32.mrf.mxu0
        %v2037 = vadd.f32 0.0, %v2036
        %v2038 = vpop.f32.mrf.mxu0
        %2039 = vmatprep.mubr.bf16.mxu0 0
        %2040 = vmatmul.mubr.bf16.gmra.mxu0 %v1258
        %v2041 = vpop.f32.mrf.mxu0
        %v2042 = vadd.f32 0.0, %v2041
        %v2043 = vpop.f32.mrf.mxu0
        %v2044 = vpop.f32.mrf.mxu0
        %v2045 = vadd.f32 0.0, %v2044
        %v2046 = vpop.f32.mrf.mxu0
        %2047 = vmatprep.mubr.bf16.mxu0 0
        %2048 = vmatmul.mubr.bf16.gmra.mxu0 %v1261
        %v2049 = vpop.f32.mrf.mxu0
        %v2050 = vadd.f32 0.0, %v2049
        %v2051 = vpop.f32.mrf.mxu0
        %v2052 = vpop.f32.mrf.mxu0
        %v2053 = vadd.f32 0.0, %v2052
        %v2054 = vpop.f32.mrf.mxu0
        %2055 = vmatprep.mubr.bf16.mxu0 0
        %2056 = vmatmul.mubr.bf16.gmra.mxu0 %v1264
        %v2057 = vpop.f32.mrf.mxu0
        %v2058 = vadd.f32 0.0, %v2057
        %v2059 = vpop.f32.mrf.mxu0
        %v2060 = vpop.f32.mrf.mxu0
        %v2061 = vadd.f32 0.0, %v2060
        %v2062 = vpop.f32.mrf.mxu0
        %2063 = vmatprep.mubr.bf16.mxu0 0
        %2064 = vmatmul.mubr.bf16.gmra.mxu0 %v1267
        %v2065 = vpop.f32.mrf.mxu0
        %v2066 = vadd.f32 0.0, %v2065
        %v2067 = vpop.f32.mrf.mxu0
        %v2068 = vpop.f32.mrf.mxu0
        %v2069 = vadd.f32 0.0, %v2068
        %v2070 = vpop.f32.mrf.mxu0
        %2071 = vmatprep.mubr.bf16.mxu0 0
        %2072 = vmatmul.mubr.bf16.gmra.mxu0 %v1270
        %v2073 = vpop.f32.mrf.mxu0
        %v2074 = vadd.f32 0.0, %v2073
        %v2075 = vpop.f32.mrf.mxu0
        %v2076 = vpop.f32.mrf.mxu0
        %v2077 = vadd.f32 0.0, %v2076
        %v2078 = vpop.f32.mrf.mxu0
        %2079 = vmatprep.mubr.bf16.mxu0 0
        %2080 = vmatmul.mubr.bf16.gmra.mxu0 %v1273
        %v2081 = vpop.f32.mrf.mxu0
        %v2082 = vadd.f32 0.0, %v2081
        %v2083 = vpop.f32.mrf.mxu0
        %v2084 = vpop.f32.mrf.mxu0
        %v2085 = vadd.f32 0.0, %v2084
        %v2086 = vpop.f32.mrf.mxu0
        %2087 = vmatprep.mubr.bf16.mxu0 0
        %2088 = vmatmul.mubr.bf16.gmra.mxu0 %v1276
        %v2089 = vpop.f32.mrf.mxu0
        %v2090 = vadd.f32 0.0, %v2089
        %v2091 = vpop.f32.mrf.mxu0
        %v2092 = vpop.f32.mrf.mxu0
        %v2093 = vadd.f32 0.0, %v2092
        %v2094 = vpop.f32.mrf.mxu0
        %2095 = vmatprep.mubr.bf16.mxu0 0
        %2096 = vmatmul.mubr.bf16.gmra.mxu0 %v1938
        %v2097 = vpop.f32.mrf.mxu0
        %v2098 = vadd.f32 0.0, %v2097
        %v2099 = vpop.f32.mrf.mxu0
        %v2100 = vpop.f32.mrf.mxu0
        %v2101 = vadd.f32 0.0, %v2100
        %v2102 = vpop.f32.mrf.mxu0
        %2103 = vdwg.mxu0
        %v2104 = vadd.f32 %v1882, %v1978
        %v2105 = vadd.f32 %v1883, %v1981
        %v2106 = vadd.f32 %v1884, %v1986
        %v2107 = vadd.f32 %v1885, %v1989
        %v2108 = vadd.f32 %v1886, %v1994
        %v2109 = vadd.f32 %v1887, %v1997
        %v2110 = vadd.f32 %v1888, %v2002
        %v2111 = vadd.f32 %v1889, %v2005
        %v2112 = vadd.f32 %v1890, %v2010
        %v2113 = vadd.f32 %v1891, %v2013
        %v2114 = vadd.f32 %v1892, %v2018
        %v2115 = vadd.f32 %v1893, %v2021
        %v2116 = vadd.f32 %v1894, %v2026
        %v2117 = vadd.f32 %v1895, %v2029
        %v2118 = vadd.f32 %v1896, %v2034
        %v2119 = vadd.f32 %v1897, %v2037
        %v2120 = vadd.f32 %v1898, %v2042
        %v2121 = vadd.f32 %v1899, %v2045
        %v2122 = vadd.f32 %v1900, %v2050
        %v2123 = vadd.f32 %v1901, %v2053
        %v2124 = vadd.f32 %v1902, %v2058
        %v2125 = vadd.f32 %v1903, %v2061
        %v2126 = vadd.f32 %v1904, %v2066
        %v2127 = vadd.f32 %v1905, %v2069
        %v2128 = vadd.f32 %v1906, %v2074
        %v2129 = vadd.f32 %v1907, %v2077
        %v2130 = vadd.f32 %v1908, %v2082
        %v2131 = vadd.f32 %v1909, %v2085
        %v2132 = vadd.f32 %v1910, %v2090
        %v2133 = vadd.f32 %v1911, %v2093
        %v2134 = vadd.f32 %v1912, %v2098
        %v2135 = vadd.f32 %v1913, %v2101
        %v2136 = vpack.c.bf16 %v390, %v389
        %v2142 = vunpack.c.l.b16 %v422
        %v2143 = vunpack.c.l.b16 %v423
        %v2144 = vunpack.c.l.b16 %v424
        %v2145 = vunpack.c.l.b16 %v425
        %v2146 = vunpack.c.l.b16 %v426
        %v2147 = vpack.c.b16 %v2143, %v2142
        %v2148 = vpack.c.b16 %v2145, %v2144
        %v2149 = vpack.c.b16 %v2146, %v2146
        %v2153 = vsel %vm645, %v2136, 0
        %v2156 = vsel %vm694, %v2149, 0
        %2158 = vmatprep.subr.bf16.mxu0 0
        %2159 = vmatpush1.bf16.msra.mxu0 0
        %2160 = vmatprep.subr.bf16.mxu0 0
        %2161 = vmatpush1.bf16.msra.mxu0 0
        %2162 = vmatprep.subr.bf16.mxu0 0
        %2163 = vmatpush1.bf16.msra.mxu0 0
        %2164 = vmatprep.subr.bf16.mxu0 0
        %2165 = vmatpush1.bf16.msra.mxu0 0
        %2166 = vmatprep.subr.bf16.mxu0 0
        %2167 = vmatpush1.bf16.msra.mxu0 0
        %2168 = vmatprep.subr.bf16.mxu0 0
        %2169 = vmatpush1.bf16.msra.mxu0 %v2156
        %2170 = vmatprep.subr.bf16.mxu0 0
        %2171 = vmatpush1.bf16.msra.mxu0 %v2148
        %2172 = vmatprep.subr.bf16.mxu0 0
        %2173 = vmatpush1.bf16.msra.mxu0 %v2147
        %2174 = vmatprep.subr.bf16.mxu0 0
        %2175 = vmatpush2.bf16.msra.mxu0 0
        %2176 = vmatprep.subr.bf16.mxu0 0
        %2177 = vmatpush2.bf16.msra.mxu0 0
        %2178 = vmatprep.subr.bf16.mxu0 0
        %2179 = vmatpush2.bf16.msra.mxu0 0
        %2180 = vmatprep.subr.bf16.mxu0 0
        %2181 = vmatpush2.bf16.msra.mxu0 0
        %2182 = vmatprep.subr.bf16.mxu0 0
        %2183 = vmatpush2.bf16.msra.mxu0 0
        %2184 = vmatprep.subr.bf16.mxu0 0
        %2185 = vmatpush2.bf16.msra.mxu0 0
        %2186 = vmatprep.subr.bf16.mxu0 0
        %2187 = vmatpush2.bf16.msra.mxu0 0
        %2188 = vmatprep.subr.bf16.mxu0 0
        %2189 = vmatpush2.bf16.msra.mxu0 0
        %2190 = vmatprep.mubr.bf16.mxu0 0
        %2191 = vmatmul.mubr.bf16.gmra.mxu0 %v881
        %v2192 = vpop.f32.mrf.mxu0
        %v2193 = vadd.f32 0.0, %v2192
        %v2194 = vpop.f32.mrf.mxu0
        %v2195 = vpop.f32.mrf.mxu0
        %v2196 = vadd.f32 0.0, %v2195
        %v2197 = vpop.f32.mrf.mxu0
        %2198 = vmatprep.mubr.bf16.mxu0 0
        %2199 = vmatmul.mubr.bf16.gmra.mxu0 %v884
        %v2200 = vpop.f32.mrf.mxu0
        %v2201 = vadd.f32 0.0, %v2200
        %v2202 = vpop.f32.mrf.mxu0
        %v2203 = vpop.f32.mrf.mxu0
        %v2204 = vadd.f32 0.0, %v2203
        %v2205 = vpop.f32.mrf.mxu0
        %2206 = vmatprep.mubr.bf16.mxu0 0
        %2207 = vmatmul.mubr.bf16.gmra.mxu0 %v887
        %v2208 = vpop.f32.mrf.mxu0
        %v2209 = vadd.f32 0.0, %v2208
        %v2210 = vpop.f32.mrf.mxu0
        %v2211 = vpop.f32.mrf.mxu0
        %v2212 = vadd.f32 0.0, %v2211
        %v2213 = vpop.f32.mrf.mxu0
        %2214 = vmatprep.mubr.bf16.mxu0 0
        %2215 = vmatmul.mubr.bf16.gmra.mxu0 %v890
        %v2216 = vpop.f32.mrf.mxu0
        %v2217 = vadd.f32 0.0, %v2216
        %v2218 = vpop.f32.mrf.mxu0
        %v2219 = vpop.f32.mrf.mxu0
        %v2220 = vadd.f32 0.0, %v2219
        %v2221 = vpop.f32.mrf.mxu0
        %2222 = vmatprep.mubr.bf16.mxu0 0
        %2223 = vmatmul.mubr.bf16.gmra.mxu0 %v893
        %v2224 = vpop.f32.mrf.mxu0
        %v2225 = vadd.f32 0.0, %v2224
        %v2226 = vpop.f32.mrf.mxu0
        %v2227 = vpop.f32.mrf.mxu0
        %v2228 = vadd.f32 0.0, %v2227
        %v2229 = vpop.f32.mrf.mxu0
        %2230 = vmatprep.mubr.bf16.mxu0 0
        %2231 = vmatmul.mubr.bf16.gmra.mxu0 %v896
        %v2232 = vpop.f32.mrf.mxu0
        %v2233 = vadd.f32 0.0, %v2232
        %v2234 = vpop.f32.mrf.mxu0
        %v2235 = vpop.f32.mrf.mxu0
        %v2236 = vadd.f32 0.0, %v2235
        %v2237 = vpop.f32.mrf.mxu0
        %2238 = vmatprep.mubr.bf16.mxu0 0
        %2239 = vmatmul.mubr.bf16.gmra.mxu0 %v899
        %v2240 = vpop.f32.mrf.mxu0
        %v2241 = vadd.f32 0.0, %v2240
        %v2242 = vpop.f32.mrf.mxu0
        %v2243 = vpop.f32.mrf.mxu0
        %v2244 = vadd.f32 0.0, %v2243
        %v2245 = vpop.f32.mrf.mxu0
        %2246 = vmatprep.mubr.bf16.mxu0 0
        %2247 = vmatmul.mubr.bf16.gmra.mxu0 %v902
        %v2248 = vpop.f32.mrf.mxu0
        %v2249 = vadd.f32 0.0, %v2248
        %v2250 = vpop.f32.mrf.mxu0
        %v2251 = vpop.f32.mrf.mxu0
        %v2252 = vadd.f32 0.0, %v2251
        %v2253 = vpop.f32.mrf.mxu0
        %2254 = vmatprep.mubr.bf16.mxu0 0
        %2255 = vmatmul.mubr.bf16.gmra.mxu0 %v905
        %v2256 = vpop.f32.mrf.mxu0
        %v2257 = vadd.f32 0.0, %v2256
        %v2258 = vpop.f32.mrf.mxu0
        %v2259 = vpop.f32.mrf.mxu0
        %v2260 = vadd.f32 0.0, %v2259
        %v2261 = vpop.f32.mrf.mxu0
        %2262 = vmatprep.mubr.bf16.mxu0 0
        %2263 = vmatmul.mubr.bf16.gmra.mxu0 %v908
        %v2264 = vpop.f32.mrf.mxu0
        %v2265 = vadd.f32 0.0, %v2264
        %v2266 = vpop.f32.mrf.mxu0
        %v2267 = vpop.f32.mrf.mxu0
        %v2268 = vadd.f32 0.0, %v2267
        %v2269 = vpop.f32.mrf.mxu0
        %2270 = vmatprep.mubr.bf16.mxu0 0
        %2271 = vmatmul.mubr.bf16.gmra.mxu0 %v911
        %v2272 = vpop.f32.mrf.mxu0
        %v2273 = vadd.f32 0.0, %v2272
        %v2274 = vpop.f32.mrf.mxu0
        %v2275 = vpop.f32.mrf.mxu0
        %v2276 = vadd.f32 0.0, %v2275
        %v2277 = vpop.f32.mrf.mxu0
        %2278 = vmatprep.mubr.bf16.mxu0 0
        %2279 = vmatmul.mubr.bf16.gmra.mxu0 %v914
        %v2280 = vpop.f32.mrf.mxu0
        %v2281 = vadd.f32 0.0, %v2280
        %v2282 = vpop.f32.mrf.mxu0
        %v2283 = vpop.f32.mrf.mxu0
        %v2284 = vadd.f32 0.0, %v2283
        %v2285 = vpop.f32.mrf.mxu0
        %2286 = vmatprep.mubr.bf16.mxu0 0
        %2287 = vmatmul.mubr.bf16.gmra.mxu0 %v917
        %v2288 = vpop.f32.mrf.mxu0
        %v2289 = vadd.f32 0.0, %v2288
        %v2290 = vpop.f32.mrf.mxu0
        %v2291 = vpop.f32.mrf.mxu0
        %v2292 = vadd.f32 0.0, %v2291
        %v2293 = vpop.f32.mrf.mxu0
        %2294 = vmatprep.mubr.bf16.mxu0 0
        %2295 = vmatmul.mubr.bf16.gmra.mxu0 %v920
        %v2296 = vpop.f32.mrf.mxu0
        %v2297 = vadd.f32 0.0, %v2296
        %v2298 = vpop.f32.mrf.mxu0
        %v2299 = vpop.f32.mrf.mxu0
        %v2300 = vadd.f32 0.0, %v2299
        %v2301 = vpop.f32.mrf.mxu0
        %2302 = vmatprep.mubr.bf16.mxu0 0
        %2303 = vmatmul.mubr.bf16.gmra.mxu0 %v1491
        %v2304 = vpop.f32.mrf.mxu0
        %v2305 = vadd.f32 0.0, %v2304
        %v2306 = vpop.f32.mrf.mxu0
        %v2307 = vpop.f32.mrf.mxu0
        %v2308 = vadd.f32 0.0, %v2307
        %v2309 = vpop.f32.mrf.mxu0
        %2310 = vmatprep.mubr.bf16.mxu0 0
        %2311 = vmatmul.mubr.bf16.gmra.mxu0 %v2153
        %v2312 = vpop.f32.mrf.mxu0
        %v2313 = vadd.f32 0.0, %v2312
        %v2314 = vpop.f32.mrf.mxu0
        %v2315 = vpop.f32.mrf.mxu0
        %v2316 = vadd.f32 0.0, %v2315
        %v2317 = vpop.f32.mrf.mxu0
        %2318 = vdwg.mxu0
        %v2319 = vadd.f32 %v2104, %v2193
        %v2320 = vadd.f32 %v2105, %v2196
        %v2321 = vadd.f32 %v2106, %v2201
        %v2322 = vadd.f32 %v2107, %v2204
        %v2323 = vadd.f32 %v2108, %v2209
        %v2324 = vadd.f32 %v2109, %v2212
        %v2325 = vadd.f32 %v2110, %v2217
        %v2326 = vadd.f32 %v2111, %v2220
        %v2327 = vadd.f32 %v2112, %v2225
        %v2328 = vadd.f32 %v2113, %v2228
        %v2329 = vadd.f32 %v2114, %v2233
        %v2330 = vadd.f32 %v2115, %v2236
        %v2331 = vadd.f32 %v2116, %v2241
        %v2332 = vadd.f32 %v2117, %v2244
        %v2333 = vadd.f32 %v2118, %v2249
        %v2334 = vadd.f32 %v2119, %v2252
        %v2335 = vadd.f32 %v2120, %v2257
        %v2336 = vadd.f32 %v2121, %v2260
        %v2337 = vadd.f32 %v2122, %v2265
        %v2338 = vadd.f32 %v2123, %v2268
        %v2339 = vadd.f32 %v2124, %v2273
        %v2340 = vadd.f32 %v2125, %v2276
        %v2341 = vadd.f32 %v2126, %v2281
        %v2342 = vadd.f32 %v2127, %v2284
        %v2343 = vadd.f32 %v2128, %v2289
        %v2344 = vadd.f32 %v2129, %v2292
        %v2345 = vadd.f32 %v2130, %v2297
        %v2346 = vadd.f32 %v2131, %v2300
        %v2347 = vadd.f32 %v2132, %v2305
        %v2348 = vadd.f32 %v2133, %v2308
        %v2349 = vadd.f32 %v2134, %v2313
        %v2350 = vadd.f32 %v2135, %v2316
        %v2354 = vrot.slane %v389, 1
        %v2355 = vrot.slane %v390, 1
        %v2356 = vsel %vm501, %v2354, %v2355
        %v2357 = vrot.slane %v391, 1
        %v2358 = vsel %vm501, %v2355, %v2357
        %v2361 = vpack.c.bf16 %v2358, %v2356
        %v2367 = vunpack.c.l.b16 %v427
        %v2368 = vunpack.c.l.b16 %v428
        %v2369 = vunpack.c.l.b16 %v429
        %v2370 = vunpack.c.l.b16 %v430
        %v2371 = vunpack.c.l.b16 %v431
        %v2372 = vpack.c.b16 %v2368, %v2367
        %v2373 = vpack.c.b16 %v2370, %v2369
        %v2374 = vpack.c.b16 %v2371, %v2371
        %v2378 = vsel %vm645, %v2361, 0
        %v2381 = vsel %vm694, %v2374, 0
        %2383 = vmatprep.subr.bf16.mxu0 0
        %2384 = vmatpush1.bf16.msra.mxu0 0
        %2385 = vmatprep.subr.bf16.mxu0 0
        %2386 = vmatpush1.bf16.msra.mxu0 0
        %2387 = vmatprep.subr.bf16.mxu0 0
        %2388 = vmatpush1.bf16.msra.mxu0 0
        %2389 = vmatprep.subr.bf16.mxu0 0
        %2390 = vmatpush1.bf16.msra.mxu0 0
        %2391 = vmatprep.subr.bf16.mxu0 0
        %2392 = vmatpush1.bf16.msra.mxu0 0
        %2393 = vmatprep.subr.bf16.mxu0 0
        %2394 = vmatpush1.bf16.msra.mxu0 %v2381
        %2395 = vmatprep.subr.bf16.mxu0 0
        %2396 = vmatpush1.bf16.msra.mxu0 %v2373
        %2397 = vmatprep.subr.bf16.mxu0 0
        %2398 = vmatpush1.bf16.msra.mxu0 %v2372
        %2399 = vmatprep.subr.bf16.mxu0 0
        %2400 = vmatpush2.bf16.msra.mxu0 0
        %2401 = vmatprep.subr.bf16.mxu0 0
        %2402 = vmatpush2.bf16.msra.mxu0 0
        %2403 = vmatprep.subr.bf16.mxu0 0
        %2404 = vmatpush2.bf16.msra.mxu0 0
        %2405 = vmatprep.subr.bf16.mxu0 0
        %2406 = vmatpush2.bf16.msra.mxu0 0
        %2407 = vmatprep.subr.bf16.mxu0 0
        %2408 = vmatpush2.bf16.msra.mxu0 0
        %2409 = vmatprep.subr.bf16.mxu0 0
        %2410 = vmatpush2.bf16.msra.mxu0 0
        %2411 = vmatprep.subr.bf16.mxu0 0
        %2412 = vmatpush2.bf16.msra.mxu0 0
        %2413 = vmatprep.subr.bf16.mxu0 0
        %2414 = vmatpush2.bf16.msra.mxu0 0
        %2415 = vmatprep.mubr.bf16.mxu0 0
        %2416 = vmatmul.mubr.bf16.gmra.mxu0 %v653
        %v2417 = vpop.f32.mrf.mxu0
        %v2418 = vadd.f32 0.0, %v2417
        %v2419 = vpop.f32.mrf.mxu0
        %v2420 = vpop.f32.mrf.mxu0
        %v2421 = vadd.f32 0.0, %v2420
        %v2422 = vpop.f32.mrf.mxu0
        %2423 = vmatprep.mubr.bf16.mxu0 0
        %2424 = vmatmul.mubr.bf16.gmra.mxu0 %v656
        %v2425 = vpop.f32.mrf.mxu0
        %v2426 = vadd.f32 0.0, %v2425
        %v2427 = vpop.f32.mrf.mxu0
        %v2428 = vpop.f32.mrf.mxu0
        %v2429 = vadd.f32 0.0, %v2428
        %v2430 = vpop.f32.mrf.mxu0
        %2431 = vmatprep.mubr.bf16.mxu0 0
        %2432 = vmatmul.mubr.bf16.gmra.mxu0 %v659
        %v2433 = vpop.f32.mrf.mxu0
        %v2434 = vadd.f32 0.0, %v2433
        %v2435 = vpop.f32.mrf.mxu0
        %v2436 = vpop.f32.mrf.mxu0
        %v2437 = vadd.f32 0.0, %v2436
        %v2438 = vpop.f32.mrf.mxu0
        %2439 = vmatprep.mubr.bf16.mxu0 0
        %2440 = vmatmul.mubr.bf16.gmra.mxu0 %v662
        %v2441 = vpop.f32.mrf.mxu0
        %v2442 = vadd.f32 0.0, %v2441
        %v2443 = vpop.f32.mrf.mxu0
        %v2444 = vpop.f32.mrf.mxu0
        %v2445 = vadd.f32 0.0, %v2444
        %v2446 = vpop.f32.mrf.mxu0
        %2447 = vmatprep.mubr.bf16.mxu0 0
        %2448 = vmatmul.mubr.bf16.gmra.mxu0 %v665
        %v2449 = vpop.f32.mrf.mxu0
        %v2450 = vadd.f32 0.0, %v2449
        %v2451 = vpop.f32.mrf.mxu0
        %v2452 = vpop.f32.mrf.mxu0
        %v2453 = vadd.f32 0.0, %v2452
        %v2454 = vpop.f32.mrf.mxu0
        %2455 = vmatprep.mubr.bf16.mxu0 0
        %2456 = vmatmul.mubr.bf16.gmra.mxu0 %v668
        %v2457 = vpop.f32.mrf.mxu0
        %v2458 = vadd.f32 0.0, %v2457
        %v2459 = vpop.f32.mrf.mxu0
        %v2460 = vpop.f32.mrf.mxu0
        %v2461 = vadd.f32 0.0, %v2460
        %v2462 = vpop.f32.mrf.mxu0
        %2463 = vmatprep.mubr.bf16.mxu0 0
        %2464 = vmatmul.mubr.bf16.gmra.mxu0 %v671
        %v2465 = vpop.f32.mrf.mxu0
        %v2466 = vadd.f32 0.0, %v2465
        %v2467 = vpop.f32.mrf.mxu0
        %v2468 = vpop.f32.mrf.mxu0
        %v2469 = vadd.f32 0.0, %v2468
        %v2470 = vpop.f32.mrf.mxu0
        %2471 = vmatprep.mubr.bf16.mxu0 0
        %2472 = vmatmul.mubr.bf16.gmra.mxu0 %v674
        %v2473 = vpop.f32.mrf.mxu0
        %v2474 = vadd.f32 0.0, %v2473
        %v2475 = vpop.f32.mrf.mxu0
        %v2476 = vpop.f32.mrf.mxu0
        %v2477 = vadd.f32 0.0, %v2476
        %v2478 = vpop.f32.mrf.mxu0
        %2479 = vmatprep.mubr.bf16.mxu0 0
        %2480 = vmatmul.mubr.bf16.gmra.mxu0 %v677
        %v2481 = vpop.f32.mrf.mxu0
        %v2482 = vadd.f32 0.0, %v2481
        %v2483 = vpop.f32.mrf.mxu0
        %v2484 = vpop.f32.mrf.mxu0
        %v2485 = vadd.f32 0.0, %v2484
        %v2486 = vpop.f32.mrf.mxu0
        %2487 = vmatprep.mubr.bf16.mxu0 0
        %2488 = vmatmul.mubr.bf16.gmra.mxu0 %v680
        %v2489 = vpop.f32.mrf.mxu0
        %v2490 = vadd.f32 0.0, %v2489
        %v2491 = vpop.f32.mrf.mxu0
        %v2492 = vpop.f32.mrf.mxu0
        %v2493 = vadd.f32 0.0, %v2492
        %v2494 = vpop.f32.mrf.mxu0
        %2495 = vmatprep.mubr.bf16.mxu0 0
        %2496 = vmatmul.mubr.bf16.gmra.mxu0 %v683
        %v2497 = vpop.f32.mrf.mxu0
        %v2498 = vadd.f32 0.0, %v2497
        %v2499 = vpop.f32.mrf.mxu0
        %v2500 = vpop.f32.mrf.mxu0
        %v2501 = vadd.f32 0.0, %v2500
        %v2502 = vpop.f32.mrf.mxu0
        %2503 = vmatprep.mubr.bf16.mxu0 0
        %2504 = vmatmul.mubr.bf16.gmra.mxu0 %v686
        %v2505 = vpop.f32.mrf.mxu0
        %v2506 = vadd.f32 0.0, %v2505
        %v2507 = vpop.f32.mrf.mxu0
        %v2508 = vpop.f32.mrf.mxu0
        %v2509 = vadd.f32 0.0, %v2508
        %v2510 = vpop.f32.mrf.mxu0
        %2511 = vmatprep.mubr.bf16.mxu0 0
        %2512 = vmatmul.mubr.bf16.gmra.mxu0 %v689
        %v2513 = vpop.f32.mrf.mxu0
        %v2514 = vadd.f32 0.0, %v2513
        %v2515 = vpop.f32.mrf.mxu0
        %v2516 = vpop.f32.mrf.mxu0
        %v2517 = vadd.f32 0.0, %v2516
        %v2518 = vpop.f32.mrf.mxu0
        %2519 = vmatprep.mubr.bf16.mxu0 0
        %2520 = vmatmul.mubr.bf16.gmra.mxu0 %v692
        %v2521 = vpop.f32.mrf.mxu0
        %v2522 = vadd.f32 0.0, %v2521
        %v2523 = vpop.f32.mrf.mxu0
        %v2524 = vpop.f32.mrf.mxu0
        %v2525 = vadd.f32 0.0, %v2524
        %v2526 = vpop.f32.mrf.mxu0
        %2527 = vmatprep.mubr.bf16.mxu0 0
        %2528 = vmatmul.mubr.bf16.gmra.mxu0 %v1716
        %v2529 = vpop.f32.mrf.mxu0
        %v2530 = vadd.f32 0.0, %v2529
        %v2531 = vpop.f32.mrf.mxu0
        %v2532 = vpop.f32.mrf.mxu0
        %v2533 = vadd.f32 0.0, %v2532
        %v2534 = vpop.f32.mrf.mxu0
        %2535 = vmatprep.mubr.bf16.mxu0 0
        %2536 = vmatmul.mubr.bf16.gmra.mxu0 %v2378
        %v2537 = vpop.f32.mrf.mxu0
        %v2538 = vadd.f32 0.0, %v2537
        %v2539 = vpop.f32.mrf.mxu0
        %v2540 = vpop.f32.mrf.mxu0
        %v2541 = vadd.f32 0.0, %v2540
        %v2542 = vpop.f32.mrf.mxu0
        %2543 = vdwg.mxu0
        %v2544 = vadd.f32 %v2319, %v2418
        %v2545 = vadd.f32 %v2320, %v2421
        %v2546 = vadd.f32 %v2321, %v2426
        %v2547 = vadd.f32 %v2322, %v2429
        %v2548 = vadd.f32 %v2323, %v2434
        %v2549 = vadd.f32 %v2324, %v2437
        %v2550 = vadd.f32 %v2325, %v2442
        %v2551 = vadd.f32 %v2326, %v2445
        %v2552 = vadd.f32 %v2327, %v2450
        %v2553 = vadd.f32 %v2328, %v2453
        %v2554 = vadd.f32 %v2329, %v2458
        %v2555 = vadd.f32 %v2330, %v2461
        %v2556 = vadd.f32 %v2331, %v2466
        %v2557 = vadd.f32 %v2332, %v2469
        %v2558 = vadd.f32 %v2333, %v2474
        %v2559 = vadd.f32 %v2334, %v2477
        %v2560 = vadd.f32 %v2335, %v2482
        %v2561 = vadd.f32 %v2336, %v2485
        %v2562 = vadd.f32 %v2337, %v2490
        %v2563 = vadd.f32 %v2338, %v2493
        %v2564 = vadd.f32 %v2339, %v2498
        %v2565 = vadd.f32 %v2340, %v2501
        %v2566 = vadd.f32 %v2341, %v2506
        %v2567 = vadd.f32 %v2342, %v2509
        %v2568 = vadd.f32 %v2343, %v2514
        %v2569 = vadd.f32 %v2344, %v2517
        %v2570 = vadd.f32 %v2345, %v2522
        %v2571 = vadd.f32 %v2346, %v2525
        %v2572 = vadd.f32 %v2347, %v2530
        %v2573 = vadd.f32 %v2348, %v2533
        %v2574 = vadd.f32 %v2349, %v2538
        %v2575 = vadd.f32 %v2350, %v2541
        %v2576 = vrot.slane %v389, 2
        %v2577 = vrot.slane %v390, 2
        %v2578 = vsel %vm1086, %v2576, %v2577
        %v2579 = vrot.slane %v391, 2
        %v2580 = vsel %vm1086, %v2577, %v2579
        %v2583 = vpack.c.bf16 %v2580, %v2578
        %v2589 = vunpack.c.l.b16 %v432
        %v2590 = vunpack.c.l.b16 %v433
        %v2591 = vunpack.c.l.b16 %v434
        %v2592 = vunpack.c.l.b16 %v435
        %v2593 = vunpack.c.l.b16 %v436
        %v2594 = vpack.c.b16 %v2590, %v2589
        %v2595 = vpack.c.b16 %v2592, %v2591
        %v2596 = vpack.c.b16 %v2593, %v2593
        %v2600 = vsel %vm645, %v2583, 0
        %v2603 = vsel %vm694, %v2596, 0
        %2605 = vmatprep.subr.bf16.mxu0 0
        %2606 = vmatpush1.bf16.msra.mxu0 0
        %2607 = vmatprep.subr.bf16.mxu0 0
        %2608 = vmatpush1.bf16.msra.mxu0 0
        %2609 = vmatprep.subr.bf16.mxu0 0
        %2610 = vmatpush1.bf16.msra.mxu0 0
        %2611 = vmatprep.subr.bf16.mxu0 0
        %2612 = vmatpush1.bf16.msra.mxu0 0
        %2613 = vmatprep.subr.bf16.mxu0 0
        %2614 = vmatpush1.bf16.msra.mxu0 0
        %2615 = vmatprep.subr.bf16.mxu0 0
        %2616 = vmatpush1.bf16.msra.mxu0 %v2603
        %2617 = vmatprep.subr.bf16.mxu0 0
        %2618 = vmatpush1.bf16.msra.mxu0 %v2595
        %2619 = vmatprep.subr.bf16.mxu0 0
        %2620 = vmatpush1.bf16.msra.mxu0 %v2594
        %2621 = vmatprep.subr.bf16.mxu0 0
        %2622 = vmatpush2.bf16.msra.mxu0 0
        %2623 = vmatprep.subr.bf16.mxu0 0
        %2624 = vmatpush2.bf16.msra.mxu0 0
        %2625 = vmatprep.subr.bf16.mxu0 0
        %2626 = vmatpush2.bf16.msra.mxu0 0
        %2627 = vmatprep.subr.bf16.mxu0 0
        %2628 = vmatpush2.bf16.msra.mxu0 0
        %2629 = vmatprep.subr.bf16.mxu0 0
        %2630 = vmatpush2.bf16.msra.mxu0 0
        %2631 = vmatprep.subr.bf16.mxu0 0
        %2632 = vmatpush2.bf16.msra.mxu0 0
        %2633 = vmatprep.subr.bf16.mxu0 0
        %2634 = vmatpush2.bf16.msra.mxu0 0
        %2635 = vmatprep.subr.bf16.mxu0 0
        %2636 = vmatpush2.bf16.msra.mxu0 0
        %2637 = vmatprep.mubr.bf16.mxu0 0
        %2638 = vmatmul.mubr.bf16.gmra.mxu0 %v1237
        %v2639 = vpop.f32.mrf.mxu0
        %v2640 = vadd.f32 0.0, %v2639
        %v2641 = vpop.f32.mrf.mxu0
        %v2642 = vpop.f32.mrf.mxu0
        %v2643 = vadd.f32 0.0, %v2642
        %v2644 = vpop.f32.mrf.mxu0
        %2645 = vmatprep.mubr.bf16.mxu0 0
        %2646 = vmatmul.mubr.bf16.gmra.mxu0 %v1240
        %v2647 = vpop.f32.mrf.mxu0
        %v2648 = vadd.f32 0.0, %v2647
        %v2649 = vpop.f32.mrf.mxu0
        %v2650 = vpop.f32.mrf.mxu0
        %v2651 = vadd.f32 0.0, %v2650
        %v2652 = vpop.f32.mrf.mxu0
        %2653 = vmatprep.mubr.bf16.mxu0 0
        %2654 = vmatmul.mubr.bf16.gmra.mxu0 %v1243
        %v2655 = vpop.f32.mrf.mxu0
        %v2656 = vadd.f32 0.0, %v2655
        %v2657 = vpop.f32.mrf.mxu0
        %v2658 = vpop.f32.mrf.mxu0
        %v2659 = vadd.f32 0.0, %v2658
        %v2660 = vpop.f32.mrf.mxu0
        %2661 = vmatprep.mubr.bf16.mxu0 0
        %2662 = vmatmul.mubr.bf16.gmra.mxu0 %v1246
        %v2663 = vpop.f32.mrf.mxu0
        %v2664 = vadd.f32 0.0, %v2663
        %v2665 = vpop.f32.mrf.mxu0
        %v2666 = vpop.f32.mrf.mxu0
        %v2667 = vadd.f32 0.0, %v2666
        %v2668 = vpop.f32.mrf.mxu0
        %2669 = vmatprep.mubr.bf16.mxu0 0
        %2670 = vmatmul.mubr.bf16.gmra.mxu0 %v1249
        %v2671 = vpop.f32.mrf.mxu0
        %v2672 = vadd.f32 0.0, %v2671
        %v2673 = vpop.f32.mrf.mxu0
        %v2674 = vpop.f32.mrf.mxu0
        %v2675 = vadd.f32 0.0, %v2674
        %v2676 = vpop.f32.mrf.mxu0
        %2677 = vmatprep.mubr.bf16.mxu0 0
        %2678 = vmatmul.mubr.bf16.gmra.mxu0 %v1252
        %v2679 = vpop.f32.mrf.mxu0
        %v2680 = vadd.f32 0.0, %v2679
        %v2681 = vpop.f32.mrf.mxu0
        %v2682 = vpop.f32.mrf.mxu0
        %v2683 = vadd.f32 0.0, %v2682
        %v2684 = vpop.f32.mrf.mxu0
        %2685 = vmatprep.mubr.bf16.mxu0 0
        %2686 = vmatmul.mubr.bf16.gmra.mxu0 %v1255
        %v2687 = vpop.f32.mrf.mxu0
        %v2688 = vadd.f32 0.0, %v2687
        %v2689 = vpop.f32.mrf.mxu0
        %v2690 = vpop.f32.mrf.mxu0
        %v2691 = vadd.f32 0.0, %v2690
        %v2692 = vpop.f32.mrf.mxu0
        %2693 = vmatprep.mubr.bf16.mxu0 0
        %2694 = vmatmul.mubr.bf16.gmra.mxu0 %v1258
        %v2695 = vpop.f32.mrf.mxu0
        %v2696 = vadd.f32 0.0, %v2695
        %v2697 = vpop.f32.mrf.mxu0
        %v2698 = vpop.f32.mrf.mxu0
        %v2699 = vadd.f32 0.0, %v2698
        %v2700 = vpop.f32.mrf.mxu0
        %2701 = vmatprep.mubr.bf16.mxu0 0
        %2702 = vmatmul.mubr.bf16.gmra.mxu0 %v1261
        %v2703 = vpop.f32.mrf.mxu0
        %v2704 = vadd.f32 0.0, %v2703
        %v2705 = vpop.f32.mrf.mxu0
        %v2706 = vpop.f32.mrf.mxu0
        %v2707 = vadd.f32 0.0, %v2706
        %v2708 = vpop.f32.mrf.mxu0
        %2709 = vmatprep.mubr.bf16.mxu0 0
        %2710 = vmatmul.mubr.bf16.gmra.mxu0 %v1264
        %v2711 = vpop.f32.mrf.mxu0
        %v2712 = vadd.f32 0.0, %v2711
        %v2713 = vpop.f32.mrf.mxu0
        %v2714 = vpop.f32.mrf.mxu0
        %v2715 = vadd.f32 0.0, %v2714
        %v2716 = vpop.f32.mrf.mxu0
        %2717 = vmatprep.mubr.bf16.mxu0 0
        %2718 = vmatmul.mubr.bf16.gmra.mxu0 %v1267
        %v2719 = vpop.f32.mrf.mxu0
        %v2720 = vadd.f32 0.0, %v2719
        %v2721 = vpop.f32.mrf.mxu0
        %v2722 = vpop.f32.mrf.mxu0
        %v2723 = vadd.f32 0.0, %v2722
        %v2724 = vpop.f32.mrf.mxu0
        %2725 = vmatprep.mubr.bf16.mxu0 0
        %2726 = vmatmul.mubr.bf16.gmra.mxu0 %v1270
        %v2727 = vpop.f32.mrf.mxu0
        %v2728 = vadd.f32 0.0, %v2727
        %v2729 = vpop.f32.mrf.mxu0
        %v2730 = vpop.f32.mrf.mxu0
        %v2731 = vadd.f32 0.0, %v2730
        %v2732 = vpop.f32.mrf.mxu0
        %2733 = vmatprep.mubr.bf16.mxu0 0
        %2734 = vmatmul.mubr.bf16.gmra.mxu0 %v1273
        %v2735 = vpop.f32.mrf.mxu0
        %v2736 = vadd.f32 0.0, %v2735
        %v2737 = vpop.f32.mrf.mxu0
        %v2738 = vpop.f32.mrf.mxu0
        %v2739 = vadd.f32 0.0, %v2738
        %v2740 = vpop.f32.mrf.mxu0
        %2741 = vmatprep.mubr.bf16.mxu0 0
        %2742 = vmatmul.mubr.bf16.gmra.mxu0 %v1276
        %v2743 = vpop.f32.mrf.mxu0
        %v2744 = vadd.f32 0.0, %v2743
        %v2745 = vpop.f32.mrf.mxu0
        %v2746 = vpop.f32.mrf.mxu0
        %v2747 = vadd.f32 0.0, %v2746
        %v2748 = vpop.f32.mrf.mxu0
        %2749 = vmatprep.mubr.bf16.mxu0 0
        %2750 = vmatmul.mubr.bf16.gmra.mxu0 %v1938
        %v2751 = vpop.f32.mrf.mxu0
        %v2752 = vadd.f32 0.0, %v2751
        %v2753 = vpop.f32.mrf.mxu0
        %v2754 = vpop.f32.mrf.mxu0
        %v2755 = vadd.f32 0.0, %v2754
        %v2756 = vpop.f32.mrf.mxu0
        %2757 = vmatprep.mubr.bf16.mxu0 0
        %2758 = vmatmul.mubr.bf16.gmra.mxu0 %v2600
        %v2759 = vpop.f32.mrf.mxu0
        %v2760 = vadd.f32 0.0, %v2759
        %v2761 = vpop.f32.mrf.mxu0
        %v2762 = vpop.f32.mrf.mxu0
        %v2763 = vadd.f32 0.0, %v2762
        %v2764 = vpop.f32.mrf.mxu0
        %2765 = vdwg.mxu0
        %v2766 = vadd.f32 %v2544, %v2640
        %v2767 = vadd.f32 %v2545, %v2643
        %v2768 = vadd.f32 %v2546, %v2648
        %v2769 = vadd.f32 %v2547, %v2651
        %v2770 = vadd.f32 %v2548, %v2656
        %v2771 = vadd.f32 %v2549, %v2659
        %v2772 = vadd.f32 %v2550, %v2664
        %v2773 = vadd.f32 %v2551, %v2667
        %v2774 = vadd.f32 %v2552, %v2672
        %v2775 = vadd.f32 %v2553, %v2675
        %v2776 = vadd.f32 %v2554, %v2680
        %v2777 = vadd.f32 %v2555, %v2683
        %v2778 = vadd.f32 %v2556, %v2688
        %v2779 = vadd.f32 %v2557, %v2691
        %v2780 = vadd.f32 %v2558, %v2696
        %v2781 = vadd.f32 %v2559, %v2699
        %v2782 = vadd.f32 %v2560, %v2704
        %v2783 = vadd.f32 %v2561, %v2707
        %v2784 = vadd.f32 %v2562, %v2712
        %v2785 = vadd.f32 %v2563, %v2715
        %v2786 = vadd.f32 %v2564, %v2720
        %v2787 = vadd.f32 %v2565, %v2723
        %v2788 = vadd.f32 %v2566, %v2728
        %v2789 = vadd.f32 %v2567, %v2731
        %v2790 = vadd.f32 %v2568, %v2736
        %v2791 = vadd.f32 %v2569, %v2739
        %v2792 = vadd.f32 %v2570, %v2744
        %v2793 = vadd.f32 %v2571, %v2747
        %v2794 = vadd.f32 %v2572, %v2752
        %v2795 = vadd.f32 %v2573, %v2755
        %v2796 = vadd.f32 %v2574, %v2760
        %v2797 = vadd.f32 %v2575, %v2763
        %v2798 = vld [vmem:[%s3] sm:$0x1]
        %v2800 = vlaneseq
        %v2801 = vshrl.u32 %v2800, 7
        %v2802 = vsub.s32 0, %v2801
        %v2803 = vrot.slane %v2798, %v2802
        %v2805 = vadd.f32 %v2766, %v2803
        %v2806 = vadd.f32 %v2767, %v2803
        %v2807 = vadd.f32 %v2768, %v2803
        %v2808 = vadd.f32 %v2769, %v2803
        %v2809 = vadd.f32 %v2770, %v2803
        %v2810 = vadd.f32 %v2771, %v2803
        %v2811 = vadd.f32 %v2772, %v2803
        %v2812 = vadd.f32 %v2773, %v2803
        %v2813 = vadd.f32 %v2774, %v2803
        %v2814 = vadd.f32 %v2775, %v2803
        %v2815 = vadd.f32 %v2776, %v2803
        %v2816 = vadd.f32 %v2777, %v2803
        %v2817 = vadd.f32 %v2778, %v2803
        %v2818 = vadd.f32 %v2779, %v2803
        %v2819 = vadd.f32 %v2780, %v2803
        %v2820 = vadd.f32 %v2781, %v2803
        %v2821 = vadd.f32 %v2782, %v2803
        %v2822 = vadd.f32 %v2783, %v2803
        %v2823 = vadd.f32 %v2784, %v2803
        %v2824 = vadd.f32 %v2785, %v2803
        %v2825 = vadd.f32 %v2786, %v2803
        %v2826 = vadd.f32 %v2787, %v2803
        %v2827 = vadd.f32 %v2788, %v2803
        %v2828 = vadd.f32 %v2789, %v2803
        %v2829 = vadd.f32 %v2790, %v2803
        %v2830 = vadd.f32 %v2791, %v2803
        %v2831 = vadd.f32 %v2792, %v2803
        %v2832 = vadd.f32 %v2793, %v2803
        %v2833 = vadd.f32 %v2794, %v2803
        %v2834 = vadd.f32 %v2795, %v2803
        %v2835 = vadd.f32 %v2796, %v2803
        %v2836 = vadd.f32 %v2797, %v2803
        %v2837 = vld [vmem:[%s331] sm:$0xff]
        %v2838 = vld [vmem:[%s331 + $0x8] sm:$0xff]
        %v2839 = vld [vmem:[%s331 + $0x10] sm:$0xff]
        %v2840 = vld [vmem:[%s331 + $0x18] sm:$0xff]
        %v2841 = vld [vmem:[%s331 + $0x20] sm:$0xff]
        %v2842 = vld [vmem:[%s331 + $0x28] sm:$0xff]
        %v2843 = vld [vmem:[%s331 + $0x30] sm:$0xff]
        %v2844 = vld [vmem:[%s331 + $0x38] sm:$0xff]
        %v2845 = vld [vmem:[%s331 + $0x40] sm:$0xff]
        %v2846 = vld [vmem:[%s331 + $0x48] sm:$0xff]
        %v2847 = vld [vmem:[%s331 + $0x50] sm:$0xff]
        %v2848 = vld [vmem:[%s331 + $0x58] sm:$0xff]
        %v2849 = vld [vmem:[%s331 + $0x60] sm:$0xff]
        %v2850 = vld [vmem:[%s331 + $0x68] sm:$0xff]
        %v2851 = vld [vmem:[%s331 + $0x70] sm:$0xff]
        %v2852 = vld [vmem:[%s331 + $0x78] sm:$0xff]
        %v2853 = vld [vmem:[%s331 + $0x80] sm:$0xff]
        %v2854 = vld [vmem:[%s331 + $0x88] sm:$0xff]
        %v2855 = vld [vmem:[%s331 + $0x90] sm:$0xff]
        %v2856 = vld [vmem:[%s331 + $0x98] sm:$0xff]
        %v2857 = vld [vmem:[%s331 + $0xa0] sm:$0xff]
        %v2858 = vld [vmem:[%s331 + $0xa8] sm:$0xff]
        %v2859 = vld [vmem:[%s331 + $0xb0] sm:$0xff]
        %v2860 = vld [vmem:[%s331 + $0xb8] sm:$0xff]
        %v2861 = vld [vmem:[%s331 + $0xc0] sm:$0xff]
        %v2862 = vld [vmem:[%s331 + $0xc8] sm:$0xff]
        %v2863 = vld [vmem:[%s331 + $0xd0] sm:$0xff]
        %v2864 = vld [vmem:[%s331 + $0xd8] sm:$0xff]
        %v2865 = vld [vmem:[%s331 + $0xe0] sm:$0xff]
        %v2866 = vld [vmem:[%s331 + $0xe8] sm:$0xff]
        %v2867 = vld [vmem:[%s331 + $0xf0] sm:$0xff]
        %v2868 = vld [vmem:[%s331 + $0xf8] sm:$0xff]
        %v2869 = vld [vmem:[%s4] sm:$0xff]
        %v2870 = vld [vmem:[%s4 + $0x8] sm:$0xff]
        %v2871 = vld [vmem:[%s4 + $0x10] sm:$0xff]
        %v2872 = vld [vmem:[%s4 + $0x18] sm:$0xff]
        %v2873 = vld [vmem:[%s4 + $0x20] sm:$0xff]
        %v2874 = vld [vmem:[%s4 + $0x28] sm:$0xff]
        %v2875 = vld [vmem:[%s4 + $0x30] sm:$0xff]
        %v2876 = vld [vmem:[%s4 + $0x38] sm:$0xff]
        %v2877 = vld [vmem:[%s4 + $0x40] sm:$0xff]
        %v2878 = vld [vmem:[%s4 + $0x48] sm:$0xff]
        %v2879 = vld [vmem:[%s4 + $0x50] sm:$0xff]
        %v2880 = vld [vmem:[%s4 + $0x58] sm:$0xff]
        %v2881 = vld [vmem:[%s4 + $0x60] sm:$0xff]
        %v2882 = vld [vmem:[%s4 + $0x68] sm:$0xff]
        %v2883 = vld [vmem:[%s4 + $0x70] sm:$0xff]
        %v2884 = vld [vmem:[%s4 + $0x78] sm:$0xff]
        %v2885 = vld [vmem:[%s4 + $0x80] sm:$0xff]
        %v2886 = vld [vmem:[%s4 + $0x88] sm:$0xff]
        %v2887 = vld [vmem:[%s4 + $0x90] sm:$0xff]
        %v2888 = vld [vmem:[%s4 + $0x98] sm:$0xff]
        %v2889 = vld [vmem:[%s4 + $0xa0] sm:$0xff]
        %v2890 = vld [vmem:[%s4 + $0xa8] sm:$0xff]
        %v2891 = vld [vmem:[%s4 + $0xb0] sm:$0xff]
        %v2892 = vld [vmem:[%s4 + $0xb8] sm:$0xff]
        %v2893 = vld [vmem:[%s4 + $0xc0] sm:$0xff]
        %v2894 = vld [vmem:[%s4 + $0xc8] sm:$0xff]
        %v2895 = vld [vmem:[%s4 + $0xd0] sm:$0xff]
        %v2896 = vld [vmem:[%s4 + $0xd8] sm:$0xff]
        %v2897 = vld [vmem:[%s4 + $0xe0] sm:$0xff]
        %v2898 = vld [vmem:[%s4 + $0xe8] sm:$0xff]
        %v2899 = vld [vmem:[%s4 + $0xf0] sm:$0xff]
        %v2900 = vld [vmem:[%s4 + $0xf8] sm:$0xff]
        %v2901 = vld [vmem:[%s5] sm:$0xff]
        %v2902 = vld [vmem:[%s5 + $0x8] sm:$0xff]
        %v2903 = vld [vmem:[%s5 + $0x10] sm:$0xff]
        %v2904 = vld [vmem:[%s5 + $0x18] sm:$0xff]
        %v2905 = vld [vmem:[%s5 + $0x20] sm:$0xff]
        %v2906 = vld [vmem:[%s5 + $0x28] sm:$0xff]
        %v2907 = vld [vmem:[%s5 + $0x30] sm:$0xff]
        %v2908 = vld [vmem:[%s5 + $0x38] sm:$0xff]
        %v2909 = vld [vmem:[%s5 + $0x40] sm:$0xff]
        %v2910 = vld [vmem:[%s5 + $0x48] sm:$0xff]
        %v2911 = vld [vmem:[%s5 + $0x50] sm:$0xff]
        %v2912 = vld [vmem:[%s5 + $0x58] sm:$0xff]
        %v2913 = vld [vmem:[%s5 + $0x60] sm:$0xff]
        %v2914 = vld [vmem:[%s5 + $0x68] sm:$0xff]
        %v2915 = vld [vmem:[%s5 + $0x70] sm:$0xff]
        %v2916 = vld [vmem:[%s5 + $0x78] sm:$0xff]
        %v2917 = vld [vmem:[%s5 + $0x80] sm:$0xff]
        %v2918 = vld [vmem:[%s5 + $0x88] sm:$0xff]
        %v2919 = vld [vmem:[%s5 + $0x90] sm:$0xff]
        %v2920 = vld [vmem:[%s5 + $0x98] sm:$0xff]
        %v2921 = vld [vmem:[%s5 + $0xa0] sm:$0xff]
        %v2922 = vld [vmem:[%s5 + $0xa8] sm:$0xff]
        %v2923 = vld [vmem:[%s5 + $0xb0] sm:$0xff]
        %v2924 = vld [vmem:[%s5 + $0xb8] sm:$0xff]
        %v2925 = vld [vmem:[%s5 + $0xc0] sm:$0xff]
        %v2926 = vld [vmem:[%s5 + $0xc8] sm:$0xff]
        %v2927 = vld [vmem:[%s5 + $0xd0] sm:$0xff]
        %v2928 = vld [vmem:[%s5 + $0xd8] sm:$0xff]
        %v2929 = vld [vmem:[%s5 + $0xe0] sm:$0xff]
        %v2930 = vld [vmem:[%s5 + $0xe8] sm:$0xff]
        %v2931 = vld [vmem:[%s5 + $0xf0] sm:$0xff]
        %v2932 = vld [vmem:[%s5 + $0xf8] sm:$0xff]
        %v2933 = vld [vmem:[%s6] sm:$0xff]
        %v2934 = vld [vmem:[%s6 + $0x8] sm:$0xff]
        %v2935 = vld [vmem:[%s6 + $0x10] sm:$0xff]
        %v2936 = vld [vmem:[%s6 + $0x18] sm:$0xff]
        %v2937 = vld [vmem:[%s6 + $0x20] sm:$0xff]
        %v2938 = vld [vmem:[%s6 + $0x28] sm:$0xff]
        %v2939 = vld [vmem:[%s6 + $0x30] sm:$0xff]
        %v2940 = vld [vmem:[%s6 + $0x38] sm:$0xff]
        %v2941 = vld [vmem:[%s6 + $0x40] sm:$0xff]
        %v2942 = vld [vmem:[%s6 + $0x48] sm:$0xff]
        %v2943 = vld [vmem:[%s6 + $0x50] sm:$0xff]
        %v2944 = vld [vmem:[%s6 + $0x58] sm:$0xff]
        %v2945 = vld [vmem:[%s6 + $0x60] sm:$0xff]
        %v2946 = vld [vmem:[%s6 + $0x68] sm:$0xff]
        %v2947 = vld [vmem:[%s6 + $0x70] sm:$0xff]
        %v2948 = vld [vmem:[%s6 + $0x78] sm:$0xff]
        %v2949 = vld [vmem:[%s6 + $0x80] sm:$0xff]
        %v2950 = vld [vmem:[%s6 + $0x88] sm:$0xff]
        %v2951 = vld [vmem:[%s6 + $0x90] sm:$0xff]
        %v2952 = vld [vmem:[%s6 + $0x98] sm:$0xff]
        %v2953 = vld [vmem:[%s6 + $0xa0] sm:$0xff]
        %v2954 = vld [vmem:[%s6 + $0xa8] sm:$0xff]
        %v2955 = vld [vmem:[%s6 + $0xb0] sm:$0xff]
        %v2956 = vld [vmem:[%s6 + $0xb8] sm:$0xff]
        %v2957 = vld [vmem:[%s6 + $0xc0] sm:$0xff]
        %v2958 = vld [vmem:[%s6 + $0xc8] sm:$0xff]
        %v2959 = vld [vmem:[%s6 + $0xd0] sm:$0xff]
        %v2960 = vld [vmem:[%s6 + $0xd8] sm:$0xff]
        %v2961 = vld [vmem:[%s6 + $0xe0] sm:$0xff]
        %v2962 = vld [vmem:[%s6 + $0xe8] sm:$0xff]
        %v2963 = vld [vmem:[%s6 + $0xf0] sm:$0xff]
        %v2964 = vld [vmem:[%s6 + $0xf8] sm:$0xff]
        %v2965 = vmul.f32 %v2837, %v2869
        %v2966 = vmul.f32 %v2838, %v2870
        %v2967 = vmul.f32 %v2839, %v2871
        %v2968 = vmul.f32 %v2840, %v2872
        %v2969 = vmul.f32 %v2841, %v2873
        %v2970 = vmul.f32 %v2842, %v2874
        %v2971 = vmul.f32 %v2843, %v2875
        %v2972 = vmul.f32 %v2844, %v2876
        %v2973 = vmul.f32 %v2845, %v2877
        %v2974 = vmul.f32 %v2846, %v2878
        %v2975 = vmul.f32 %v2847, %v2879
        %v2976 = vmul.f32 %v2848, %v2880
        %v2977 = vmul.f32 %v2849, %v2881
        %v2978 = vmul.f32 %v2850, %v2882
        %v2979 = vmul.f32 %v2851, %v2883
        %v2980 = vmul.f32 %v2852, %v2884
        %v2981 = vmul.f32 %v2853, %v2885
        %v2982 = vmul.f32 %v2854, %v2886
        %v2983 = vmul.f32 %v2855, %v2887
        %v2984 = vmul.f32 %v2856, %v2888
        %v2985 = vmul.f32 %v2857, %v2889
        %v2986 = vmul.f32 %v2858, %v2890
        %v2987 = vmul.f32 %v2859, %v2891
        %v2988 = vmul.f32 %v2860, %v2892
        %v2989 = vmul.f32 %v2861, %v2893
        %v2990 = vmul.f32 %v2862, %v2894
        %v2991 = vmul.f32 %v2863, %v2895
        %v2992 = vmul.f32 %v2864, %v2896
        %v2993 = vmul.f32 %v2865, %v2897
        %v2994 = vmul.f32 %v2866, %v2898
        %v2995 = vmul.f32 %v2867, %v2899
        %v2996 = vmul.f32 %v2868, %v2900
        %v2997 = vadd.f32 %v2805, %v2965
        %v2998 = vadd.f32 %v2806, %v2966
        %v2999 = vadd.f32 %v2807, %v2967
        %v3000 = vadd.f32 %v2808, %v2968
        %v3001 = vadd.f32 %v2809, %v2969
        %v3002 = vadd.f32 %v2810, %v2970
        %v3003 = vadd.f32 %v2811, %v2971
        %v3004 = vadd.f32 %v2812, %v2972
        %v3005 = vadd.f32 %v2813, %v2973
        %v3006 = vadd.f32 %v2814, %v2974
        %v3007 = vadd.f32 %v2815, %v2975
        %v3008 = vadd.f32 %v2816, %v2976
        %v3009 = vadd.f32 %v2817, %v2977
        %v3010 = vadd.f32 %v2818, %v2978
        %v3011 = vadd.f32 %v2819, %v2979
        %v3012 = vadd.f32 %v2820, %v2980
        %v3013 = vadd.f32 %v2821, %v2981
        %v3014 = vadd.f32 %v2822, %v2982
        %v3015 = vadd.f32 %v2823, %v2983
        %v3016 = vadd.f32 %v2824, %v2984
        %v3017 = vadd.f32 %v2825, %v2985
        %v3018 = vadd.f32 %v2826, %v2986
        %v3019 = vadd.f32 %v2827, %v2987
        %v3020 = vadd.f32 %v2828, %v2988
        %v3021 = vadd.f32 %v2829, %v2989
        %v3022 = vadd.f32 %v2830, %v2990
        %v3023 = vadd.f32 %v2831, %v2991
        %v3024 = vadd.f32 %v2832, %v2992
        %v3025 = vadd.f32 %v2833, %v2993
        %v3026 = vadd.f32 %v2834, %v2994
        %v3027 = vadd.f32 %v2835, %v2995
        %v3028 = vadd.f32 %v2836, %v2996
        %v3029 = vxor.u32 %v2997, 2147483648
        %v3030 = vxor.u32 %v2998, 2147483648
        %v3031 = vxor.u32 %v2999, 2147483648
        %v3032 = vxor.u32 %v3000, 2147483648
        %v3033 = vxor.u32 %v3001, 2147483648
        %v3034 = vxor.u32 %v3002, 2147483648
        %v3035 = vxor.u32 %v3003, 2147483648
        %v3036 = vxor.u32 %v3004, 2147483648
        %v3037 = vxor.u32 %v3005, 2147483648
        %v3038 = vxor.u32 %v3006, 2147483648
        %v3039 = vxor.u32 %v3007, 2147483648
        %v3040 = vxor.u32 %v3008, 2147483648
        %v3041 = vxor.u32 %v3009, 2147483648
        %v3042 = vxor.u32 %v3010, 2147483648
        %v3043 = vxor.u32 %v3011, 2147483648
        %v3044 = vxor.u32 %v3012, 2147483648
        %v3045 = vxor.u32 %v3013, 2147483648
        %v3046 = vxor.u32 %v3014, 2147483648
        %v3047 = vxor.u32 %v3015, 2147483648
        %v3048 = vxor.u32 %v3016, 2147483648
        %v3049 = vxor.u32 %v3017, 2147483648
        %v3050 = vxor.u32 %v3018, 2147483648
        %v3051 = vxor.u32 %v3019, 2147483648
        %v3052 = vxor.u32 %v3020, 2147483648
        %v3053 = vxor.u32 %v3021, 2147483648
        %v3054 = vxor.u32 %v3022, 2147483648
        %v3055 = vxor.u32 %v3023, 2147483648
        %v3056 = vxor.u32 %v3024, 2147483648
        %v3057 = vxor.u32 %v3025, 2147483648
        %v3058 = vxor.u32 %v3026, 2147483648
        %v3059 = vxor.u32 %v3027, 2147483648
        %v3060 = vxor.u32 %v3028, 2147483648
        %v3061 = vmul.f32 %v3029, 1.442695
        %v3062 = vpow.pop %v3061
        %v3063 = vmul.f32 %v3030, 1.442695
        %v3064 = vpow.pop %v3063
        %v3065 = vmul.f32 %v3031, 1.442695
        %v3066 = vpow.pop %v3065
        %v3067 = vmul.f32 %v3032, 1.442695
        %v3068 = vpow.pop %v3067
        %v3069 = vmul.f32 %v3033, 1.442695
        %v3070 = vpow.pop %v3069
        %v3071 = vmul.f32 %v3034, 1.442695
        %v3072 = vpow.pop %v3071
        %v3073 = vmul.f32 %v3035, 1.442695
        %v3074 = vpow.pop %v3073
        %v3075 = vmul.f32 %v3036, 1.442695
        %v3076 = vpow.pop %v3075
        %v3077 = vmul.f32 %v3037, 1.442695
        %v3078 = vpow.pop %v3077
        %v3079 = vmul.f32 %v3038, 1.442695
        %v3080 = vpow.pop %v3079
        %v3081 = vmul.f32 %v3039, 1.442695
        %v3082 = vpow.pop %v3081
        %v3083 = vmul.f32 %v3040, 1.442695
        %v3084 = vpow.pop %v3083
        %v3085 = vmul.f32 %v3041, 1.442695
        %v3086 = vpow.pop %v3085
        %v3087 = vmul.f32 %v3042, 1.442695
        %v3088 = vpow.pop %v3087
        %v3089 = vmul.f32 %v3043, 1.442695
        %v3090 = vpow.pop %v3089
        %v3091 = vmul.f32 %v3044, 1.442695
        %v3092 = vpow.pop %v3091
        %v3093 = vmul.f32 %v3045, 1.442695
        %v3094 = vpow.pop %v3093
        %v3095 = vmul.f32 %v3046, 1.442695
        %v3096 = vpow.pop %v3095
        %v3097 = vmul.f32 %v3047, 1.442695
        %v3098 = vpow.pop %v3097
        %v3099 = vmul.f32 %v3048, 1.442695
        %v3100 = vpow.pop %v3099
        %v3101 = vmul.f32 %v3049, 1.442695
        %v3102 = vpow.pop %v3101
        %v3103 = vmul.f32 %v3050, 1.442695
        %v3104 = vpow.pop %v3103
        %v3105 = vmul.f32 %v3051, 1.442695
        %v3106 = vpow.pop %v3105
        %v3107 = vmul.f32 %v3052, 1.442695
        %v3108 = vpow.pop %v3107
        %v3109 = vmul.f32 %v3053, 1.442695
        %v3110 = vpow.pop %v3109
        %v3111 = vmul.f32 %v3054, 1.442695
        %v3112 = vpow.pop %v3111
        %v3113 = vmul.f32 %v3055, 1.442695
        %v3114 = vpow.pop %v3113
        %v3115 = vmul.f32 %v3056, 1.442695
        %v3116 = vpow.pop %v3115
        %v3117 = vmul.f32 %v3057, 1.442695
        %v3118 = vpow.pop %v3117
        %v3119 = vmul.f32 %v3058, 1.442695
        %v3120 = vpow.pop %v3119
        %v3121 = vmul.f32 %v3059, 1.442695
        %v3122 = vpow.pop %v3121
        %v3123 = vmul.f32 %v3060, 1.442695
        %v3124 = vpow.pop %v3123
        %v3125 = vadd.f32 %v3062, 1.0
        %v3126 = vadd.f32 %v3064, 1.0
        %v3127 = vadd.f32 %v3066, 1.0
        %v3128 = vadd.f32 %v3068, 1.0
        %v3129 = vadd.f32 %v3070, 1.0
        %v3130 = vadd.f32 %v3072, 1.0
        %v3131 = vadd.f32 %v3074, 1.0
        %v3132 = vadd.f32 %v3076, 1.0
        %v3133 = vadd.f32 %v3078, 1.0
        %v3134 = vadd.f32 %v3080, 1.0
        %v3135 = vadd.f32 %v3082, 1.0
        %v3136 = vadd.f32 %v3084, 1.0
        %v3137 = vadd.f32 %v3086, 1.0
        %v3138 = vadd.f32 %v3088, 1.0
        %v3139 = vadd.f32 %v3090, 1.0
        %v3140 = vadd.f32 %v3092, 1.0
        %v3141 = vadd.f32 %v3094, 1.0
        %v3142 = vadd.f32 %v3096, 1.0
        %v3143 = vadd.f32 %v3098, 1.0
        %v3144 = vadd.f32 %v3100, 1.0
        %v3145 = vadd.f32 %v3102, 1.0
        %v3146 = vadd.f32 %v3104, 1.0
        %v3147 = vadd.f32 %v3106, 1.0
        %v3148 = vadd.f32 %v3108, 1.0
        %v3149 = vadd.f32 %v3110, 1.0
        %v3150 = vadd.f32 %v3112, 1.0
        %v3151 = vadd.f32 %v3114, 1.0
        %v3152 = vadd.f32 %v3116, 1.0
        %v3153 = vadd.f32 %v3118, 1.0
        %v3154 = vadd.f32 %v3120, 1.0
        %v3155 = vadd.f32 %v3122, 1.0
        %v3156 = vadd.f32 %v3124, 1.0
        %v3157 = vrcp.pop %v3125
        %v3158 = vmul.f32 1.0, %v3157
        %v3159 = vrcp.pop %v3126
        %v3160 = vmul.f32 1.0, %v3159
        %v3161 = vrcp.pop %v3127
        %v3162 = vmul.f32 1.0, %v3161
        %v3163 = vrcp.pop %v3128
        %v3164 = vmul.f32 1.0, %v3163
        %v3165 = vrcp.pop %v3129
        %v3166 = vmul.f32 1.0, %v3165
        %v3167 = vrcp.pop %v3130
        %v3168 = vmul.f32 1.0, %v3167
        %v3169 = vrcp.pop %v3131
        %v3170 = vmul.f32 1.0, %v3169
        %v3171 = vrcp.pop %v3132
        %v3172 = vmul.f32 1.0, %v3171
        %v3173 = vrcp.pop %v3133
        %v3174 = vmul.f32 1.0, %v3173
        %v3175 = vrcp.pop %v3134
        %v3176 = vmul.f32 1.0, %v3175
        %v3177 = vrcp.pop %v3135
        %v3178 = vmul.f32 1.0, %v3177
        %v3179 = vrcp.pop %v3136
        %v3180 = vmul.f32 1.0, %v3179
        %v3181 = vrcp.pop %v3137
        %v3182 = vmul.f32 1.0, %v3181
        %v3183 = vrcp.pop %v3138
        %v3184 = vmul.f32 1.0, %v3183
        %v3185 = vrcp.pop %v3139
        %v3186 = vmul.f32 1.0, %v3185
        %v3187 = vrcp.pop %v3140
        %v3188 = vmul.f32 1.0, %v3187
        %v3189 = vrcp.pop %v3141
        %v3190 = vmul.f32 1.0, %v3189
        %v3191 = vrcp.pop %v3142
        %v3192 = vmul.f32 1.0, %v3191
        %v3193 = vrcp.pop %v3143
        %v3194 = vmul.f32 1.0, %v3193
        %v3195 = vrcp.pop %v3144
        %v3196 = vmul.f32 1.0, %v3195
        %v3197 = vrcp.pop %v3145
        %v3198 = vmul.f32 1.0, %v3197
        %v3199 = vrcp.pop %v3146
        %v3200 = vmul.f32 1.0, %v3199
        %v3201 = vrcp.pop %v3147
        %v3202 = vmul.f32 1.0, %v3201
        %v3203 = vrcp.pop %v3148
        %v3204 = vmul.f32 1.0, %v3203
        %v3205 = vrcp.pop %v3149
        %v3206 = vmul.f32 1.0, %v3205
        %v3207 = vrcp.pop %v3150
        %v3208 = vmul.f32 1.0, %v3207
        %v3209 = vrcp.pop %v3151
        %v3210 = vmul.f32 1.0, %v3209
        %v3211 = vrcp.pop %v3152
        %v3212 = vmul.f32 1.0, %v3211
        %v3213 = vrcp.pop %v3153
        %v3214 = vmul.f32 1.0, %v3213
        %v3215 = vrcp.pop %v3154
        %v3216 = vmul.f32 1.0, %v3215
        %v3217 = vrcp.pop %v3155
        %v3218 = vmul.f32 1.0, %v3217
        %v3219 = vrcp.pop %v3156
        %v3220 = vmul.f32 1.0, %v3219
        %v3221 = vmul.f32 %v2837, %v2901
        %v3222 = vmul.f32 %v2838, %v2902
        %v3223 = vmul.f32 %v2839, %v2903
        %v3224 = vmul.f32 %v2840, %v2904
        %v3225 = vmul.f32 %v2841, %v2905
        %v3226 = vmul.f32 %v2842, %v2906
        %v3227 = vmul.f32 %v2843, %v2907
        %v3228 = vmul.f32 %v2844, %v2908
        %v3229 = vmul.f32 %v2845, %v2909
        %v3230 = vmul.f32 %v2846, %v2910
        %v3231 = vmul.f32 %v2847, %v2911
        %v3232 = vmul.f32 %v2848, %v2912
        %v3233 = vmul.f32 %v2849, %v2913
        %v3234 = vmul.f32 %v2850, %v2914
        %v3235 = vmul.f32 %v2851, %v2915
        %v3236 = vmul.f32 %v2852, %v2916
        %v3237 = vmul.f32 %v2853, %v2917
        %v3238 = vmul.f32 %v2854, %v2918
        %v3239 = vmul.f32 %v2855, %v2919
        %v3240 = vmul.f32 %v2856, %v2920
        %v3241 = vmul.f32 %v2857, %v2921
        %v3242 = vmul.f32 %v2858, %v2922
        %v3243 = vmul.f32 %v2859, %v2923
        %v3244 = vmul.f32 %v2860, %v2924
        %v3245 = vmul.f32 %v2861, %v2925
        %v3246 = vmul.f32 %v2862, %v2926
        %v3247 = vmul.f32 %v2863, %v2927
        %v3248 = vmul.f32 %v2864, %v2928
        %v3249 = vmul.f32 %v2865, %v2929
        %v3250 = vmul.f32 %v2866, %v2930
        %v3251 = vmul.f32 %v2867, %v2931
        %v3252 = vmul.f32 %v2868, %v2932
        %3285 = vrot.lane.b32.xlu0 %v3221, 32
        %v3286 = vpop.permute.xlu0 %3285
        %3287 = vrot.lane.b32.xlu0 %v3222, 32
        %v3288 = vpop.permute.xlu0 %3287
        %3289 = vrot.lane.b32.xlu0 %v3223, 32
        %v3290 = vpop.permute.xlu0 %3289
        %3291 = vrot.lane.b32.xlu0 %v3224, 32
        %v3292 = vpop.permute.xlu0 %3291
        %3293 = vrot.lane.b32.xlu0 %v3225, 32
        %v3294 = vpop.permute.xlu0 %3293
        %3295 = vrot.lane.b32.xlu0 %v3226, 32
        %v3296 = vpop.permute.xlu0 %3295
        %3297 = vrot.lane.b32.xlu0 %v3227, 32
        %v3298 = vpop.permute.xlu0 %3297
        %3299 = vrot.lane.b32.xlu0 %v3228, 32
        %v3300 = vpop.permute.xlu0 %3299
        %3301 = vrot.lane.b32.xlu0 %v3229, 32
        %v3302 = vpop.permute.xlu0 %3301
        %3303 = vrot.lane.b32.xlu0 %v3230, 32
        %v3304 = vpop.permute.xlu0 %3303
        %3305 = vrot.lane.b32.xlu0 %v3231, 32
        %v3306 = vpop.permute.xlu0 %3305
        %3307 = vrot.lane.b32.xlu0 %v3232, 32
        %v3308 = vpop.permute.xlu0 %3307
        %3309 = vrot.lane.b32.xlu0 %v3233, 32
        %v3310 = vpop.permute.xlu0 %3309
        %3311 = vrot.lane.b32.xlu0 %v3234, 32
        %v3312 = vpop.permute.xlu0 %3311
        %3313 = vrot.lane.b32.xlu0 %v3235, 32
        %v3314 = vpop.permute.xlu0 %3313
        %3315 = vrot.lane.b32.xlu0 %v3236, 32
        %v3316 = vpop.permute.xlu0 %3315
        %3317 = vrot.lane.b32.xlu0 %v3237, 32
        %v3318 = vpop.permute.xlu0 %3317
        %3319 = vrot.lane.b32.xlu0 %v3238, 32
        %v3320 = vpop.permute.xlu0 %3319
        %3321 = vrot.lane.b32.xlu0 %v3239, 32
        %v3322 = vpop.permute.xlu0 %3321
        %3323 = vrot.lane.b32.xlu0 %v3240, 32
        %v3324 = vpop.permute.xlu0 %3323
        %3325 = vrot.lane.b32.xlu0 %v3241, 32
        %v3326 = vpop.permute.xlu0 %3325
        %3327 = vrot.lane.b32.xlu0 %v3242, 32
        %v3328 = vpop.permute.xlu0 %3327
        %3329 = vrot.lane.b32.xlu0 %v3243, 32
        %v3330 = vpop.permute.xlu0 %3329
        %3331 = vrot.lane.b32.xlu0 %v3244, 32
        %v3332 = vpop.permute.xlu0 %3331
        %3333 = vrot.lane.b32.xlu0 %v3245, 32
        %v3334 = vpop.permute.xlu0 %3333
        %3335 = vrot.lane.b32.xlu0 %v3246, 32
        %v3336 = vpop.permute.xlu0 %3335
        %3337 = vrot.lane.b32.xlu0 %v3247, 32
        %v3338 = vpop.permute.xlu0 %3337
        %3339 = vrot.lane.b32.xlu0 %v3248, 32
        %v3340 = vpop.permute.xlu0 %3339
        %3341 = vrot.lane.b32.xlu0 %v3249, 32
        %v3342 = vpop.permute.xlu0 %3341
        %3343 = vrot.lane.b32.xlu0 %v3250, 32
        %v3344 = vpop.permute.xlu0 %3343
        %3345 = vrot.lane.b32.xlu0 %v3251, 32
        %v3346 = vpop.permute.xlu0 %3345
        %3347 = vrot.lane.b32.xlu0 %v3252, 32
        %v3348 = vpop.permute.xlu0 %3347
        %v3381 = vadd.f32 %v2805, %v3286
        %v3382 = vadd.f32 %v2806, %v3288
        %v3383 = vadd.f32 %v2807, %v3290
        %v3384 = vadd.f32 %v2808, %v3292
        %v3385 = vadd.f32 %v2809, %v3294
        %v3386 = vadd.f32 %v2810, %v3296
        %v3387 = vadd.f32 %v2811, %v3298
        %v3388 = vadd.f32 %v2812, %v3300
        %v3389 = vadd.f32 %v2813, %v3302
        %v3390 = vadd.f32 %v2814, %v3304
        %v3391 = vadd.f32 %v2815, %v3306
        %v3392 = vadd.f32 %v2816, %v3308
        %v3393 = vadd.f32 %v2817, %v3310
        %v3394 = vadd.f32 %v2818, %v3312
        %v3395 = vadd.f32 %v2819, %v3314
        %v3396 = vadd.f32 %v2820, %v3316
        %v3397 = vadd.f32 %v2821, %v3318
        %v3398 = vadd.f32 %v2822, %v3320
        %v3399 = vadd.f32 %v2823, %v3322
        %v3400 = vadd.f32 %v2824, %v3324
        %v3401 = vadd.f32 %v2825, %v3326
        %v3402 = vadd.f32 %v2826, %v3328
        %v3403 = vadd.f32 %v2827, %v3330
        %v3404 = vadd.f32 %v2828, %v3332
        %v3405 = vadd.f32 %v2829, %v3334
        %v3406 = vadd.f32 %v2830, %v3336
        %v3407 = vadd.f32 %v2831, %v3338
        %v3408 = vadd.f32 %v2832, %v3340
        %v3409 = vadd.f32 %v2833, %v3342
        %v3410 = vadd.f32 %v2834, %v3344
        %v3411 = vadd.f32 %v2835, %v3346
        %v3412 = vadd.f32 %v2836, %v3348
        %v3413 = vxor.u32 %v3381, 2147483648
        %v3414 = vxor.u32 %v3382, 2147483648
        %v3415 = vxor.u32 %v3383, 2147483648
        %v3416 = vxor.u32 %v3384, 2147483648
        %v3417 = vxor.u32 %v3385, 2147483648
        %v3418 = vxor.u32 %v3386, 2147483648
        %v3419 = vxor.u32 %v3387, 2147483648
        %v3420 = vxor.u32 %v3388, 2147483648
        %v3421 = vxor.u32 %v3389, 2147483648
        %v3422 = vxor.u32 %v3390, 2147483648
        %v3423 = vxor.u32 %v3391, 2147483648
        %v3424 = vxor.u32 %v3392, 2147483648
        %v3425 = vxor.u32 %v3393, 2147483648
        %v3426 = vxor.u32 %v3394, 2147483648
        %v3427 = vxor.u32 %v3395, 2147483648
        %v3428 = vxor.u32 %v3396, 2147483648
        %v3429 = vxor.u32 %v3397, 2147483648
        %v3430 = vxor.u32 %v3398, 2147483648
        %v3431 = vxor.u32 %v3399, 2147483648
        %v3432 = vxor.u32 %v3400, 2147483648
        %v3433 = vxor.u32 %v3401, 2147483648
        %v3434 = vxor.u32 %v3402, 2147483648
        %v3435 = vxor.u32 %v3403, 2147483648
        %v3436 = vxor.u32 %v3404, 2147483648
        %v3437 = vxor.u32 %v3405, 2147483648
        %v3438 = vxor.u32 %v3406, 2147483648
        %v3439 = vxor.u32 %v3407, 2147483648
        %v3440 = vxor.u32 %v3408, 2147483648
        %v3441 = vxor.u32 %v3409, 2147483648
        %v3442 = vxor.u32 %v3410, 2147483648
        %v3443 = vxor.u32 %v3411, 2147483648
        %v3444 = vxor.u32 %v3412, 2147483648
        %v3445 = vmul.f32 %v3413, 1.442695
        %v3446 = vpow.pop %v3445
        %v3447 = vmul.f32 %v3414, 1.442695
        %v3448 = vpow.pop %v3447
        %v3449 = vmul.f32 %v3415, 1.442695
        %v3450 = vpow.pop %v3449
        %v3451 = vmul.f32 %v3416, 1.442695
        %v3452 = vpow.pop %v3451
        %v3453 = vmul.f32 %v3417, 1.442695
        %v3454 = vpow.pop %v3453
        %v3455 = vmul.f32 %v3418, 1.442695
        %v3456 = vpow.pop %v3455
        %v3457 = vmul.f32 %v3419, 1.442695
        %v3458 = vpow.pop %v3457
        %v3459 = vmul.f32 %v3420, 1.442695
        %v3460 = vpow.pop %v3459
        %v3461 = vmul.f32 %v3421, 1.442695
        %v3462 = vpow.pop %v3461
        %v3463 = vmul.f32 %v3422, 1.442695
        %v3464 = vpow.pop %v3463
        %v3465 = vmul.f32 %v3423, 1.442695
        %v3466 = vpow.pop %v3465
        %v3467 = vmul.f32 %v3424, 1.442695
        %v3468 = vpow.pop %v3467
        %v3469 = vmul.f32 %v3425, 1.442695
        %v3470 = vpow.pop %v3469
        %v3471 = vmul.f32 %v3426, 1.442695
        %v3472 = vpow.pop %v3471
        %v3473 = vmul.f32 %v3427, 1.442695
        %v3474 = vpow.pop %v3473
        %v3475 = vmul.f32 %v3428, 1.442695
        %v3476 = vpow.pop %v3475
        %v3477 = vmul.f32 %v3429, 1.442695
        %v3478 = vpow.pop %v3477
        %v3479 = vmul.f32 %v3430, 1.442695
        %v3480 = vpow.pop %v3479
        %v3481 = vmul.f32 %v3431, 1.442695
        %v3482 = vpow.pop %v3481
        %v3483 = vmul.f32 %v3432, 1.442695
        %v3484 = vpow.pop %v3483
        %v3485 = vmul.f32 %v3433, 1.442695
        %v3486 = vpow.pop %v3485
        %v3487 = vmul.f32 %v3434, 1.442695
        %v3488 = vpow.pop %v3487
        %v3489 = vmul.f32 %v3435, 1.442695
        %v3490 = vpow.pop %v3489
        %v3491 = vmul.f32 %v3436, 1.442695
        %v3492 = vpow.pop %v3491
        %v3493 = vmul.f32 %v3437, 1.442695
        %v3494 = vpow.pop %v3493
        %v3495 = vmul.f32 %v3438, 1.442695
        %v3496 = vpow.pop %v3495
        %v3497 = vmul.f32 %v3439, 1.442695
        %v3498 = vpow.pop %v3497
        %v3499 = vmul.f32 %v3440, 1.442695
        %v3500 = vpow.pop %v3499
        %v3501 = vmul.f32 %v3441, 1.442695
        %v3502 = vpow.pop %v3501
        %v3503 = vmul.f32 %v3442, 1.442695
        %v3504 = vpow.pop %v3503
        %v3505 = vmul.f32 %v3443, 1.442695
        %v3506 = vpow.pop %v3505
        %v3507 = vmul.f32 %v3444, 1.442695
        %v3508 = vpow.pop %v3507
        %v3509 = vadd.f32 %v3446, 1.0
        %v3510 = vadd.f32 %v3448, 1.0
        %v3511 = vadd.f32 %v3450, 1.0
        %v3512 = vadd.f32 %v3452, 1.0
        %v3513 = vadd.f32 %v3454, 1.0
        %v3514 = vadd.f32 %v3456, 1.0
        %v3515 = vadd.f32 %v3458, 1.0
        %v3516 = vadd.f32 %v3460, 1.0
        %v3517 = vadd.f32 %v3462, 1.0
        %v3518 = vadd.f32 %v3464, 1.0
        %v3519 = vadd.f32 %v3466, 1.0
        %v3520 = vadd.f32 %v3468, 1.0
        %v3521 = vadd.f32 %v3470, 1.0
        %v3522 = vadd.f32 %v3472, 1.0
        %v3523 = vadd.f32 %v3474, 1.0
        %v3524 = vadd.f32 %v3476, 1.0
        %v3525 = vadd.f32 %v3478, 1.0
        %v3526 = vadd.f32 %v3480, 1.0
        %v3527 = vadd.f32 %v3482, 1.0
        %v3528 = vadd.f32 %v3484, 1.0
        %v3529 = vadd.f32 %v3486, 1.0
        %v3530 = vadd.f32 %v3488, 1.0
        %v3531 = vadd.f32 %v3490, 1.0
        %v3532 = vadd.f32 %v3492, 1.0
        %v3533 = vadd.f32 %v3494, 1.0
        %v3534 = vadd.f32 %v3496, 1.0
        %v3535 = vadd.f32 %v3498, 1.0
        %v3536 = vadd.f32 %v3500, 1.0
        %v3537 = vadd.f32 %v3502, 1.0
        %v3538 = vadd.f32 %v3504, 1.0
        %v3539 = vadd.f32 %v3506, 1.0
        %v3540 = vadd.f32 %v3508, 1.0
        %v3541 = vrcp.pop %v3509
        %v3542 = vmul.f32 1.0, %v3541
        %v3543 = vrcp.pop %v3510
        %v3544 = vmul.f32 1.0, %v3543
        %v3545 = vrcp.pop %v3511
        %v3546 = vmul.f32 1.0, %v3545
        %v3547 = vrcp.pop %v3512
        %v3548 = vmul.f32 1.0, %v3547
        %v3549 = vrcp.pop %v3513
        %v3550 = vmul.f32 1.0, %v3549
        %v3551 = vrcp.pop %v3514
        %v3552 = vmul.f32 1.0, %v3551
        %v3553 = vrcp.pop %v3515
        %v3554 = vmul.f32 1.0, %v3553
        %v3555 = vrcp.pop %v3516
        %v3556 = vmul.f32 1.0, %v3555
        %v3557 = vrcp.pop %v3517
        %v3558 = vmul.f32 1.0, %v3557
        %v3559 = vrcp.pop %v3518
        %v3560 = vmul.f32 1.0, %v3559
        %v3561 = vrcp.pop %v3519
        %v3562 = vmul.f32 1.0, %v3561
        %v3563 = vrcp.pop %v3520
        %v3564 = vmul.f32 1.0, %v3563
        %v3565 = vrcp.pop %v3521
        %v3566 = vmul.f32 1.0, %v3565
        %v3567 = vrcp.pop %v3522
        %v3568 = vmul.f32 1.0, %v3567
        %v3569 = vrcp.pop %v3523
        %v3570 = vmul.f32 1.0, %v3569
        %v3571 = vrcp.pop %v3524
        %v3572 = vmul.f32 1.0, %v3571
        %v3573 = vrcp.pop %v3525
        %v3574 = vmul.f32 1.0, %v3573
        %v3575 = vrcp.pop %v3526
        %v3576 = vmul.f32 1.0, %v3575
        %v3577 = vrcp.pop %v3527
        %v3578 = vmul.f32 1.0, %v3577
        %v3579 = vrcp.pop %v3528
        %v3580 = vmul.f32 1.0, %v3579
        %v3581 = vrcp.pop %v3529
        %v3582 = vmul.f32 1.0, %v3581
        %v3583 = vrcp.pop %v3530
        %v3584 = vmul.f32 1.0, %v3583
        %v3585 = vrcp.pop %v3531
        %v3586 = vmul.f32 1.0, %v3585
        %v3587 = vrcp.pop %v3532
        %v3588 = vmul.f32 1.0, %v3587
        %v3589 = vrcp.pop %v3533
        %v3590 = vmul.f32 1.0, %v3589
        %v3591 = vrcp.pop %v3534
        %v3592 = vmul.f32 1.0, %v3591
        %v3593 = vrcp.pop %v3535
        %v3594 = vmul.f32 1.0, %v3593
        %v3595 = vrcp.pop %v3536
        %v3596 = vmul.f32 1.0, %v3595
        %v3597 = vrcp.pop %v3537
        %v3598 = vmul.f32 1.0, %v3597
        %v3599 = vrcp.pop %v3538
        %v3600 = vmul.f32 1.0, %v3599
        %v3601 = vrcp.pop %v3539
        %v3602 = vmul.f32 1.0, %v3601
        %v3603 = vrcp.pop %v3540
        %v3604 = vmul.f32 1.0, %v3603
        %3637 = vrot.lane.b32.xlu0 %v2837, 32
        %v3638 = vpop.permute.xlu0 %3637
        %3639 = vrot.lane.b32.xlu0 %v2838, 32
        %v3640 = vpop.permute.xlu0 %3639
        %3641 = vrot.lane.b32.xlu0 %v2839, 32
        %v3642 = vpop.permute.xlu0 %3641
        %3643 = vrot.lane.b32.xlu0 %v2840, 32
        %v3644 = vpop.permute.xlu0 %3643
        %3645 = vrot.lane.b32.xlu0 %v2841, 32
        %v3646 = vpop.permute.xlu0 %3645
        %3647 = vrot.lane.b32.xlu0 %v2842, 32
        %v3648 = vpop.permute.xlu0 %3647
        %3649 = vrot.lane.b32.xlu0 %v2843, 32
        %v3650 = vpop.permute.xlu0 %3649
        %3651 = vrot.lane.b32.xlu0 %v2844, 32
        %v3652 = vpop.permute.xlu0 %3651
        %3653 = vrot.lane.b32.xlu0 %v2845, 32
        %v3654 = vpop.permute.xlu0 %3653
        %3655 = vrot.lane.b32.xlu0 %v2846, 32
        %v3656 = vpop.permute.xlu0 %3655
        %3657 = vrot.lane.b32.xlu0 %v2847, 32
        %v3658 = vpop.permute.xlu0 %3657
        %3659 = vrot.lane.b32.xlu0 %v2848, 32
        %v3660 = vpop.permute.xlu0 %3659
        %3661 = vrot.lane.b32.xlu0 %v2849, 32
        %v3662 = vpop.permute.xlu0 %3661
        %3663 = vrot.lane.b32.xlu0 %v2850, 32
        %v3664 = vpop.permute.xlu0 %3663
        %3665 = vrot.lane.b32.xlu0 %v2851, 32
        %v3666 = vpop.permute.xlu0 %3665
        %3667 = vrot.lane.b32.xlu0 %v2852, 32
        %v3668 = vpop.permute.xlu0 %3667
        %3669 = vrot.lane.b32.xlu0 %v2853, 32
        %v3670 = vpop.permute.xlu0 %3669
        %3671 = vrot.lane.b32.xlu0 %v2854, 32
        %v3672 = vpop.permute.xlu0 %3671
        %3673 = vrot.lane.b32.xlu0 %v2855, 32
        %v3674 = vpop.permute.xlu0 %3673
        %3675 = vrot.lane.b32.xlu0 %v2856, 32
        %v3676 = vpop.permute.xlu0 %3675
        %3677 = vrot.lane.b32.xlu0 %v2857, 32
        %v3678 = vpop.permute.xlu0 %3677
        %3679 = vrot.lane.b32.xlu0 %v2858, 32
        %v3680 = vpop.permute.xlu0 %3679
        %3681 = vrot.lane.b32.xlu0 %v2859, 32
        %v3682 = vpop.permute.xlu0 %3681
        %3683 = vrot.lane.b32.xlu0 %v2860, 32
        %v3684 = vpop.permute.xlu0 %3683
        %3685 = vrot.lane.b32.xlu0 %v2861, 32
        %v3686 = vpop.permute.xlu0 %3685
        %3687 = vrot.lane.b32.xlu0 %v2862, 32
        %v3688 = vpop.permute.xlu0 %3687
        %3689 = vrot.lane.b32.xlu0 %v2863, 32
        %v3690 = vpop.permute.xlu0 %3689
        %3691 = vrot.lane.b32.xlu0 %v2864, 32
        %v3692 = vpop.permute.xlu0 %3691
        %3693 = vrot.lane.b32.xlu0 %v2865, 32
        %v3694 = vpop.permute.xlu0 %3693
        %3695 = vrot.lane.b32.xlu0 %v2866, 32
        %v3696 = vpop.permute.xlu0 %3695
        %3697 = vrot.lane.b32.xlu0 %v2867, 32
        %v3698 = vpop.permute.xlu0 %3697
        %3699 = vrot.lane.b32.xlu0 %v2868, 32
        %v3700 = vpop.permute.xlu0 %3699
        %v3733 = vmul.f32 %v3542, %v3638
        %v3734 = vmul.f32 %v3544, %v3640
        %v3735 = vmul.f32 %v3546, %v3642
        %v3736 = vmul.f32 %v3548, %v3644
        %v3737 = vmul.f32 %v3550, %v3646
        %v3738 = vmul.f32 %v3552, %v3648
        %v3739 = vmul.f32 %v3554, %v3650
        %v3740 = vmul.f32 %v3556, %v3652
        %v3741 = vmul.f32 %v3558, %v3654
        %v3742 = vmul.f32 %v3560, %v3656
        %v3743 = vmul.f32 %v3562, %v3658
        %v3744 = vmul.f32 %v3564, %v3660
        %v3745 = vmul.f32 %v3566, %v3662
        %v3746 = vmul.f32 %v3568, %v3664
        %v3747 = vmul.f32 %v3570, %v3666
        %v3748 = vmul.f32 %v3572, %v3668
        %v3749 = vmul.f32 %v3574, %v3670
        %v3750 = vmul.f32 %v3576, %v3672
        %v3751 = vmul.f32 %v3578, %v3674
        %v3752 = vmul.f32 %v3580, %v3676
        %v3753 = vmul.f32 %v3582, %v3678
        %v3754 = vmul.f32 %v3584, %v3680
        %v3755 = vmul.f32 %v3586, %v3682
        %v3756 = vmul.f32 %v3588, %v3684
        %v3757 = vmul.f32 %v3590, %v3686
        %v3758 = vmul.f32 %v3592, %v3688
        %v3759 = vmul.f32 %v3594, %v3690
        %v3760 = vmul.f32 %v3596, %v3692
        %v3761 = vmul.f32 %v3598, %v3694
        %v3762 = vmul.f32 %v3600, %v3696
        %v3763 = vmul.f32 %v3602, %v3698
        %v3764 = vmul.f32 %v3604, %v3700
        %v3765 = vtanh.pop %v2805
        %v3766 = vtanh.pop %v2806
        %v3767 = vtanh.pop %v2807
        %v3768 = vtanh.pop %v2808
        %v3769 = vtanh.pop %v2809
        %v3770 = vtanh.pop %v2810
        %v3771 = vtanh.pop %v2811
        %v3772 = vtanh.pop %v2812
        %v3773 = vtanh.pop %v2813
        %v3774 = vtanh.pop %v2814
        %v3775 = vtanh.pop %v2815
        %v3776 = vtanh.pop %v2816
        %v3777 = vtanh.pop %v2817
        %v3778 = vtanh.pop %v2818
        %v3779 = vtanh.pop %v2819
        %v3780 = vtanh.pop %v2820
        %v3781 = vtanh.pop %v2821
        %v3782 = vtanh.pop %v2822
        %v3783 = vtanh.pop %v2823
        %v3784 = vtanh.pop %v2824
        %v3785 = vtanh.pop %v2825
        %v3786 = vtanh.pop %v2826
        %v3787 = vtanh.pop %v2827
        %v3788 = vtanh.pop %v2828
        %v3789 = vtanh.pop %v2829
        %v3790 = vtanh.pop %v2830
        %v3791 = vtanh.pop %v2831
        %v3792 = vtanh.pop %v2832
        %v3793 = vtanh.pop %v2833
        %v3794 = vtanh.pop %v2834
        %v3795 = vtanh.pop %v2835
        %v3796 = vtanh.pop %v2836
        %3829 = vrot.lane.b32.xlu0 %v3765, 64
        %v3830 = vpop.permute.xlu0 %3829
        %3831 = vrot.lane.b32.xlu0 %v3766, 64
        %v3832 = vpop.permute.xlu0 %3831
        %3833 = vrot.lane.b32.xlu0 %v3767, 64
        %v3834 = vpop.permute.xlu0 %3833
        %3835 = vrot.lane.b32.xlu0 %v3768, 64
        %v3836 = vpop.permute.xlu0 %3835
        %3837 = vrot.lane.b32.xlu0 %v3769, 64
        %v3838 = vpop.permute.xlu0 %3837
        %3839 = vrot.lane.b32.xlu0 %v3770, 64
        %v3840 = vpop.permute.xlu0 %3839
        %3841 = vrot.lane.b32.xlu0 %v3771, 64
        %v3842 = vpop.permute.xlu0 %3841
        %3843 = vrot.lane.b32.xlu0 %v3772, 64
        %v3844 = vpop.permute.xlu0 %3843
        %3845 = vrot.lane.b32.xlu0 %v3773, 64
        %v3846 = vpop.permute.xlu0 %3845
        %3847 = vrot.lane.b32.xlu0 %v3774, 64
        %v3848 = vpop.permute.xlu0 %3847
        %3849 = vrot.lane.b32.xlu0 %v3775, 64
        %v3850 = vpop.permute.xlu0 %3849
        %3851 = vrot.lane.b32.xlu0 %v3776, 64
        %v3852 = vpop.permute.xlu0 %3851
        %3853 = vrot.lane.b32.xlu0 %v3777, 64
        %v3854 = vpop.permute.xlu0 %3853
        %3855 = vrot.lane.b32.xlu0 %v3778, 64
        %v3856 = vpop.permute.xlu0 %3855
        %3857 = vrot.lane.b32.xlu0 %v3779, 64
        %v3858 = vpop.permute.xlu0 %3857
        %3859 = vrot.lane.b32.xlu0 %v3780, 64
        %v3860 = vpop.permute.xlu0 %3859
        %3861 = vrot.lane.b32.xlu0 %v3781, 64
        %v3862 = vpop.permute.xlu0 %3861
        %3863 = vrot.lane.b32.xlu0 %v3782, 64
        %v3864 = vpop.permute.xlu0 %3863
        %3865 = vrot.lane.b32.xlu0 %v3783, 64
        %v3866 = vpop.permute.xlu0 %3865
        %3867 = vrot.lane.b32.xlu0 %v3784, 64
        %v3868 = vpop.permute.xlu0 %3867
        %3869 = vrot.lane.b32.xlu0 %v3785, 64
        %v3870 = vpop.permute.xlu0 %3869
        %3871 = vrot.lane.b32.xlu0 %v3786, 64
        %v3872 = vpop.permute.xlu0 %3871
        %3873 = vrot.lane.b32.xlu0 %v3787, 64
        %v3874 = vpop.permute.xlu0 %3873
        %3875 = vrot.lane.b32.xlu0 %v3788, 64
        %v3876 = vpop.permute.xlu0 %3875
        %3877 = vrot.lane.b32.xlu0 %v3789, 64
        %v3878 = vpop.permute.xlu0 %3877
        %3879 = vrot.lane.b32.xlu0 %v3790, 64
        %v3880 = vpop.permute.xlu0 %3879
        %3881 = vrot.lane.b32.xlu0 %v3791, 64
        %v3882 = vpop.permute.xlu0 %3881
        %3883 = vrot.lane.b32.xlu0 %v3792, 64
        %v3884 = vpop.permute.xlu0 %3883
        %3885 = vrot.lane.b32.xlu0 %v3793, 64
        %v3886 = vpop.permute.xlu0 %3885
        %3887 = vrot.lane.b32.xlu0 %v3794, 64
        %v3888 = vpop.permute.xlu0 %3887
        %3889 = vrot.lane.b32.xlu0 %v3795, 64
        %v3890 = vpop.permute.xlu0 %3889
        %3891 = vrot.lane.b32.xlu0 %v3796, 64
        %v3892 = vpop.permute.xlu0 %3891
        %v3925 = vmul.f32 %v3158, %v3830
        %v3926 = vmul.f32 %v3160, %v3832
        %v3927 = vmul.f32 %v3162, %v3834
        %v3928 = vmul.f32 %v3164, %v3836
        %v3929 = vmul.f32 %v3166, %v3838
        %v3930 = vmul.f32 %v3168, %v3840
        %v3931 = vmul.f32 %v3170, %v3842
        %v3932 = vmul.f32 %v3172, %v3844
        %v3933 = vmul.f32 %v3174, %v3846
        %v3934 = vmul.f32 %v3176, %v3848
        %v3935 = vmul.f32 %v3178, %v3850
        %v3936 = vmul.f32 %v3180, %v3852
        %v3937 = vmul.f32 %v3182, %v3854
        %v3938 = vmul.f32 %v3184, %v3856
        %v3939 = vmul.f32 %v3186, %v3858
        %v3940 = vmul.f32 %v3188, %v3860
        %v3941 = vmul.f32 %v3190, %v3862
        %v3942 = vmul.f32 %v3192, %v3864
        %v3943 = vmul.f32 %v3194, %v3866
        %v3944 = vmul.f32 %v3196, %v3868
        %v3945 = vmul.f32 %v3198, %v3870
        %v3946 = vmul.f32 %v3200, %v3872
        %v3947 = vmul.f32 %v3202, %v3874
        %v3948 = vmul.f32 %v3204, %v3876
        %v3949 = vmul.f32 %v3206, %v3878
        %v3950 = vmul.f32 %v3208, %v3880
        %v3951 = vmul.f32 %v3210, %v3882
        %v3952 = vmul.f32 %v3212, %v3884
        %v3953 = vmul.f32 %v3214, %v3886
        %v3954 = vmul.f32 %v3216, %v3888
        %v3955 = vmul.f32 %v3218, %v3890
        %v3956 = vmul.f32 %v3220, %v3892
        %3989 = vrot.lane.b32.xlu0 %v3925, 32
        %v3990 = vpop.permute.xlu0 %3989
        %3991 = vrot.lane.b32.xlu0 %v3926, 32
        %v3992 = vpop.permute.xlu0 %3991
        %3993 = vrot.lane.b32.xlu0 %v3927, 32
        %v3994 = vpop.permute.xlu0 %3993
        %3995 = vrot.lane.b32.xlu0 %v3928, 32
        %v3996 = vpop.permute.xlu0 %3995
        %3997 = vrot.lane.b32.xlu0 %v3929, 32
        %v3998 = vpop.permute.xlu0 %3997
        %3999 = vrot.lane.b32.xlu0 %v3930, 32
        %v4000 = vpop.permute.xlu0 %3999
        %4001 = vrot.lane.b32.xlu0 %v3931, 32
        %v4002 = vpop.permute.xlu0 %4001
        %4003 = vrot.lane.b32.xlu0 %v3932, 32
        %v4004 = vpop.permute.xlu0 %4003
        %4005 = vrot.lane.b32.xlu0 %v3933, 32
        %v4006 = vpop.permute.xlu0 %4005
        %4007 = vrot.lane.b32.xlu0 %v3934, 32
        %v4008 = vpop.permute.xlu0 %4007
        %4009 = vrot.lane.b32.xlu0 %v3935, 32
        %v4010 = vpop.permute.xlu0 %4009
        %4011 = vrot.lane.b32.xlu0 %v3936, 32
        %v4012 = vpop.permute.xlu0 %4011
        %4013 = vrot.lane.b32.xlu0 %v3937, 32
        %v4014 = vpop.permute.xlu0 %4013
        %4015 = vrot.lane.b32.xlu0 %v3938, 32
        %v4016 = vpop.permute.xlu0 %4015
        %4017 = vrot.lane.b32.xlu0 %v3939, 32
        %v4018 = vpop.permute.xlu0 %4017
        %4019 = vrot.lane.b32.xlu0 %v3940, 32
        %v4020 = vpop.permute.xlu0 %4019
        %4021 = vrot.lane.b32.xlu0 %v3941, 32
        %v4022 = vpop.permute.xlu0 %4021
        %4023 = vrot.lane.b32.xlu0 %v3942, 32
        %v4024 = vpop.permute.xlu0 %4023
        %4025 = vrot.lane.b32.xlu0 %v3943, 32
        %v4026 = vpop.permute.xlu0 %4025
        %4027 = vrot.lane.b32.xlu0 %v3944, 32
        %v4028 = vpop.permute.xlu0 %4027
        %4029 = vrot.lane.b32.xlu0 %v3945, 32
        %v4030 = vpop.permute.xlu0 %4029
        %4031 = vrot.lane.b32.xlu0 %v3946, 32
        %v4032 = vpop.permute.xlu0 %4031
        %4033 = vrot.lane.b32.xlu0 %v3947, 32
        %v4034 = vpop.permute.xlu0 %4033
        %4035 = vrot.lane.b32.xlu0 %v3948, 32
        %v4036 = vpop.permute.xlu0 %4035
        %4037 = vrot.lane.b32.xlu0 %v3949, 32
        %v4038 = vpop.permute.xlu0 %4037
        %4039 = vrot.lane.b32.xlu0 %v3950, 32
        %v4040 = vpop.permute.xlu0 %4039
        %4041 = vrot.lane.b32.xlu0 %v3951, 32
        %v4042 = vpop.permute.xlu0 %4041
        %4043 = vrot.lane.b32.xlu0 %v3952, 32
        %v4044 = vpop.permute.xlu0 %4043
        %4045 = vrot.lane.b32.xlu0 %v3953, 32
        %v4046 = vpop.permute.xlu0 %4045
        %4047 = vrot.lane.b32.xlu0 %v3954, 32
        %v4048 = vpop.permute.xlu0 %4047
        %4049 = vrot.lane.b32.xlu0 %v3955, 32
        %v4050 = vpop.permute.xlu0 %4049
        %4051 = vrot.lane.b32.xlu0 %v3956, 32
        %v4052 = vpop.permute.xlu0 %4051
        %v4085 = vadd.f32 %v3733, %v3990
        %v4086 = vadd.f32 %v3734, %v3992
        %v4087 = vadd.f32 %v3735, %v3994
        %v4088 = vadd.f32 %v3736, %v3996
        %v4089 = vadd.f32 %v3737, %v3998
        %v4090 = vadd.f32 %v3738, %v4000
        %v4091 = vadd.f32 %v3739, %v4002
        %v4092 = vadd.f32 %v3740, %v4004
        %v4093 = vadd.f32 %v3741, %v4006
        %v4094 = vadd.f32 %v3742, %v4008
        %v4095 = vadd.f32 %v3743, %v4010
        %v4096 = vadd.f32 %v3744, %v4012
        %v4097 = vadd.f32 %v3745, %v4014
        %v4098 = vadd.f32 %v3746, %v4016
        %v4099 = vadd.f32 %v3747, %v4018
        %v4100 = vadd.f32 %v3748, %v4020
        %v4101 = vadd.f32 %v3749, %v4022
        %v4102 = vadd.f32 %v3750, %v4024
        %v4103 = vadd.f32 %v3751, %v4026
        %v4104 = vadd.f32 %v3752, %v4028
        %v4105 = vadd.f32 %v3753, %v4030
        %v4106 = vadd.f32 %v3754, %v4032
        %v4107 = vadd.f32 %v3755, %v4034
        %v4108 = vadd.f32 %v3756, %v4036
        %v4109 = vadd.f32 %v3757, %v4038
        %v4110 = vadd.f32 %v3758, %v4040
        %v4111 = vadd.f32 %v3759, %v4042
        %v4112 = vadd.f32 %v3760, %v4044
        %v4113 = vadd.f32 %v3761, %v4046
        %v4114 = vadd.f32 %v3762, %v4048
        %v4115 = vadd.f32 %v3763, %v4050
        %v4116 = vadd.f32 %v3764, %v4052
        %4149 = vrot.lane.b32.xlu0 %v2933, 32
        %v4150 = vpop.permute.xlu0 %4149
        %4151 = vrot.lane.b32.xlu0 %v2934, 32
        %v4152 = vpop.permute.xlu0 %4151
        %4153 = vrot.lane.b32.xlu0 %v2935, 32
        %v4154 = vpop.permute.xlu0 %4153
        %4155 = vrot.lane.b32.xlu0 %v2936, 32
        %v4156 = vpop.permute.xlu0 %4155
        %4157 = vrot.lane.b32.xlu0 %v2937, 32
        %v4158 = vpop.permute.xlu0 %4157
        %4159 = vrot.lane.b32.xlu0 %v2938, 32
        %v4160 = vpop.permute.xlu0 %4159
        %4161 = vrot.lane.b32.xlu0 %v2939, 32
        %v4162 = vpop.permute.xlu0 %4161
        %4163 = vrot.lane.b32.xlu0 %v2940, 32
        %v4164 = vpop.permute.xlu0 %4163
        %4165 = vrot.lane.b32.xlu0 %v2941, 32
        %v4166 = vpop.permute.xlu0 %4165
        %4167 = vrot.lane.b32.xlu0 %v2942, 32
        %v4168 = vpop.permute.xlu0 %4167
        %4169 = vrot.lane.b32.xlu0 %v2943, 32
        %v4170 = vpop.permute.xlu0 %4169
        %4171 = vrot.lane.b32.xlu0 %v2944, 32
        %v4172 = vpop.permute.xlu0 %4171
        %4173 = vrot.lane.b32.xlu0 %v2945, 32
        %v4174 = vpop.permute.xlu0 %4173
        %4175 = vrot.lane.b32.xlu0 %v2946, 32
        %v4176 = vpop.permute.xlu0 %4175
        %4177 = vrot.lane.b32.xlu0 %v2947, 32
        %v4178 = vpop.permute.xlu0 %4177
        %4179 = vrot.lane.b32.xlu0 %v2948, 32
        %v4180 = vpop.permute.xlu0 %4179
        %4181 = vrot.lane.b32.xlu0 %v2949, 32
        %v4182 = vpop.permute.xlu0 %4181
        %4183 = vrot.lane.b32.xlu0 %v2950, 32
        %v4184 = vpop.permute.xlu0 %4183
        %4185 = vrot.lane.b32.xlu0 %v2951, 32
        %v4186 = vpop.permute.xlu0 %4185
        %4187 = vrot.lane.b32.xlu0 %v2952, 32
        %v4188 = vpop.permute.xlu0 %4187
        %4189 = vrot.lane.b32.xlu0 %v2953, 32
        %v4190 = vpop.permute.xlu0 %4189
        %4191 = vrot.lane.b32.xlu0 %v2954, 32
        %v4192 = vpop.permute.xlu0 %4191
        %4193 = vrot.lane.b32.xlu0 %v2955, 32
        %v4194 = vpop.permute.xlu0 %4193
        %4195 = vrot.lane.b32.xlu0 %v2956, 32
        %v4196 = vpop.permute.xlu0 %4195
        %4197 = vrot.lane.b32.xlu0 %v2957, 32
        %v4198 = vpop.permute.xlu0 %4197
        %4199 = vrot.lane.b32.xlu0 %v2958, 32
        %v4200 = vpop.permute.xlu0 %4199
        %4201 = vrot.lane.b32.xlu0 %v2959, 32
        %v4202 = vpop.permute.xlu0 %4201
        %4203 = vrot.lane.b32.xlu0 %v2960, 32
        %v4204 = vpop.permute.xlu0 %4203
        %4205 = vrot.lane.b32.xlu0 %v2961, 32
        %v4206 = vpop.permute.xlu0 %4205
        %4207 = vrot.lane.b32.xlu0 %v2962, 32
        %v4208 = vpop.permute.xlu0 %4207
        %4209 = vrot.lane.b32.xlu0 %v2963, 32
        %v4210 = vpop.permute.xlu0 %4209
        %4211 = vrot.lane.b32.xlu0 %v2964, 32
        %v4212 = vpop.permute.xlu0 %4211
        %v4245 = vmul.f32 %v4085, %v4150
        %v4246 = vmul.f32 %v4086, %v4152
        %v4247 = vmul.f32 %v4087, %v4154
        %v4248 = vmul.f32 %v4088, %v4156
        %v4249 = vmul.f32 %v4089, %v4158
        %v4250 = vmul.f32 %v4090, %v4160
        %v4251 = vmul.f32 %v4091, %v4162
        %v4252 = vmul.f32 %v4092, %v4164
        %v4253 = vmul.f32 %v4093, %v4166
        %v4254 = vmul.f32 %v4094, %v4168
        %v4255 = vmul.f32 %v4095, %v4170
        %v4256 = vmul.f32 %v4096, %v4172
        %v4257 = vmul.f32 %v4097, %v4174
        %v4258 = vmul.f32 %v4098, %v4176
        %v4259 = vmul.f32 %v4099, %v4178
        %v4260 = vmul.f32 %v4100, %v4180
        %v4261 = vmul.f32 %v4101, %v4182
        %v4262 = vmul.f32 %v4102, %v4184
        %v4263 = vmul.f32 %v4103, %v4186
        %v4264 = vmul.f32 %v4104, %v4188
        %v4265 = vmul.f32 %v4105, %v4190
        %v4266 = vmul.f32 %v4106, %v4192
        %v4267 = vmul.f32 %v4107, %v4194
        %v4268 = vmul.f32 %v4108, %v4196
        %v4269 = vmul.f32 %v4109, %v4198
        %v4270 = vmul.f32 %v4110, %v4200
        %v4271 = vmul.f32 %v4111, %v4202
        %v4272 = vmul.f32 %v4112, %v4204
        %v4273 = vmul.f32 %v4113, %v4206
        %v4274 = vmul.f32 %v4114, %v4208
        %v4275 = vmul.f32 %v4115, %v4210
        %v4276 = vmul.f32 %v4116, %v4212
        %4309 = vrot.lane.b32.xlu0 %v4245, 64
        %v4310 = vpop.permute.xlu0 %4309
        %4311 = vrot.lane.b32.xlu0 %v4246, 64
        %v4312 = vpop.permute.xlu0 %4311
        %4313 = vrot.lane.b32.xlu0 %v4247, 64
        %v4314 = vpop.permute.xlu0 %4313
        %4315 = vrot.lane.b32.xlu0 %v4248, 64
        %v4316 = vpop.permute.xlu0 %4315
        %4317 = vrot.lane.b32.xlu0 %v4249, 64
        %v4318 = vpop.permute.xlu0 %4317
        %4319 = vrot.lane.b32.xlu0 %v4250, 64
        %v4320 = vpop.permute.xlu0 %4319
        %4321 = vrot.lane.b32.xlu0 %v4251, 64
        %v4322 = vpop.permute.xlu0 %4321
        %4323 = vrot.lane.b32.xlu0 %v4252, 64
        %v4324 = vpop.permute.xlu0 %4323
        %4325 = vrot.lane.b32.xlu0 %v4253, 64
        %v4326 = vpop.permute.xlu0 %4325
        %4327 = vrot.lane.b32.xlu0 %v4254, 64
        %v4328 = vpop.permute.xlu0 %4327
        %4329 = vrot.lane.b32.xlu0 %v4255, 64
        %v4330 = vpop.permute.xlu0 %4329
        %4331 = vrot.lane.b32.xlu0 %v4256, 64
        %v4332 = vpop.permute.xlu0 %4331
        %4333 = vrot.lane.b32.xlu0 %v4257, 64
        %v4334 = vpop.permute.xlu0 %4333
        %4335 = vrot.lane.b32.xlu0 %v4258, 64
        %v4336 = vpop.permute.xlu0 %4335
        %4337 = vrot.lane.b32.xlu0 %v4259, 64
        %v4338 = vpop.permute.xlu0 %4337
        %4339 = vrot.lane.b32.xlu0 %v4260, 64
        %v4340 = vpop.permute.xlu0 %4339
        %4341 = vrot.lane.b32.xlu0 %v4261, 64
        %v4342 = vpop.permute.xlu0 %4341
        %4343 = vrot.lane.b32.xlu0 %v4262, 64
        %v4344 = vpop.permute.xlu0 %4343
        %4345 = vrot.lane.b32.xlu0 %v4263, 64
        %v4346 = vpop.permute.xlu0 %4345
        %4347 = vrot.lane.b32.xlu0 %v4264, 64
        %v4348 = vpop.permute.xlu0 %4347
        %4349 = vrot.lane.b32.xlu0 %v4265, 64
        %v4350 = vpop.permute.xlu0 %4349
        %4351 = vrot.lane.b32.xlu0 %v4266, 64
        %v4352 = vpop.permute.xlu0 %4351
        %4353 = vrot.lane.b32.xlu0 %v4267, 64
        %v4354 = vpop.permute.xlu0 %4353
        %4355 = vrot.lane.b32.xlu0 %v4268, 64
        %v4356 = vpop.permute.xlu0 %4355
        %4357 = vrot.lane.b32.xlu0 %v4269, 64
        %v4358 = vpop.permute.xlu0 %4357
        %4359 = vrot.lane.b32.xlu0 %v4270, 64
        %v4360 = vpop.permute.xlu0 %4359
        %4361 = vrot.lane.b32.xlu0 %v4271, 64
        %v4362 = vpop.permute.xlu0 %4361
        %4363 = vrot.lane.b32.xlu0 %v4272, 64
        %v4364 = vpop.permute.xlu0 %4363
        %4365 = vrot.lane.b32.xlu0 %v4273, 64
        %v4366 = vpop.permute.xlu0 %4365
        %4367 = vrot.lane.b32.xlu0 %v4274, 64
        %v4368 = vpop.permute.xlu0 %4367
        %4369 = vrot.lane.b32.xlu0 %v4275, 64
        %v4370 = vpop.permute.xlu0 %4369
        %4371 = vrot.lane.b32.xlu0 %v4276, 64
        %v4372 = vpop.permute.xlu0 %4371
        %v4405 = vadd.f32 %v2805, %v4310
        %v4406 = vadd.f32 %v2806, %v4312
        %v4407 = vadd.f32 %v2807, %v4314
        %v4408 = vadd.f32 %v2808, %v4316
        %v4409 = vadd.f32 %v2809, %v4318
        %v4410 = vadd.f32 %v2810, %v4320
        %v4411 = vadd.f32 %v2811, %v4322
        %v4412 = vadd.f32 %v2812, %v4324
        %v4413 = vadd.f32 %v2813, %v4326
        %v4414 = vadd.f32 %v2814, %v4328
        %v4415 = vadd.f32 %v2815, %v4330
        %v4416 = vadd.f32 %v2816, %v4332
        %v4417 = vadd.f32 %v2817, %v4334
        %v4418 = vadd.f32 %v2818, %v4336
        %v4419 = vadd.f32 %v2819, %v4338
        %v4420 = vadd.f32 %v2820, %v4340
        %v4421 = vadd.f32 %v2821, %v4342
        %v4422 = vadd.f32 %v2822, %v4344
        %v4423 = vadd.f32 %v2823, %v4346
        %v4424 = vadd.f32 %v2824, %v4348
        %v4425 = vadd.f32 %v2825, %v4350
        %v4426 = vadd.f32 %v2826, %v4352
        %v4427 = vadd.f32 %v2827, %v4354
        %v4428 = vadd.f32 %v2828, %v4356
        %v4429 = vadd.f32 %v2829, %v4358
        %v4430 = vadd.f32 %v2830, %v4360
        %v4431 = vadd.f32 %v2831, %v4362
        %v4432 = vadd.f32 %v2832, %v4364
        %v4433 = vadd.f32 %v2833, %v4366
        %v4434 = vadd.f32 %v2834, %v4368
        %v4435 = vadd.f32 %v2835, %v4370
        %v4436 = vadd.f32 %v2836, %v4372
        %v4437 = vxor.u32 %v4405, 2147483648
        %v4438 = vxor.u32 %v4406, 2147483648
        %v4439 = vxor.u32 %v4407, 2147483648
        %v4440 = vxor.u32 %v4408, 2147483648
        %v4441 = vxor.u32 %v4409, 2147483648
        %v4442 = vxor.u32 %v4410, 2147483648
        %v4443 = vxor.u32 %v4411, 2147483648
        %v4444 = vxor.u32 %v4412, 2147483648
        %v4445 = vxor.u32 %v4413, 2147483648
        %v4446 = vxor.u32 %v4414, 2147483648
        %v4447 = vxor.u32 %v4415, 2147483648
        %v4448 = vxor.u32 %v4416, 2147483648
        %v4449 = vxor.u32 %v4417, 2147483648
        %v4450 = vxor.u32 %v4418, 2147483648
        %v4451 = vxor.u32 %v4419, 2147483648
        %v4452 = vxor.u32 %v4420, 2147483648
        %v4453 = vxor.u32 %v4421, 2147483648
        %v4454 = vxor.u32 %v4422, 2147483648
        %v4455 = vxor.u32 %v4423, 2147483648
        %v4456 = vxor.u32 %v4424, 2147483648
        %v4457 = vxor.u32 %v4425, 2147483648
        %v4458 = vxor.u32 %v4426, 2147483648
        %v4459 = vxor.u32 %v4427, 2147483648
        %v4460 = vxor.u32 %v4428, 2147483648
        %v4461 = vxor.u32 %v4429, 2147483648
        %v4462 = vxor.u32 %v4430, 2147483648
        %v4463 = vxor.u32 %v4431, 2147483648
        %v4464 = vxor.u32 %v4432, 2147483648
        %v4465 = vxor.u32 %v4433, 2147483648
        %v4466 = vxor.u32 %v4434, 2147483648
        %v4467 = vxor.u32 %v4435, 2147483648
        %v4468 = vxor.u32 %v4436, 2147483648
        %v4469 = vmul.f32 %v4437, 1.442695
        %v4470 = vpow.pop %v4469
        %v4471 = vmul.f32 %v4438, 1.442695
        %v4472 = vpow.pop %v4471
        %v4473 = vmul.f32 %v4439, 1.442695
        %v4474 = vpow.pop %v4473
        %v4475 = vmul.f32 %v4440, 1.442695
        %v4476 = vpow.pop %v4475
        %v4477 = vmul.f32 %v4441, 1.442695
        %v4478 = vpow.pop %v4477
        %v4479 = vmul.f32 %v4442, 1.442695
        %v4480 = vpow.pop %v4479
        %v4481 = vmul.f32 %v4443, 1.442695
        %v4482 = vpow.pop %v4481
        %v4483 = vmul.f32 %v4444, 1.442695
        %v4484 = vpow.pop %v4483
        %v4485 = vmul.f32 %v4445, 1.442695
        %v4486 = vpow.pop %v4485
        %v4487 = vmul.f32 %v4446, 1.442695
        %v4488 = vpow.pop %v4487
        %v4489 = vmul.f32 %v4447, 1.442695
        %v4490 = vpow.pop %v4489
        %v4491 = vmul.f32 %v4448, 1.442695
        %v4492 = vpow.pop %v4491
        %v4493 = vmul.f32 %v4449, 1.442695
        %v4494 = vpow.pop %v4493
        %v4495 = vmul.f32 %v4450, 1.442695
        %v4496 = vpow.pop %v4495
        %v4497 = vmul.f32 %v4451, 1.442695
        %v4498 = vpow.pop %v4497
        %v4499 = vmul.f32 %v4452, 1.442695
        %v4500 = vpow.pop %v4499
        %v4501 = vmul.f32 %v4453, 1.442695
        %v4502 = vpow.pop %v4501
        %v4503 = vmul.f32 %v4454, 1.442695
        %v4504 = vpow.pop %v4503
        %v4505 = vmul.f32 %v4455, 1.442695
        %v4506 = vpow.pop %v4505
        %v4507 = vmul.f32 %v4456, 1.442695
        %v4508 = vpow.pop %v4507
        %v4509 = vmul.f32 %v4457, 1.442695
        %v4510 = vpow.pop %v4509
        %v4511 = vmul.f32 %v4458, 1.442695
        %v4512 = vpow.pop %v4511
        %v4513 = vmul.f32 %v4459, 1.442695
        %v4514 = vpow.pop %v4513
        %v4515 = vmul.f32 %v4460, 1.442695
        %v4516 = vpow.pop %v4515
        %v4517 = vmul.f32 %v4461, 1.442695
        %v4518 = vpow.pop %v4517
        %v4519 = vmul.f32 %v4462, 1.442695
        %v4520 = vpow.pop %v4519
        %v4521 = vmul.f32 %v4463, 1.442695
        %v4522 = vpow.pop %v4521
        %v4523 = vmul.f32 %v4464, 1.442695
        %v4524 = vpow.pop %v4523
        %v4525 = vmul.f32 %v4465, 1.442695
        %v4526 = vpow.pop %v4525
        %v4527 = vmul.f32 %v4466, 1.442695
        %v4528 = vpow.pop %v4527
        %v4529 = vmul.f32 %v4467, 1.442695
        %v4530 = vpow.pop %v4529
        %v4531 = vmul.f32 %v4468, 1.442695
        %v4532 = vpow.pop %v4531
        %v4533 = vadd.f32 %v4470, 1.0
        %v4534 = vadd.f32 %v4472, 1.0
        %v4535 = vadd.f32 %v4474, 1.0
        %v4536 = vadd.f32 %v4476, 1.0
        %v4537 = vadd.f32 %v4478, 1.0
        %v4538 = vadd.f32 %v4480, 1.0
        %v4539 = vadd.f32 %v4482, 1.0
        %v4540 = vadd.f32 %v4484, 1.0
        %v4541 = vadd.f32 %v4486, 1.0
        %v4542 = vadd.f32 %v4488, 1.0
        %v4543 = vadd.f32 %v4490, 1.0
        %v4544 = vadd.f32 %v4492, 1.0
        %v4545 = vadd.f32 %v4494, 1.0
        %v4546 = vadd.f32 %v4496, 1.0
        %v4547 = vadd.f32 %v4498, 1.0
        %v4548 = vadd.f32 %v4500, 1.0
        %v4549 = vadd.f32 %v4502, 1.0
        %v4550 = vadd.f32 %v4504, 1.0
        %v4551 = vadd.f32 %v4506, 1.0
        %v4552 = vadd.f32 %v4508, 1.0
        %v4553 = vadd.f32 %v4510, 1.0
        %v4554 = vadd.f32 %v4512, 1.0
        %v4555 = vadd.f32 %v4514, 1.0
        %v4556 = vadd.f32 %v4516, 1.0
        %v4557 = vadd.f32 %v4518, 1.0
        %v4558 = vadd.f32 %v4520, 1.0
        %v4559 = vadd.f32 %v4522, 1.0
        %v4560 = vadd.f32 %v4524, 1.0
        %v4561 = vadd.f32 %v4526, 1.0
        %v4562 = vadd.f32 %v4528, 1.0
        %v4563 = vadd.f32 %v4530, 1.0
        %v4564 = vadd.f32 %v4532, 1.0
        %v4565 = vrcp.pop %v4533
        %v4566 = vmul.f32 1.0, %v4565
        %v4567 = vrcp.pop %v4534
        %v4568 = vmul.f32 1.0, %v4567
        %v4569 = vrcp.pop %v4535
        %v4570 = vmul.f32 1.0, %v4569
        %v4571 = vrcp.pop %v4536
        %v4572 = vmul.f32 1.0, %v4571
        %v4573 = vrcp.pop %v4537
        %v4574 = vmul.f32 1.0, %v4573
        %v4575 = vrcp.pop %v4538
        %v4576 = vmul.f32 1.0, %v4575
        %v4577 = vrcp.pop %v4539
        %v4578 = vmul.f32 1.0, %v4577
        %v4579 = vrcp.pop %v4540
        %v4580 = vmul.f32 1.0, %v4579
        %v4581 = vrcp.pop %v4541
        %v4582 = vmul.f32 1.0, %v4581
        %v4583 = vrcp.pop %v4542
        %v4584 = vmul.f32 1.0, %v4583
        %v4585 = vrcp.pop %v4543
        %v4586 = vmul.f32 1.0, %v4585
        %v4587 = vrcp.pop %v4544
        %v4588 = vmul.f32 1.0, %v4587
        %v4589 = vrcp.pop %v4545
        %v4590 = vmul.f32 1.0, %v4589
        %v4591 = vrcp.pop %v4546
        %v4592 = vmul.f32 1.0, %v4591
        %v4593 = vrcp.pop %v4547
        %v4594 = vmul.f32 1.0, %v4593
        %v4595 = vrcp.pop %v4548
        %v4596 = vmul.f32 1.0, %v4595
        %v4597 = vrcp.pop %v4549
        %v4598 = vmul.f32 1.0, %v4597
        %v4599 = vrcp.pop %v4550
        %v4600 = vmul.f32 1.0, %v4599
        %v4601 = vrcp.pop %v4551
        %v4602 = vmul.f32 1.0, %v4601
        %v4603 = vrcp.pop %v4552
        %v4604 = vmul.f32 1.0, %v4603
        %v4605 = vrcp.pop %v4553
        %v4606 = vmul.f32 1.0, %v4605
        %v4607 = vrcp.pop %v4554
        %v4608 = vmul.f32 1.0, %v4607
        %v4609 = vrcp.pop %v4555
        %v4610 = vmul.f32 1.0, %v4609
        %v4611 = vrcp.pop %v4556
        %v4612 = vmul.f32 1.0, %v4611
        %v4613 = vrcp.pop %v4557
        %v4614 = vmul.f32 1.0, %v4613
        %v4615 = vrcp.pop %v4558
        %v4616 = vmul.f32 1.0, %v4615
        %v4617 = vrcp.pop %v4559
        %v4618 = vmul.f32 1.0, %v4617
        %v4619 = vrcp.pop %v4560
        %v4620 = vmul.f32 1.0, %v4619
        %v4621 = vrcp.pop %v4561
        %v4622 = vmul.f32 1.0, %v4621
        %v4623 = vrcp.pop %v4562
        %v4624 = vmul.f32 1.0, %v4623
        %v4625 = vrcp.pop %v4563
        %v4626 = vmul.f32 1.0, %v4625
        %v4627 = vrcp.pop %v4564
        %v4628 = vmul.f32 1.0, %v4627
        %v4629 = vtanh.pop %v4085
        %v4630 = vtanh.pop %v4086
        %v4631 = vtanh.pop %v4087
        %v4632 = vtanh.pop %v4088
        %v4633 = vtanh.pop %v4089
        %v4634 = vtanh.pop %v4090
        %v4635 = vtanh.pop %v4091
        %v4636 = vtanh.pop %v4092
        %v4637 = vtanh.pop %v4093
        %v4638 = vtanh.pop %v4094
        %v4639 = vtanh.pop %v4095
        %v4640 = vtanh.pop %v4096
        %v4641 = vtanh.pop %v4097
        %v4642 = vtanh.pop %v4098
        %v4643 = vtanh.pop %v4099
        %v4644 = vtanh.pop %v4100
        %v4645 = vtanh.pop %v4101
        %v4646 = vtanh.pop %v4102
        %v4647 = vtanh.pop %v4103
        %v4648 = vtanh.pop %v4104
        %v4649 = vtanh.pop %v4105
        %v4650 = vtanh.pop %v4106
        %v4651 = vtanh.pop %v4107
        %v4652 = vtanh.pop %v4108
        %v4653 = vtanh.pop %v4109
        %v4654 = vtanh.pop %v4110
        %v4655 = vtanh.pop %v4111
        %v4656 = vtanh.pop %v4112
        %v4657 = vtanh.pop %v4113
        %v4658 = vtanh.pop %v4114
        %v4659 = vtanh.pop %v4115
        %v4660 = vtanh.pop %v4116
        %4693 = vrot.lane.b32.xlu0 %v4629, 64
        %v4694 = vpop.permute.xlu0 %4693
        %4695 = vrot.lane.b32.xlu0 %v4630, 64
        %v4696 = vpop.permute.xlu0 %4695
        %4697 = vrot.lane.b32.xlu0 %v4631, 64
        %v4698 = vpop.permute.xlu0 %4697
        %4699 = vrot.lane.b32.xlu0 %v4632, 64
        %v4700 = vpop.permute.xlu0 %4699
        %4701 = vrot.lane.b32.xlu0 %v4633, 64
        %v4702 = vpop.permute.xlu0 %4701
        %4703 = vrot.lane.b32.xlu0 %v4634, 64
        %v4704 = vpop.permute.xlu0 %4703
        %4705 = vrot.lane.b32.xlu0 %v4635, 64
        %v4706 = vpop.permute.xlu0 %4705
        %4707 = vrot.lane.b32.xlu0 %v4636, 64
        %v4708 = vpop.permute.xlu0 %4707
        %4709 = vrot.lane.b32.xlu0 %v4637, 64
        %v4710 = vpop.permute.xlu0 %4709
        %4711 = vrot.lane.b32.xlu0 %v4638, 64
        %v4712 = vpop.permute.xlu0 %4711
        %4713 = vrot.lane.b32.xlu0 %v4639, 64
        %v4714 = vpop.permute.xlu0 %4713
        %4715 = vrot.lane.b32.xlu0 %v4640, 64
        %v4716 = vpop.permute.xlu0 %4715
        %4717 = vrot.lane.b32.xlu0 %v4641, 64
        %v4718 = vpop.permute.xlu0 %4717
        %4719 = vrot.lane.b32.xlu0 %v4642, 64
        %v4720 = vpop.permute.xlu0 %4719
        %4721 = vrot.lane.b32.xlu0 %v4643, 64
        %v4722 = vpop.permute.xlu0 %4721
        %4723 = vrot.lane.b32.xlu0 %v4644, 64
        %v4724 = vpop.permute.xlu0 %4723
        %4725 = vrot.lane.b32.xlu0 %v4645, 64
        %v4726 = vpop.permute.xlu0 %4725
        %4727 = vrot.lane.b32.xlu0 %v4646, 64
        %v4728 = vpop.permute.xlu0 %4727
        %4729 = vrot.lane.b32.xlu0 %v4647, 64
        %v4730 = vpop.permute.xlu0 %4729
        %4731 = vrot.lane.b32.xlu0 %v4648, 64
        %v4732 = vpop.permute.xlu0 %4731
        %4733 = vrot.lane.b32.xlu0 %v4649, 64
        %v4734 = vpop.permute.xlu0 %4733
        %4735 = vrot.lane.b32.xlu0 %v4650, 64
        %v4736 = vpop.permute.xlu0 %4735
        %4737 = vrot.lane.b32.xlu0 %v4651, 64
        %v4738 = vpop.permute.xlu0 %4737
        %4739 = vrot.lane.b32.xlu0 %v4652, 64
        %v4740 = vpop.permute.xlu0 %4739
        %4741 = vrot.lane.b32.xlu0 %v4653, 64
        %v4742 = vpop.permute.xlu0 %4741
        %4743 = vrot.lane.b32.xlu0 %v4654, 64
        %v4744 = vpop.permute.xlu0 %4743
        %4745 = vrot.lane.b32.xlu0 %v4655, 64
        %v4746 = vpop.permute.xlu0 %4745
        %4747 = vrot.lane.b32.xlu0 %v4656, 64
        %v4748 = vpop.permute.xlu0 %4747
        %4749 = vrot.lane.b32.xlu0 %v4657, 64
        %v4750 = vpop.permute.xlu0 %4749
        %4751 = vrot.lane.b32.xlu0 %v4658, 64
        %v4752 = vpop.permute.xlu0 %4751
        %4753 = vrot.lane.b32.xlu0 %v4659, 64
        %v4754 = vpop.permute.xlu0 %4753
        %4755 = vrot.lane.b32.xlu0 %v4660, 64
        %v4756 = vpop.permute.xlu0 %4755
        %v4789 = vmul.f32 %v4566, %v4694
        %v4790 = vmul.f32 %v4568, %v4696
        %v4791 = vmul.f32 %v4570, %v4698
        %v4792 = vmul.f32 %v4572, %v4700
        %v4793 = vmul.f32 %v4574, %v4702
        %v4794 = vmul.f32 %v4576, %v4704
        %v4795 = vmul.f32 %v4578, %v4706
        %v4796 = vmul.f32 %v4580, %v4708
        %v4797 = vmul.f32 %v4582, %v4710
        %v4798 = vmul.f32 %v4584, %v4712
        %v4799 = vmul.f32 %v4586, %v4714
        %v4800 = vmul.f32 %v4588, %v4716
        %v4801 = vmul.f32 %v4590, %v4718
        %v4802 = vmul.f32 %v4592, %v4720
        %v4803 = vmul.f32 %v4594, %v4722
        %v4804 = vmul.f32 %v4596, %v4724
        %v4805 = vmul.f32 %v4598, %v4726
        %v4806 = vmul.f32 %v4600, %v4728
        %v4807 = vmul.f32 %v4602, %v4730
        %v4808 = vmul.f32 %v4604, %v4732
        %v4809 = vmul.f32 %v4606, %v4734
        %v4810 = vmul.f32 %v4608, %v4736
        %v4811 = vmul.f32 %v4610, %v4738
        %v4812 = vmul.f32 %v4612, %v4740
        %v4813 = vmul.f32 %v4614, %v4742
        %v4814 = vmul.f32 %v4616, %v4744
        %v4815 = vmul.f32 %v4618, %v4746
        %v4816 = vmul.f32 %v4620, %v4748
        %v4817 = vmul.f32 %v4622, %v4750
        %v4818 = vmul.f32 %v4624, %v4752
        %v4819 = vmul.f32 %v4626, %v4754
        %v4820 = vmul.f32 %v4628, %v4756
        %4853 = vrot.lane.b32.xlu0 %v4789, 32
        %v4854 = vpop.permute.xlu0 %4853
        %4855 = vrot.lane.b32.xlu0 %v4790, 32
        %v4856 = vpop.permute.xlu0 %4855
        %4857 = vrot.lane.b32.xlu0 %v4791, 32
        %v4858 = vpop.permute.xlu0 %4857
        %4859 = vrot.lane.b32.xlu0 %v4792, 32
        %v4860 = vpop.permute.xlu0 %4859
        %4861 = vrot.lane.b32.xlu0 %v4793, 32
        %v4862 = vpop.permute.xlu0 %4861
        %4863 = vrot.lane.b32.xlu0 %v4794, 32
        %v4864 = vpop.permute.xlu0 %4863
        %4865 = vrot.lane.b32.xlu0 %v4795, 32
        %v4866 = vpop.permute.xlu0 %4865
        %4867 = vrot.lane.b32.xlu0 %v4796, 32
        %v4868 = vpop.permute.xlu0 %4867
        %4869 = vrot.lane.b32.xlu0 %v4797, 32
        %v4870 = vpop.permute.xlu0 %4869
        %4871 = vrot.lane.b32.xlu0 %v4798, 32
        %v4872 = vpop.permute.xlu0 %4871
        %4873 = vrot.lane.b32.xlu0 %v4799, 32
        %v4874 = vpop.permute.xlu0 %4873
        %4875 = vrot.lane.b32.xlu0 %v4800, 32
        %v4876 = vpop.permute.xlu0 %4875
        %4877 = vrot.lane.b32.xlu0 %v4801, 32
        %v4878 = vpop.permute.xlu0 %4877
        %4879 = vrot.lane.b32.xlu0 %v4802, 32
        %v4880 = vpop.permute.xlu0 %4879
        %4881 = vrot.lane.b32.xlu0 %v4803, 32
        %v4882 = vpop.permute.xlu0 %4881
        %4883 = vrot.lane.b32.xlu0 %v4804, 32
        %v4884 = vpop.permute.xlu0 %4883
        %4885 = vrot.lane.b32.xlu0 %v4805, 32
        %v4886 = vpop.permute.xlu0 %4885
        %4887 = vrot.lane.b32.xlu0 %v4806, 32
        %v4888 = vpop.permute.xlu0 %4887
        %4889 = vrot.lane.b32.xlu0 %v4807, 32
        %v4890 = vpop.permute.xlu0 %4889
        %4891 = vrot.lane.b32.xlu0 %v4808, 32
        %v4892 = vpop.permute.xlu0 %4891
        %4893 = vrot.lane.b32.xlu0 %v4809, 32
        %v4894 = vpop.permute.xlu0 %4893
        %4895 = vrot.lane.b32.xlu0 %v4810, 32
        %v4896 = vpop.permute.xlu0 %4895
        %4897 = vrot.lane.b32.xlu0 %v4811, 32
        %v4898 = vpop.permute.xlu0 %4897
        %4899 = vrot.lane.b32.xlu0 %v4812, 32
        %v4900 = vpop.permute.xlu0 %4899
        %4901 = vrot.lane.b32.xlu0 %v4813, 32
        %v4902 = vpop.permute.xlu0 %4901
        %4903 = vrot.lane.b32.xlu0 %v4814, 32
        %v4904 = vpop.permute.xlu0 %4903
        %4905 = vrot.lane.b32.xlu0 %v4815, 32
        %v4906 = vpop.permute.xlu0 %4905
        %4907 = vrot.lane.b32.xlu0 %v4816, 32
        %v4908 = vpop.permute.xlu0 %4907
        %4909 = vrot.lane.b32.xlu0 %v4817, 32
        %v4910 = vpop.permute.xlu0 %4909
        %4911 = vrot.lane.b32.xlu0 %v4818, 32
        %v4912 = vpop.permute.xlu0 %4911
        %4913 = vrot.lane.b32.xlu0 %v4819, 32
        %v4914 = vpop.permute.xlu0 %4913
        %4915 = vrot.lane.b32.xlu0 %v4820, 32
        %v4916 = vpop.permute.xlu0 %4915
        %vm4949 = vcmask 261120
        %4950 = vst.msk [vmem:[%s336] sm:$0xff] %vm4949, %v4854
        %4951 = vst.msk [vmem:[%s336 + $0x8] sm:$0xff] %vm4949, %v4856
        %4952 = vst.msk [vmem:[%s336 + $0x10] sm:$0xff] %vm4949, %v4858
        %4953 = vst.msk [vmem:[%s336 + $0x18] sm:$0xff] %vm4949, %v4860
        %4954 = vst.msk [vmem:[%s336 + $0x20] sm:$0xff] %vm4949, %v4862
        %4955 = vst.msk [vmem:[%s336 + $0x28] sm:$0xff] %vm4949, %v4864
        %4956 = vst.msk [vmem:[%s336 + $0x30] sm:$0xff] %vm4949, %v4866
        %4957 = vst.msk [vmem:[%s336 + $0x38] sm:$0xff] %vm4949, %v4868
        %4958 = vst.msk [vmem:[%s336 + $0x40] sm:$0xff] %vm4949, %v4870
        %4959 = vst.msk [vmem:[%s336 + $0x48] sm:$0xff] %vm4949, %v4872
        %4960 = vst.msk [vmem:[%s336 + $0x50] sm:$0xff] %vm4949, %v4874
        %4961 = vst.msk [vmem:[%s336 + $0x58] sm:$0xff] %vm4949, %v4876
        %4962 = vst.msk [vmem:[%s336 + $0x60] sm:$0xff] %vm4949, %v4878
        %4963 = vst.msk [vmem:[%s336 + $0x68] sm:$0xff] %vm4949, %v4880
        %4964 = vst.msk [vmem:[%s336 + $0x70] sm:$0xff] %vm4949, %v4882
        %4965 = vst.msk [vmem:[%s336 + $0x78] sm:$0xff] %vm4949, %v4884
        %4966 = vst.msk [vmem:[%s336 + $0x80] sm:$0xff] %vm4949, %v4886
        %4967 = vst.msk [vmem:[%s336 + $0x88] sm:$0xff] %vm4949, %v4888
        %4968 = vst.msk [vmem:[%s336 + $0x90] sm:$0xff] %vm4949, %v4890
        %4969 = vst.msk [vmem:[%s336 + $0x98] sm:$0xff] %vm4949, %v4892
        %4970 = vst.msk [vmem:[%s336 + $0xa0] sm:$0xff] %vm4949, %v4894
        %4971 = vst.msk [vmem:[%s336 + $0xa8] sm:$0xff] %vm4949, %v4896
        %4972 = vst.msk [vmem:[%s336 + $0xb0] sm:$0xff] %vm4949, %v4898
        %4973 = vst.msk [vmem:[%s336 + $0xb8] sm:$0xff] %vm4949, %v4900
        %4974 = vst.msk [vmem:[%s336 + $0xc0] sm:$0xff] %vm4949, %v4902
        %4975 = vst.msk [vmem:[%s336 + $0xc8] sm:$0xff] %vm4949, %v4904
        %4976 = vst.msk [vmem:[%s336 + $0xd0] sm:$0xff] %vm4949, %v4906
        %4977 = vst.msk [vmem:[%s336 + $0xd8] sm:$0xff] %vm4949, %v4908
        %4978 = vst.msk [vmem:[%s336 + $0xe0] sm:$0xff] %vm4949, %v4910
        %4979 = vst.msk [vmem:[%s336 + $0xe8] sm:$0xff] %vm4949, %v4912
        %4980 = vst.msk [vmem:[%s336 + $0xf0] sm:$0xff] %vm4949, %v4914
        %4981 = vst.msk [vmem:[%s336 + $0xf8] sm:$0xff] %vm4949, %v4916
        %5014 = vrot.lane.b32.xlu0 %v4085, 96
        %v5015 = vpop.permute.xlu0 %5014
        %5016 = vrot.lane.b32.xlu0 %v4086, 96
        %v5017 = vpop.permute.xlu0 %5016
        %5018 = vrot.lane.b32.xlu0 %v4087, 96
        %v5019 = vpop.permute.xlu0 %5018
        %5020 = vrot.lane.b32.xlu0 %v4088, 96
        %v5021 = vpop.permute.xlu0 %5020
        %5022 = vrot.lane.b32.xlu0 %v4089, 96
        %v5023 = vpop.permute.xlu0 %5022
        %5024 = vrot.lane.b32.xlu0 %v4090, 96
        %v5025 = vpop.permute.xlu0 %5024
        %5026 = vrot.lane.b32.xlu0 %v4091, 96
        %v5027 = vpop.permute.xlu0 %5026
        %5028 = vrot.lane.b32.xlu0 %v4092, 96
        %v5029 = vpop.permute.xlu0 %5028
        %5030 = vrot.lane.b32.xlu0 %v4093, 96
        %v5031 = vpop.permute.xlu0 %5030
        %5032 = vrot.lane.b32.xlu0 %v4094, 96
        %v5033 = vpop.permute.xlu0 %5032
        %5034 = vrot.lane.b32.xlu0 %v4095, 96
        %v5035 = vpop.permute.xlu0 %5034
        %5036 = vrot.lane.b32.xlu0 %v4096, 96
        %v5037 = vpop.permute.xlu0 %5036
        %5038 = vrot.lane.b32.xlu0 %v4097, 96
        %v5039 = vpop.permute.xlu0 %5038
        %5040 = vrot.lane.b32.xlu0 %v4098, 96
        %v5041 = vpop.permute.xlu0 %5040
        %5042 = vrot.lane.b32.xlu0 %v4099, 96
        %v5043 = vpop.permute.xlu0 %5042
        %5044 = vrot.lane.b32.xlu0 %v4100, 96
        %v5045 = vpop.permute.xlu0 %5044
        %5046 = vrot.lane.b32.xlu0 %v4101, 96
        %v5047 = vpop.permute.xlu0 %5046
        %5048 = vrot.lane.b32.xlu0 %v4102, 96
        %v5049 = vpop.permute.xlu0 %5048
        %5050 = vrot.lane.b32.xlu0 %v4103, 96
        %v5051 = vpop.permute.xlu0 %5050
        %5052 = vrot.lane.b32.xlu0 %v4104, 96
        %v5053 = vpop.permute.xlu0 %5052
        %5054 = vrot.lane.b32.xlu0 %v4105, 96
        %v5055 = vpop.permute.xlu0 %5054
        %5056 = vrot.lane.b32.xlu0 %v4106, 96
        %v5057 = vpop.permute.xlu0 %5056
        %5058 = vrot.lane.b32.xlu0 %v4107, 96
        %v5059 = vpop.permute.xlu0 %5058
        %5060 = vrot.lane.b32.xlu0 %v4108, 96
        %v5061 = vpop.permute.xlu0 %5060
        %5062 = vrot.lane.b32.xlu0 %v4109, 96
        %v5063 = vpop.permute.xlu0 %5062
        %5064 = vrot.lane.b32.xlu0 %v4110, 96
        %v5065 = vpop.permute.xlu0 %5064
        %5066 = vrot.lane.b32.xlu0 %v4111, 96
        %v5067 = vpop.permute.xlu0 %5066
        %5068 = vrot.lane.b32.xlu0 %v4112, 96
        %v5069 = vpop.permute.xlu0 %5068
        %5070 = vrot.lane.b32.xlu0 %v4113, 96
        %v5071 = vpop.permute.xlu0 %5070
        %5072 = vrot.lane.b32.xlu0 %v4114, 96
        %v5073 = vpop.permute.xlu0 %5072
        %5074 = vrot.lane.b32.xlu0 %v4115, 96
        %v5075 = vpop.permute.xlu0 %5074
        %5076 = vrot.lane.b32.xlu0 %v4116, 96
        %v5077 = vpop.permute.xlu0 %5076
        %5110 = vst.msk [vmem:[%s321] sm:$0xff] %vm4949, %v5015
        %5111 = vst.msk [vmem:[%s321 + $0x8] sm:$0xff] %vm4949, %v5017
        %5112 = vst.msk [vmem:[%s321 + $0x10] sm:$0xff] %vm4949, %v5019
        %5113 = vst.msk [vmem:[%s321 + $0x18] sm:$0xff] %vm4949, %v5021
        %5114 = vst.msk [vmem:[%s321 + $0x20] sm:$0xff] %vm4949, %v5023
        %5115 = vst.msk [vmem:[%s321 + $0x28] sm:$0xff] %vm4949, %v5025
        %5116 = vst.msk [vmem:[%s321 + $0x30] sm:$0xff] %vm4949, %v5027
        %5117 = vst.msk [vmem:[%s321 + $0x38] sm:$0xff] %vm4949, %v5029
        %5118 = vst.msk [vmem:[%s321 + $0x40] sm:$0xff] %vm4949, %v5031
        %5119 = vst.msk [vmem:[%s321 + $0x48] sm:$0xff] %vm4949, %v5033
        %5120 = vst.msk [vmem:[%s321 + $0x50] sm:$0xff] %vm4949, %v5035
        %5121 = vst.msk [vmem:[%s321 + $0x58] sm:$0xff] %vm4949, %v5037
        %5122 = vst.msk [vmem:[%s321 + $0x60] sm:$0xff] %vm4949, %v5039
        %5123 = vst.msk [vmem:[%s321 + $0x68] sm:$0xff] %vm4949, %v5041
        %5124 = vst.msk [vmem:[%s321 + $0x70] sm:$0xff] %vm4949, %v5043
        %5125 = vst.msk [vmem:[%s321 + $0x78] sm:$0xff] %vm4949, %v5045
        %5126 = vst.msk [vmem:[%s321 + $0x80] sm:$0xff] %vm4949, %v5047
        %5127 = vst.msk [vmem:[%s321 + $0x88] sm:$0xff] %vm4949, %v5049
        %5128 = vst.msk [vmem:[%s321 + $0x90] sm:$0xff] %vm4949, %v5051
        %5129 = vst.msk [vmem:[%s321 + $0x98] sm:$0xff] %vm4949, %v5053
        %5130 = vst.msk [vmem:[%s321 + $0xa0] sm:$0xff] %vm4949, %v5055
        %5131 = vst.msk [vmem:[%s321 + $0xa8] sm:$0xff] %vm4949, %v5057
        %5132 = vst.msk [vmem:[%s321 + $0xb0] sm:$0xff] %vm4949, %v5059
        %5133 = vst.msk [vmem:[%s321 + $0xb8] sm:$0xff] %vm4949, %v5061
        %5134 = vst.msk [vmem:[%s321 + $0xc0] sm:$0xff] %vm4949, %v5063
        %5135 = vst.msk [vmem:[%s321 + $0xc8] sm:$0xff] %vm4949, %v5065
        %5136 = vst.msk [vmem:[%s321 + $0xd0] sm:$0xff] %vm4949, %v5067
        %5137 = vst.msk [vmem:[%s321 + $0xd8] sm:$0xff] %vm4949, %v5069
        %5138 = vst.msk [vmem:[%s321 + $0xe0] sm:$0xff] %vm4949, %v5071
        %5139 = vst.msk [vmem:[%s321 + $0xe8] sm:$0xff] %vm4949, %v5073
        %5140 = vst.msk [vmem:[%s321 + $0xf0] sm:$0xff] %vm4949, %v5075
        %5141 = vst.msk [vmem:[%s321 + $0xf8] sm:$0xff] %vm4949, %v5077
        %p5142 = scmp.lt.s32.totalorder %s23, 1
        %s5143 = scalar_select %p5142, %s23, 1
        %s5144 = smul.addr %s5143, 32
        %s5145 = smul.addr %s5144, 8
        %s5146 = scalar_lea.vmem %s7, %s5145
        %s5147 = sand.u32 %s214, 1
        %s5148 = scalar_lea.sflag [#allocation3], %s5147
        %s5149 = sand.u32 %s214, 1
        %s5150 = smul.addr %s5149, 256
        %s5151 = scalar_lea.vmem [#allocation2], %s5150
        // Predicated region
        $region49: #{conv_lstm_cell_forward.2} parent=47 // pred_check
          %p5152 = pneg %p198
        $region50: #{conv_lstm_cell_forward.2} parent=47 // pred_check_branch
          %5154 = sbr.rel (%p5152) target = $region52
        $region51: #{conv_lstm_cell_forward.2} parent=47 // pred_region
          _
        $region52: #{conv_lstm_cell_forward.2} parent=47 // pred_fallthru
          _
        // Predicated region
        $region53: #{conv_lstm_cell_forward.2} parent=47 // pred_check
          %p5155 = pneg %p224
        $region54: #{conv_lstm_cell_forward.2} parent=47 // pred_check_branch
          %5157 = sbr.rel (%p5155) target = $region56
        $region55: #{conv_lstm_cell_forward.2} parent=47 // pred_region
          %s5159 = ssub.s32 4096, 4096
          %5160 = vsyncadd %s5148, %s5159
          %s5161 = smul.addr %s23, 32
          %s5162 = smul.addr %s5161, 128
          %s5163 = scalar_lea.hbm %s8, %s5162
          %s5164 = sshll.u32 %s5151, 4
          %s5165 = int_to_ptr.vmem [resolvable:$true] %s5164
          %5170 = dma.vmem_to_hbm [thread:$0]  %s5165, 4096, %s5163, %s5148, 128, 128, 8
        $region56: #{conv_lstm_cell_forward.2} parent=47 // pred_fallthru
          _
      $region48: #{conv_lstm_cell_forward.2} parent=5 // pred_fallthru
        _
      %p5171 = scmp.le.s32.totalorder 2, %s18
      // Predicated region
      $region57: #{conv_lstm_cell_forward.2} parent=5 // pred_check
        %p5172 = pneg %p5171
      $region58: #{conv_lstm_cell_forward.2} parent=5 // pred_check_branch
        %5174 = sbr.rel (%p5172) target = $region60
      $region59: #{conv_lstm_cell_forward.2} parent=5 // pred_region
        %s5175 = ssub.s32 %s18, 2
        // Predicated region
        $region61: #{conv_lstm_cell_forward.2} parent=59 // pred_check
          %p5176 = pneg %p204
        $region62: #{conv_lstm_cell_forward.2} parent=59 // pred_check_branch
          %5178 = sbr.rel (%p5176) target = $region64
        $region63: #{conv_lstm_cell_forward.2} parent=59 // pred_region
          %p5179 = scmp.lt.s32.totalorder %s24, 1
          %s5180 = scalar_select %p5179, %s24, 1
          %s5181 = smul.addr %s5180, 32
          %s5182 = smul.addr %s5181, 8
          %s5183 = scalar_lea.vmem %s7, %s5182
        $region64: #{conv_lstm_cell_forward.2} parent=59 // pred_fallthru
          _
        // Predicated region
        $region65: #{conv_lstm_cell_forward.2} parent=59 // pred_check
          %p5184 = pneg %p230
        $region66: #{conv_lstm_cell_forward.2} parent=59 // pred_check_branch
          %5186 = sbr.rel (%p5184) target = $region68
        $region67: #{conv_lstm_cell_forward.2} parent=59 // pred_region
          %s5187 = sand.u32 %s215, 1
          %s5188 = scalar_lea.sflag [#allocation3], %s5187
          %s5189 = sand.u32 %s215, 1
          %s5190 = smul.addr %s5189, 256
          %s5191 = scalar_lea.vmem [#allocation2], %s5190
          %5192 = dma.done %s5188, 4096
        $region68: #{conv_lstm_cell_forward.2} parent=59 // pred_fallthru
          _
      $region60: #{conv_lstm_cell_forward.2} parent=5 // pred_fallthru
        _
    $region6: #{conv_lstm_cell_forward.2} parent=1 // loop_footer
      %s22 = sadd.s32 1, %s18
    $region7: #{conv_lstm_cell_forward.2} parent=1 // loop_footer_branch
      %17 = sbr.rel target = $region3
    $region8: #{conv_lstm_cell_forward.2} parent=1 // loop_exit
      _
    %5193 = vsyncpa [#allocation3], 1
    %s5194 = scalar_lea.sflag [#allocation3], 1
    %5195 = vsyncpa %s5194, 1

</llo_original>
